<compile_context>
chip_gen: v7x
topology: tpu7x:2x2x1
jax: 0.10.0
libtpu: 0.0.40
codegen_flags: <defaults>
</compile_context>

<pallas_src>
import functools
import numpy as np

import jax
import jax.numpy as jnp
from jax.experimental import pallas as pl
from jax.experimental.pallas import tpu as pltpu


_KERNEL_SIZES = [(3, 9), (3, 9), (3, 9), (3, 9), (3, 3), (3, 3)]
_STRIDES = [(1, 1), (1, 2), (1, 2), (1, 2), (1, 1), (1, 1)]
_NEG_SLOPE = 0.2

_LANE = 128
_SUBLANE = 8


def _round_up(x, m):
    return ((x + m - 1) // m) * m


def _compiler_params():
    return pltpu.CompilerParams(
        dimension_semantics=("parallel",),
        vmem_limit_bytes=48 * 1024 * 1024,
    )


# -----------------------------------------------------------------------------
# Pallas kernels
# -----------------------------------------------------------------------------
def _stft_mag_kernel(frames_ref, basis_ref, out_ref, *, n_freq_pad):
    """|STFT| for one M-tile: (tile_m, n_fft) @ (n_fft, 2*n_freq_pad)."""
    acc = jnp.dot(frames_ref[...], basis_ref[...],
                  preferred_element_type=jnp.float32)
    re = acc[:, :n_freq_pad]
    im = acc[:, n_freq_pad:]
    out_ref[...] = jnp.sqrt(re * re + im * im)


def _conv_mm_kernel(w_ref, b_ref, p_ref, o_ref, *, negative_slope, apply_act):
    """Conv2d as transposed im2col matmul: (Cout, K) @ (K, tile_m)."""
    acc = jnp.dot(w_ref[...], p_ref[...], preferred_element_type=jnp.float32)
    acc = acc + b_ref[...]                      # (Cout, 1) broadcasts over lanes
    if apply_act:
        acc = jnp.where(acc >= 0.0, acc, negative_slope * acc)
    o_ref[...] = acc


# -----------------------------------------------------------------------------
# STFT magnitude (tiled over frames)
# -----------------------------------------------------------------------------
def stft_magnitude_pallas(frames_2d, basis, n_freq):
    """frames_2d: (M, n_fft) f32, basis: (n_fft, 2*n_freq_pad) bf16 -> (M, n_freq) f32."""
    M, n_fft = frames_2d.shape
    n_freq_pad = basis.shape[1] // 2

    tile_m = min(512, _round_up(M, _SUBLANE))
    m_pad = _round_up(M, tile_m)
    if m_pad != M:
        frames_2d = jnp.pad(frames_2d, ((0, m_pad - M), (0, 0)))
    frames_2d = frames_2d.astype(jnp.bfloat16)

    out = pl.pallas_call(
        functools.partial(_stft_mag_kernel, n_freq_pad=n_freq_pad),
        out_shape=jax.ShapeDtypeStruct((m_pad, n_freq_pad), jnp.float32),
        grid=(m_pad // tile_m,),
        in_specs=[
            pl.BlockSpec((tile_m, n_fft), lambda i: (i, 0)),
            pl.BlockSpec((n_fft, 2 * n_freq_pad), lambda i: (0, 0)),  # resident
        ],
        out_specs=pl.BlockSpec((tile_m, n_freq_pad), lambda i: (i, 0)),
        compiler_params=_compiler_params(),
    )(frames_2d, basis)
    return out[:M, :n_freq]


# -----------------------------------------------------------------------------
# Conv2d (tiled over im2col rows, lane-dense transposed output)
# -----------------------------------------------------------------------------
def conv2d_pallas(x, w, b, stride, negative_slope=None):
    """x: (B, Cin, H, W) NCHW, w: (Cout, Cin, kh, kw) torch layout, no padding."""
    B, Cin, H, W = x.shape
    Cout, _, kh, kw = w.shape
    sh, sw = stride
    Hout = (H - kh) // sh + 1
    Wout = (W - kw) // sw + 1
    K = Cin * kh * kw
    M = B * Hout * Wout

    # im2col glue (gather / layout only; the matmul runs in the kernel).
    # TODO(synk): fuse im2col + the 6-layer conv stack into a single pipelined
    # Pallas kernel with VMEM-resident intermediates to remove these HBM trips.
    hidx = (jnp.arange(Hout) * sh)[:, None] + jnp.arange(kh)[None, :]      # (Hout, kh)
    widx = (jnp.arange(Wout) * sw)[:, None] + jnp.arange(kw)[None, :]      # (Wout, kw)
    patches = x[:, :, hidx[:, :, None, None], widx[None, None, :, :]]       # (B,Cin,Hout,kh,Wout,kw)
    # K order = (ci, dh, dw), M order = (b, ho, wo); transposed so M is on lanes.
    patches_t = patches.transpose(1, 3, 5, 0, 2, 4).reshape(K, M)

    tile_m = min(1024, _round_up(M, _LANE))
    m_pad = _round_up(M, tile_m)
    if m_pad != M:
        patches_t = jnp.pad(patches_t, ((0, 0), (0, m_pad - M)))
    patches_t = patches_t.astype(jnp.bfloat16)

    wmat = w.reshape(Cout, K).astype(jnp.bfloat16)
    bvec = b.reshape(Cout, 1).astype(jnp.float32)

    kern = functools.partial(
        _conv_mm_kernel,
        negative_slope=float(negative_slope) if negative_slope is not None else 0.0,
        apply_act=negative_slope is not None,
    )
    out = pl.pallas_call(
        kern,
        out_shape=jax.ShapeDtypeStruct((Cout, m_pad), jnp.float32),
        grid=(m_pad // tile_m,),
        in_specs=[
            pl.BlockSpec((Cout, K), lambda i: (0, 0)),       # weights (resident)
            pl.BlockSpec((Cout, 1), lambda i: (0, 0)),       # bias (resident)
            pl.BlockSpec((K, tile_m), lambda i: (0, i)),     # streamed patches
        ],
        out_specs=pl.BlockSpec((Cout, tile_m), lambda i: (0, i)),
        compiler_params=_compiler_params(),
    )(wmat, bvec, patches_t)

    out = out[:, :M].reshape(Cout, B, Hout, Wout).transpose(1, 0, 2, 3)      # NCHW
    return out


# -----------------------------------------------------------------------------
# Spectrogram glue (framing, padding, DFT basis) - exact torchaudio semantics
# -----------------------------------------------------------------------------
def _dft_basis_combined(n_fft, win_length):
    """Window-folded DFT basis, cos|sin fused, freq padded to a lane multiple."""
    n_freq = n_fft // 2 + 1
    n_freq_pad = _round_up(n_freq, _LANE)
    # torch.hann_window (periodic=True)
    win = 0.5 - 0.5 * np.cos(2.0 * np.pi * np.arange(win_length) / win_length)
    left = (n_fft - win_length) // 2
    w = np.zeros(n_fft, dtype=np.float64)
    w[left:left + win_length] = win
    n = np.arange(n_fft)[:, None]
    f = np.arange(n_freq)[None, :]
    ang = 2.0 * np.pi * n * f / n_fft
    cos_b = np.zeros((n_fft, n_freq_pad), dtype=np.float32)
    sin_b = np.zeros((n_fft, n_freq_pad), dtype=np.float32)
    cos_b[:, :n_freq] = (w[:, None] * np.cos(ang)).astype(np.float32)
    sin_b[:, :n_freq] = (-w[:, None] * np.sin(ang)).astype(np.float32)
    basis = np.concatenate([cos_b, sin_b], axis=1)                 # (n_fft, 2*n_freq_pad)
    return jnp.asarray(basis, dtype=jnp.bfloat16), n_freq


def _frame_signal(sig, n_fft, hop, pad):
    """sig: (B, T).  spectrogram zero-pad + stft center reflect pad + framing."""
    # TODO(synk): stream overlapping windows straight from the padded signal
    # via manual DMA instead of materializing the (hop-overlapping) frame array.
    sig = jnp.pad(sig, ((0, 0), (pad, pad)))
    sig = jnp.pad(sig, ((0, 0), (n_fft // 2, n_fft // 2)), mode="reflect")
    total = sig.shape[1]
    n_frames = 1 + (total - n_fft) // hop
    idx = jnp.arange(n_frames)[:, None] * hop + jnp.arange(n_fft)[None, :]
    frames = sig[:, idx]                                           # (B, n_frames, n_fft)
    return frames, n_frames


# -----------------------------------------------------------------------------
# UnivNet spectral discriminator (single resolution)
# -----------------------------------------------------------------------------
def init_spectral_discriminator_params(key, channels):
    """6 conv layers, deterministic init (shapes match the nn.Module __init__)."""
    chans = [(1, channels)] + [(channels, channels)] * 4 + [(channels, 1)]
    params = []
    for (cin, cout), (kh, kw) in zip(chans, _KERNEL_SIZES):
        key, kw_key, kb_key = jax.random.split(key, 3)
        fan_in = cin * kh * kw
        w = jax.random.normal(kw_key, (cout, cin, kh, kw), jnp.float32) / np.sqrt(fan_in)
        b = 0.01 * jax.random.normal(kb_key, (cout,), jnp.float32)
        params.append((w, b))
    return params


@functools.partial(jax.jit, static_argnums=(2, 3, 4))
def spectral_discriminator_forward(x, params, fft_size, hop_size, win_length):
    """x: (B, 1, T)  ->  (B, 1, H_out, W_out)."""
    B = x.shape[0]
    sig = x[:, 0, :]
    pad = win_length // 2
    frames, n_frames = _frame_signal(sig, fft_size, hop_size, pad)
    basis, n_freq = _dft_basis_combined(fft_size, win_length)
    mag = stft_magnitude_pallas(frames.reshape(B * n_frames, fft_size), basis, n_freq)
    # torchaudio spectrogram gives (B, 1, n_freq, n_frames); .transpose(-1, -2)
    # gives (B, 1, n_frames, n_freq) which is exactly this reshape.
    h = mag.reshape(B, n_frames, n_freq)[:, None, :, :]

    for i, (w, b) in enumerate(params):
        ns = _NEG_SLOPE if i < len(params) - 1 else None   # last conv has no activation
        h = conv2d_pallas(h, w, b, _STRIDES[i], negative_slope=ns)
    return h


# -----------------------------------------------------------------------------
# UnivNet multi-resolution spectral discriminator
# -----------------------------------------------------------------------------
def multi_resolution_spectral_discriminator_forward(x, all_params, fft_sizes,
                                                    hop_sizes, win_lengths):
    outs = []
    for params, n_fft, hop, win in zip(all_params, fft_sizes, hop_sizes, win_lengths):
        outs.append(spectral_discriminator_forward(x, params, n_fft, hop, win))
    return outs


if __name__ == "__main__":
    # Small-but-consistent configuration (n_fft must be >= 192 so the default
    # kernel/stride stack leaves >= 1 freq bin; T chosen so >= 13 time frames).
    fft_sizes = [256, 192, 224]
    hop_sizes = [32, 24, 28]
    win_lengths = [128, 96, 112]
    channels = 8
    B, T = 2, 256

    key = jax.random.PRNGKey(0)
    key, xkey = jax.random.split(key)
    x = jax.random.normal(xkey, (B, 1, T), jnp.float32)

    all_params = []
    for _ in range(len(fft_sizes)):
        key, pkey = jax.random.split(key)
        all_params.append(init_spectral_discriminator_params(pkey, channels))

    outs = multi_resolution_spectral_discriminator_forward(
        x, all_params, fft_sizes, hop_sizes, win_lengths)
    outs = [jax.block_until_ready(o) for o in outs]

    for o in outs:
        assert o.ndim == 4 and o.shape[0] == B and o.shape[1] == 1
        assert bool(jnp.all(jnp.isfinite(o)))
    print("KERNEL_OK")
</pallas_src>

<mosaic_0001>
module attributes {stable_mosaic.version = 11 : i64} {
  func.func @_stft_mag_kernel(%arg0: i32, %arg1: memref<32x256xbf16, #tpu.memory_space<vmem>>, %arg2: memref<256x512xbf16, #tpu.memory_space<vmem>>, %arg3: memref<32x256xf32, #tpu.memory_space<vmem>>) attributes {dimension_semantics = [#tpu.dimension_semantics<parallel>], iteration_bounds = array<i64: 1>, scalar_prefetch = 0 : i64, scratch_operands = 0 : i64, tpu.core_type = #tpu.core_type<tc>, window_params = [{transform_indices = @transform_0, window_bounds = array<i64: 32, 256>}, {pipeline_mode = #tpu.pipeline_mode<synchronous>, transform_indices = @transform_1, window_bounds = array<i64: 256, 512>}, {transform_indices = @transform_2, window_bounds = array<i64: 32, 256>}]} {
    %c0 = arith.constant 0 : index
    %c0_0 = arith.constant 0 : index
    %0 = vector.load %arg1[%c0, %c0_0] : memref<32x256xbf16, #tpu.memory_space<vmem>>, vector<32x256xbf16>
    %c0_1 = arith.constant 0 : index
    %c0_2 = arith.constant 0 : index
    %1 = vector.load %arg2[%c0_1, %c0_2] : memref<256x512xbf16, #tpu.memory_space<vmem>>, vector<256x512xbf16>
    %cst = arith.constant dense<0.000000e+00> : vector<32x512xf32>
    %2 = tpu.matmul %0, %1, %cst {dimension_numbers = #tpu.dot_dimension_numbers<[1], [0], [0], [1], [0, 0, 1, 1], [], []>} : vector<32x256xbf16>, vector<256x512xbf16>, vector<32x512xf32> -> vector<32x512xf32>
    %3 = vector.extract_strided_slice %2 {offsets = [0, 0], sizes = [32, 256], strides = [1, 1]} : vector<32x512xf32> to vector<32x256xf32>
    %4 = vector.extract_strided_slice %2 {offsets = [0, 256], sizes = [32, 256], strides = [1, 1]} : vector<32x512xf32> to vector<32x256xf32>
    %5 = arith.mulf %3, %3 : vector<32x256xf32>
    %6 = arith.mulf %4, %4 : vector<32x256xf32>
    %7 = arith.addf %5, %6 : vector<32x256xf32>
    %8 = math.sqrt %7 : vector<32x256xf32>
    %c0_3 = arith.constant 0 : index
    %c0_4 = arith.constant 0 : index
    %9 = vector.load %arg3[%c0_3, %c0_4] : memref<32x256xf32, #tpu.memory_space<vmem>>, vector<32x256xf32>
    tpu.vector_store %arg3[%c0_3, %c0_4], %8 {strides = array<i32>} : memref<32x256xf32, #tpu.memory_space<vmem>>, vector<32x256xf32>,
    return
  }
  func.func @transform_0(%arg0: i32) -> (i32, i32) {
    %c0_i32 = arith.constant 0 : i32
    %c0_i32_0 = arith.constant 0 : i32
    return %arg0, %c0_i32 : i32, i32
  }
  func.func @transform_1(%arg0: i32) -> (i32, i32) {
    %c0_i32 = arith.constant 0 : i32
    %c0_i32_0 = arith.constant 0 : i32
    %c0_i32_1 = arith.constant 0 : i32
    return %c0_i32, %c0_i32_0 : i32, i32
  }
  func.func @transform_2(%arg0: i32) -> (i32, i32) {
    %c0_i32 = arith.constant 0 : i32
    %c0_i32_0 = arith.constant 0 : i32
    return %arg0, %c0_i32 : i32, i32
  }
}

module attributes {stable_mosaic.version = 11 : i64} {
  func.func @_conv_mm_kernel(%arg0: i32, %arg1: memref<8x27xbf16, #tpu.memory_space<vmem>>, %arg2: memref<8x1xf32, #tpu.memory_space<vmem>>, %arg3: memref<27x1024xbf16, #tpu.memory_space<vmem>>, %arg4: memref<8x1024xf32, #tpu.memory_space<vmem>>) attributes {dimension_semantics = [#tpu.dimension_semantics<parallel>], iteration_bounds = array<i64: 3>, scalar_prefetch = 0 : i64, scratch_operands = 0 : i64, tpu.core_type = #tpu.core_type<tc>, window_params = [{pipeline_mode = #tpu.pipeline_mode<synchronous>, transform_indices = @transform_0, window_bounds = array<i64: 8, 27>}, {pipeline_mode = #tpu.pipeline_mode<synchronous>, transform_indices = @transform_1, window_bounds = array<i64: 8, 1>}, {transform_indices = @transform_2, window_bounds = array<i64: 27, 1024>}, {transform_indices = @transform_3, window_bounds = array<i64: 8, 1024>}]} {
    %c0 = arith.constant 0 : index
    %c0_0 = arith.constant 0 : index
    %0 = vector.load %arg1[%c0, %c0_0] : memref<8x27xbf16, #tpu.memory_space<vmem>>, vector<8x27xbf16>
    %c0_1 = arith.constant 0 : index
    %c0_2 = arith.constant 0 : index
    %1 = vector.load %arg3[%c0_1, %c0_2] : memref<27x1024xbf16, #tpu.memory_space<vmem>>, vector<27x1024xbf16>
    %cst = arith.constant dense<0.000000e+00> : vector<8x1024xf32>
    %2 = tpu.matmul %0, %1, %cst {dimension_numbers = #tpu.dot_dimension_numbers<[1], [0], [0], [1], [0, 0, 1, 1], [], []>} : vector<8x27xbf16>, vector<27x1024xbf16>, vector<8x1024xf32> -> vector<8x1024xf32>
    %c0_3 = arith.constant 0 : index
    %c0_4 = arith.constant 0 : index
    %3 = vector.load %arg2[%c0_3, %c0_4] : memref<8x1xf32, #tpu.memory_space<vmem>>, vector<8x1xf32>
    %4 = vector.broadcast %3 : vector<8x1xf32> to vector<8x1024xf32>
    %5 = arith.addf %2, %4 : vector<8x1024xf32>
    %cst_5 = arith.constant 0.000000e+00 : f32
    %6 = vector.broadcast %cst_5 : f32 to vector<8x1024xf32>
    %7 = arith.cmpf oge, %5, %6 : vector<8x1024xf32>
    %cst_6 = arith.constant 2.000000e-01 : f32
    %8 = vector.broadcast %cst_6 : f32 to vector<8x1024xf32>
    %9 = arith.mulf %8, %5 : vector<8x1024xf32>
    %10 = arith.select %7, %5, %9 : vector<8x1024xi1>, vector<8x1024xf32>
    %c0_7 = arith.constant 0 : index
    %c0_8 = arith.constant 0 : index
    %11 = vector.load %arg4[%c0_7, %c0_8] : memref<8x1024xf32, #tpu.memory_space<vmem>>, vector<8x1024xf32>
    tpu.vector_store %arg4[%c0_7, %c0_8], %10 {strides = array<i32>} : memref<8x1024xf32, #tpu.memory_space<vmem>>, vector<8x1024xf32>,
    return
  }
  func.func @transform_0(%arg0: i32) -> (i32, i32) {
    %c0_i32 = arith.constant 0 : i32
    %c0_i32_0 = arith.constant 0 : i32
    %c0_i32_1 = arith.constant 0 : i32
    return %c0_i32, %c0_i32_0 : i32, i32
  }
  func.func @transform_1(%arg0: i32) -> (i32, i32) {
    %c0_i32 = arith.constant 0 : i32
    %c0_i32_0 = arith.constant 0 : i32
    %c0_i32_1 = arith.constant 0 : i32
    return %c0_i32, %c0_i32_0 : i32, i32
  }
  func.func @transform_2(%arg0: i32) -> (i32, i32) {
    %c0_i32 = arith.constant 0 : i32
    %c0_i32_0 = arith.constant 0 : i32
    return %c0_i32, %arg0 : i32, i32
  }
  func.func @transform_3(%arg0: i32) -> (i32, i32) {
    %c0_i32 = arith.constant 0 : i32
    %c0_i32_0 = arith.constant 0 : i32
    return %c0_i32, %arg0 : i32, i32
  }
}

module attributes {stable_mosaic.version = 11 : i64} {
  func.func @_conv_mm_kernel(%arg0: i32, %arg1: memref<8x216xbf16, #tpu.memory_space<vmem>>, %arg2: memref<8x1xf32, #tpu.memory_space<vmem>>, %arg3: memref<216x1024xbf16, #tpu.memory_space<vmem>>, %arg4: memref<8x1024xf32, #tpu.memory_space<vmem>>) attributes {dimension_semantics = [#tpu.dimension_semantics<parallel>], iteration_bounds = array<i64: 2>, scalar_prefetch = 0 : i64, scratch_operands = 0 : i64, tpu.core_type = #tpu.core_type<tc>, window_params = [{pipeline_mode = #tpu.pipeline_mode<synchronous>, transform_indices = @transform_0, window_bounds = array<i64: 8, 216>}, {pipeline_mode = #tpu.pipeline_mode<synchronous>, transform_indices = @transform_1, window_bounds = array<i64: 8, 1>}, {transform_indices = @transform_2, window_bounds = array<i64: 216, 1024>}, {transform_indices = @transform_3, window_bounds = array<i64: 8, 1024>}]} {
    %c0 = arith.constant 0 : index
    %c0_0 = arith.constant 0 : index
    %0 = vector.load %arg1[%c0, %c0_0] : memref<8x216xbf16, #tpu.memory_space<vmem>>, vector<8x216xbf16>
    %c0_1 = arith.constant 0 : index
    %c0_2 = arith.constant 0 : index
    %1 = vector.load %arg3[%c0_1, %c0_2] : memref<216x1024xbf16, #tpu.memory_space<vmem>>, vector<216x1024xbf16>
    %cst = arith.constant dense<0.000000e+00> : vector<8x1024xf32>
    %2 = tpu.matmul %0, %1, %cst {dimension_numbers = #tpu.dot_dimension_numbers<[1], [0], [0], [1], [0, 0, 1, 1], [], []>} : vector<8x216xbf16>, vector<216x1024xbf16>, vector<8x1024xf32> -> vector<8x1024xf32>
    %c0_3 = arith.constant 0 : index
    %c0_4 = arith.constant 0 : index
    %3 = vector.load %arg2[%c0_3, %c0_4] : memref<8x1xf32, #tpu.memory_space<vmem>>, vector<8x1xf32>
    %4 = vector.broadcast %3 : vector<8x1xf32> to vector<8x1024xf32>
    %5 = arith.addf %2, %4 : vector<8x1024xf32>
    %cst_5 = arith.constant 0.000000e+00 : f32
    %6 = vector.broadcast %cst_5 : f32 to vector<8x1024xf32>
    %7 = arith.cmpf oge, %5, %6 : vector<8x1024xf32>
    %cst_6 = arith.constant 2.000000e-01 : f32
    %8 = vector.broadcast %cst_6 : f32 to vector<8x1024xf32>
    %9 = arith.mulf %8, %5 : vector<8x1024xf32>
    %10 = arith.select %7, %5, %9 : vector<8x1024xi1>, vector<8x1024xf32>
    %c0_7 = arith.constant 0 : index
    %c0_8 = arith.constant 0 : index
    %11 = vector.load %arg4[%c0_7, %c0_8] : memref<8x1024xf32, #tpu.memory_space<vmem>>, vector<8x1024xf32>
    tpu.vector_store %arg4[%c0_7, %c0_8], %10 {strides = array<i32>} : memref<8x1024xf32, #tpu.memory_space<vmem>>, vector<8x1024xf32>,
    return
  }
  func.func @transform_0(%arg0: i32) -> (i32, i32) {
    %c0_i32 = arith.constant 0 : i32
    %c0_i32_0 = arith.constant 0 : i32
    %c0_i32_1 = arith.constant 0 : i32
    return %c0_i32, %c0_i32_0 : i32, i32
  }
  func.func @transform_1(%arg0: i32) -> (i32, i32) {
    %c0_i32 = arith.constant 0 : i32
    %c0_i32_0 = arith.constant 0 : i32
    %c0_i32_1 = arith.constant 0 : i32
    return %c0_i32, %c0_i32_0 : i32, i32
  }
  func.func @transform_2(%arg0: i32) -> (i32, i32) {
    %c0_i32 = arith.constant 0 : i32
    %c0_i32_0 = arith.constant 0 : i32
    return %c0_i32, %arg0 : i32, i32
  }
  func.func @transform_3(%arg0: i32) -> (i32, i32) {
    %c0_i32 = arith.constant 0 : i32
    %c0_i32_0 = arith.constant 0 : i32
    return %c0_i32, %arg0 : i32, i32
  }
}

module attributes {stable_mosaic.version = 11 : i64} {
  func.func @_conv_mm_kernel(%arg0: i32, %arg1: memref<8x216xbf16, #tpu.memory_space<vmem>>, %arg2: memref<8x1xf32, #tpu.memory_space<vmem>>, %arg3: memref<216x384xbf16, #tpu.memory_space<vmem>>, %arg4: memref<8x384xf32, #tpu.memory_space<vmem>>) attributes {dimension_semantics = [#tpu.dimension_semantics<parallel>], iteration_bounds = array<i64: 1>, scalar_prefetch = 0 : i64, scratch_operands = 0 : i64, tpu.core_type = #tpu.core_type<tc>, window_params = [{pipeline_mode = #tpu.pipeline_mode<synchronous>, transform_indices = @transform_0, window_bounds = array<i64: 8, 216>}, {pipeline_mode = #tpu.pipeline_mode<synchronous>, transform_indices = @transform_1, window_bounds = array<i64: 8, 1>}, {transform_indices = @transform_2, window_bounds = array<i64: 216, 384>}, {transform_indices = @transform_3, window_bounds = array<i64: 8, 384>}]} {
    %c0 = arith.constant 0 : index
    %c0_0 = arith.constant 0 : index
    %0 = vector.load %arg1[%c0, %c0_0] : memref<8x216xbf16, #tpu.memory_space<vmem>>, vector<8x216xbf16>
    %c0_1 = arith.constant 0 : index
    %c0_2 = arith.constant 0 : index
    %1 = vector.load %arg3[%c0_1, %c0_2] : memref<216x384xbf16, #tpu.memory_space<vmem>>, vector<216x384xbf16>
    %cst = arith.constant dense<0.000000e+00> : vector<8x384xf32>
    %2 = tpu.matmul %0, %1, %cst {dimension_numbers = #tpu.dot_dimension_numbers<[1], [0], [0], [1], [0, 0, 1, 1], [], []>} : vector<8x216xbf16>, vector<216x384xbf16>, vector<8x384xf32> -> vector<8x384xf32>
    %c0_3 = arith.constant 0 : index
    %c0_4 = arith.constant 0 : index
    %3 = vector.load %arg2[%c0_3, %c0_4] : memref<8x1xf32, #tpu.memory_space<vmem>>, vector<8x1xf32>
    %4 = vector.broadcast %3 : vector<8x1xf32> to vector<8x384xf32>
    %5 = arith.addf %2, %4 : vector<8x384xf32>
    %cst_5 = arith.constant 0.000000e+00 : f32
    %6 = vector.broadcast %cst_5 : f32 to vector<8x384xf32>
    %7 = arith.cmpf oge, %5, %6 : vector<8x384xf32>
    %cst_6 = arith.constant 2.000000e-01 : f32
    %8 = vector.broadcast %cst_6 : f32 to vector<8x384xf32>
    %9 = arith.mulf %8, %5 : vector<8x384xf32>
    %10 = arith.select %7, %5, %9 : vector<8x384xi1>, vector<8x384xf32>
    %c0_7 = arith.constant 0 : index
    %c0_8 = arith.constant 0 : index
    %11 = vector.load %arg4[%c0_7, %c0_8] : memref<8x384xf32, #tpu.memory_space<vmem>>, vector<8x384xf32>
    tpu.vector_store %arg4[%c0_7, %c0_8], %10 {strides = array<i32>} : memref<8x384xf32, #tpu.memory_space<vmem>>, vector<8x384xf32>,
    return
  }
  func.func @transform_0(%arg0: i32) -> (i32, i32) {
    %c0_i32 = arith.constant 0 : i32
    %c0_i32_0 = arith.constant 0 : i32
    %c0_i32_1 = arith.constant 0 : i32
    return %c0_i32, %c0_i32_0 : i32, i32
  }
  func.func @transform_1(%arg0: i32) -> (i32, i32) {
    %c0_i32 = arith.constant 0 : i32
    %c0_i32_0 = arith.constant 0 : i32
    %c0_i32_1 = arith.constant 0 : i32
    return %c0_i32, %c0_i32_0 : i32, i32
  }
  func.func @transform_2(%arg0: i32) -> (i32, i32) {
    %c0_i32 = arith.constant 0 : i32
    %c0_i32_0 = arith.constant 0 : i32
    return %c0_i32, %arg0 : i32, i32
  }
  func.func @transform_3(%arg0: i32) -> (i32, i32) {
    %c0_i32 = arith.constant 0 : i32
    %c0_i32_0 = arith.constant 0 : i32
    return %c0_i32, %arg0 : i32, i32
  }
}

module attributes {stable_mosaic.version = 11 : i64} {
  func.func @_conv_mm_kernel(%arg0: i32, %arg1: memref<8x216xbf16, #tpu.memory_space<vmem>>, %arg2: memref<8x1xf32, #tpu.memory_space<vmem>>, %arg3: memref<216x128xbf16, #tpu.memory_space<vmem>>, %arg4: memref<8x128xf32, #tpu.memory_space<vmem>>) attributes {dimension_semantics = [#tpu.dimension_semantics<parallel>], iteration_bounds = array<i64: 1>, scalar_prefetch = 0 : i64, scratch_operands = 0 : i64, tpu.core_type = #tpu.core_type<tc>, window_params = [{pipeline_mode = #tpu.pipeline_mode<synchronous>, transform_indices = @transform_0, window_bounds = array<i64: 8, 216>}, {pipeline_mode = #tpu.pipeline_mode<synchronous>, transform_indices = @transform_1, window_bounds = array<i64: 8, 1>}, {transform_indices = @transform_2, window_bounds = array<i64: 216, 128>}, {transform_indices = @transform_3, window_bounds = array<i64: 8, 128>}]} {
    %c0 = arith.constant 0 : index
    %c0_0 = arith.constant 0 : index
    %0 = vector.load %arg1[%c0, %c0_0] : memref<8x216xbf16, #tpu.memory_space<vmem>>, vector<8x216xbf16>
    %c0_1 = arith.constant 0 : index
    %c0_2 = arith.constant 0 : index
    %1 = vector.load %arg3[%c0_1, %c0_2] : memref<216x128xbf16, #tpu.memory_space<vmem>>, vector<216x128xbf16>
    %cst = arith.constant dense<0.000000e+00> : vector<8x128xf32>
    %2 = tpu.matmul %0, %1, %cst {dimension_numbers = #tpu.dot_dimension_numbers<[1], [0], [0], [1], [0, 0, 1, 1], [], []>} : vector<8x216xbf16>, vector<216x128xbf16>, vector<8x128xf32> -> vector<8x128xf32>
    %c0_3 = arith.constant 0 : index
    %c0_4 = arith.constant 0 : index
    %3 = vector.load %arg2[%c0_3, %c0_4] : memref<8x1xf32, #tpu.memory_space<vmem>>, vector<8x1xf32>
    %4 = vector.broadcast %3 : vector<8x1xf32> to vector<8x128xf32>
    %5 = arith.addf %2, %4 : vector<8x128xf32>
    %cst_5 = arith.constant 0.000000e+00 : f32
    %6 = vector.broadcast %cst_5 : f32 to vector<8x128xf32>
    %7 = arith.cmpf oge, %5, %6 : vector<8x128xf32>
    %cst_6 = arith.constant 2.000000e-01 : f32
    %8 = vector.broadcast %cst_6 : f32 to vector<8x128xf32>
    %9 = arith.mulf %8, %5 : vector<8x128xf32>
    %10 = arith.select %7, %5, %9 : vector<8x128xi1>, vector<8x128xf32>
    %c0_7 = arith.constant 0 : index
    %c0_8 = arith.constant 0 : index
    %11 = vector.load %arg4[%c0_7, %c0_8] : memref<8x128xf32, #tpu.memory_space<vmem>>, vector<8x128xf32>
    tpu.vector_store %arg4[%c0_7, %c0_8], %10 {strides = array<i32>} : memref<8x128xf32, #tpu.memory_space<vmem>>, vector<8x128xf32>,
    return
  }
  func.func @transform_0(%arg0: i32) -> (i32, i32) {
    %c0_i32 = arith.constant 0 : i32
    %c0_i32_0 = arith.constant 0 : i32
    %c0_i32_1 = arith.constant 0 : i32
    return %c0_i32, %c0_i32_0 : i32, i32
  }
  func.func @transform_1(%arg0: i32) -> (i32, i32) {
    %c0_i32 = arith.constant 0 : i32
    %c0_i32_0 = arith.constant 0 : i32
    %c0_i32_1 = arith.constant 0 : i32
    return %c0_i32, %c0_i32_0 : i32, i32
  }
  func.func @transform_2(%arg0: i32) -> (i32, i32) {
    %c0_i32 = arith.constant 0 : i32
    %c0_i32_0 = arith.constant 0 : i32
    return %c0_i32, %arg0 : i32, i32
  }
  func.func @transform_3(%arg0: i32) -> (i32, i32) {
    %c0_i32 = arith.constant 0 : i32
    %c0_i32_0 = arith.constant 0 : i32
    return %c0_i32, %arg0 : i32, i32
  }
}

module attributes {stable_mosaic.version = 11 : i64} {
  func.func @_conv_mm_kernel(%arg0: i32, %arg1: memref<8x72xbf16, #tpu.memory_space<vmem>>, %arg2: memref<8x1xf32, #tpu.memory_space<vmem>>, %arg3: memref<72x128xbf16, #tpu.memory_space<vmem>>, %arg4: memref<8x128xf32, #tpu.memory_space<vmem>>) attributes {dimension_semantics = [#tpu.dimension_semantics<parallel>], iteration_bounds = array<i64: 1>, scalar_prefetch = 0 : i64, scratch_operands = 0 : i64, tpu.core_type = #tpu.core_type<tc>, window_params = [{pipeline_mode = #tpu.pipeline_mode<synchronous>, transform_indices = @transform_0, window_bounds = array<i64: 8, 72>}, {pipeline_mode = #tpu.pipeline_mode<synchronous>, transform_indices = @transform_1, window_bounds = array<i64: 8, 1>}, {transform_indices = @transform_2, window_bounds = array<i64: 72, 128>}, {transform_indices = @transform_3, window_bounds = array<i64: 8, 128>}]} {
    %c0 = arith.constant 0 : index
    %c0_0 = arith.constant 0 : index
    %0 = vector.load %arg1[%c0, %c0_0] : memref<8x72xbf16, #tpu.memory_space<vmem>>, vector<8x72xbf16>
    %c0_1 = arith.constant 0 : index
    %c0_2 = arith.constant 0 : index
    %1 = vector.load %arg3[%c0_1, %c0_2] : memref<72x128xbf16, #tpu.memory_space<vmem>>, vector<72x128xbf16>
    %cst = arith.constant dense<0.000000e+00> : vector<8x128xf32>
    %2 = tpu.matmul %0, %1, %cst {dimension_numbers = #tpu.dot_dimension_numbers<[1], [0], [0], [1], [0, 0, 1, 1], [], []>} : vector<8x72xbf16>, vector<72x128xbf16>, vector<8x128xf32> -> vector<8x128xf32>
    %c0_3 = arith.constant 0 : index
    %c0_4 = arith.constant 0 : index
    %3 = vector.load %arg2[%c0_3, %c0_4] : memref<8x1xf32, #tpu.memory_space<vmem>>, vector<8x1xf32>
    %4 = vector.broadcast %3 : vector<8x1xf32> to vector<8x128xf32>
    %5 = arith.addf %2, %4 : vector<8x128xf32>
    %cst_5 = arith.constant 0.000000e+00 : f32
    %6 = vector.broadcast %cst_5 : f32 to vector<8x128xf32>
    %7 = arith.cmpf oge, %5, %6 : vector<8x128xf32>
    %cst_6 = arith.constant 2.000000e-01 : f32
    %8 = vector.broadcast %cst_6 : f32 to vector<8x128xf32>
    %9 = arith.mulf %8, %5 : vector<8x128xf32>
    %10 = arith.select %7, %5, %9 : vector<8x128xi1>, vector<8x128xf32>
    %c0_7 = arith.constant 0 : index
    %c0_8 = arith.constant 0 : index
    %11 = vector.load %arg4[%c0_7, %c0_8] : memref<8x128xf32, #tpu.memory_space<vmem>>, vector<8x128xf32>
    tpu.vector_store %arg4[%c0_7, %c0_8], %10 {strides = array<i32>} : memref<8x128xf32, #tpu.memory_space<vmem>>, vector<8x128xf32>,
    return
  }
  func.func @transform_0(%arg0: i32) -> (i32, i32) {
    %c0_i32 = arith.constant 0 : i32
    %c0_i32_0 = arith.constant 0 : i32
    %c0_i32_1 = arith.constant 0 : i32
    return %c0_i32, %c0_i32_0 : i32, i32
  }
  func.func @transform_1(%arg0: i32) -> (i32, i32) {
    %c0_i32 = arith.constant 0 : i32
    %c0_i32_0 = arith.constant 0 : i32
    %c0_i32_1 = arith.constant 0 : i32
    return %c0_i32, %c0_i32_0 : i32, i32
  }
  func.func @transform_2(%arg0: i32) -> (i32, i32) {
    %c0_i32 = arith.constant 0 : i32
    %c0_i32_0 = arith.constant 0 : i32
    return %c0_i32, %arg0 : i32, i32
  }
  func.func @transform_3(%arg0: i32) -> (i32, i32) {
    %c0_i32 = arith.constant 0 : i32
    %c0_i32_0 = arith.constant 0 : i32
    return %c0_i32, %arg0 : i32, i32
  }
}

module attributes {stable_mosaic.version = 11 : i64} {
  func.func @_conv_mm_kernel(%arg0: i32, %arg1: memref<1x72xbf16, #tpu.memory_space<vmem>>, %arg2: memref<1x1xf32, #tpu.memory_space<vmem>>, %arg3: memref<72x128xbf16, #tpu.memory_space<vmem>>, %arg4: memref<1x128xf32, #tpu.memory_space<vmem>>) attributes {dimension_semantics = [#tpu.dimension_semantics<parallel>], iteration_bounds = array<i64: 1>, scalar_prefetch = 0 : i64, scratch_operands = 0 : i64, tpu.core_type = #tpu.core_type<tc>, window_params = [{pipeline_mode = #tpu.pipeline_mode<synchronous>, transform_indices = @transform_0, window_bounds = array<i64: 1, 72>}, {pipeline_mode = #tpu.pipeline_mode<synchronous>, transform_indices = @transform_1, window_bounds = array<i64: 1, 1>}, {transform_indices = @transform_2, window_bounds = array<i64: 72, 128>}, {transform_indices = @transform_3, window_bounds = array<i64: 1, 128>}]} {
    %c0 = arith.constant 0 : index
    %c0_0 = arith.constant 0 : index
    %0 = vector.load %arg1[%c0, %c0_0] : memref<1x72xbf16, #tpu.memory_space<vmem>>, vector<1x72xbf16>
    %c0_1 = arith.constant 0 : index
    %c0_2 = arith.constant 0 : index
    %1 = vector.load %arg3[%c0_1, %c0_2] : memref<72x128xbf16, #tpu.memory_space<vmem>>, vector<72x128xbf16>
    %cst = arith.constant dense<0.000000e+00> : vector<1x128xf32>
    %2 = tpu.matmul %0, %1, %cst {dimension_numbers = #tpu.dot_dimension_numbers<[1], [0], [0], [1], [0, 0, 1, 1], [], []>} : vector<1x72xbf16>, vector<72x128xbf16>, vector<1x128xf32> -> vector<1x128xf32>
    %c0_3 = arith.constant 0 : index
    %c0_4 = arith.constant 0 : index
    %3 = vector.load %arg2[%c0_3, %c0_4] : memref<1x1xf32, #tpu.memory_space<vmem>>, vector<1x1xf32>
    %4 = vector.broadcast %3 : vector<1x1xf32> to vector<1x128xf32>
    %5 = arith.addf %2, %4 : vector<1x128xf32>
    %c0_5 = arith.constant 0 : index
    %c0_6 = arith.constant 0 : index
    %6 = vector.load %arg4[%c0_5, %c0_6] : memref<1x128xf32, #tpu.memory_space<vmem>>, vector<1x128xf32>
    tpu.vector_store %arg4[%c0_5, %c0_6], %5 {strides = array<i32>} : memref<1x128xf32, #tpu.memory_space<vmem>>, vector<1x128xf32>,
    return
  }
  func.func @transform_0(%arg0: i32) -> (i32, i32) {
    %c0_i32 = arith.constant 0 : i32
    %c0_i32_0 = arith.constant 0 : i32
    %c0_i32_1 = arith.constant 0 : i32
    return %c0_i32, %c0_i32_0 : i32, i32
  }
  func.func @transform_1(%arg0: i32) -> (i32, i32) {
    %c0_i32 = arith.constant 0 : i32
    %c0_i32_0 = arith.constant 0 : i32
    %c0_i32_1 = arith.constant 0 : i32
    return %c0_i32, %c0_i32_0 : i32, i32
  }
  func.func @transform_2(%arg0: i32) -> (i32, i32) {
    %c0_i32 = arith.constant 0 : i32
    %c0_i32_0 = arith.constant 0 : i32
    return %c0_i32, %arg0 : i32, i32
  }
  func.func @transform_3(%arg0: i32) -> (i32, i32) {
    %c0_i32 = arith.constant 0 : i32
    %c0_i32_0 = arith.constant 0 : i32
    return %c0_i32, %arg0 : i32, i32
  }
}

</mosaic_0001>

<llo_original>
// kernel: spectral_discriminator_forward.7
$region0: #{spectral_discriminator_forward.7}
  #allocation0 [shape = 'u32[]', space=smem, size = 0x4, offset = 0x4, fixed_abs, tag = 'smem constant byte address 0x4 - core index']
  #allocation1 [shape = 'u32[144,128]{1,0:T(1,128)}', space=vmem, size = 0x12000, scoped, tag = 'internal scratch']
  %s0 = inlined_call_operand.vmem [shape: bf16[32,256], index: 0, kind: input, shape index: {}]
  %s1 = inlined_call_operand.vmem [shape: bf16[256,512], index: 1, kind: input, shape index: {}]
  %s2 = inlined_call_operand.vmem [shape: f32[32,256], index: 2, kind: output, shape index: {}]
  %s3 = sld [smem:[#allocation0]]
  $region18: #{spectral_discriminator_forward.7} parent=0
    _
  %s5 = ssub.s32 1, %s3
  %s6 = scalar_select 0, %s5, %s3
  // Predicated region
  $region2: #{spectral_discriminator_forward.7} parent=0 // pred_check
    _
  $region3: #{spectral_discriminator_forward.7} parent=0 // pred_check_branch
    %8 = sbr.rel (0) target = $region5
  $region4: #{spectral_discriminator_forward.7} parent=0 // pred_region
    _
  $region5: #{spectral_discriminator_forward.7} parent=0 // pred_fallthru
    _
  // Predicated region
  $region6: #{spectral_discriminator_forward.7} parent=0 // pred_check
    _
  $region7: #{spectral_discriminator_forward.7} parent=0 // pred_check_branch
    %10 = sbr.rel (0) target = $region9
  $region8: #{spectral_discriminator_forward.7} parent=0 // pred_region
    _
  $region9: #{spectral_discriminator_forward.7} parent=0 // pred_fallthru
    _
  %v11 = vld [vmem:[%s0] sm:$0xff]
  %v12 = vld [vmem:[%s0 + $0x8] sm:$0xff]
  %v13 = vld [vmem:[%s0 + $0x10] sm:$0xff]
  %v14 = vld [vmem:[%s0 + $0x18] sm:$0xff]
  %v15 = vld [vmem:[%s1] sm:$0xff]
  %v16 = vld [vmem:[%s1 + $0x8] sm:$0xff]
  %v17 = vld [vmem:[%s1 + $0x10] sm:$0xff]
  %v18 = vld [vmem:[%s1 + $0x18] sm:$0xff]
  %v19 = vld [vmem:[%s1 + $0x20] sm:$0xff]
  %v20 = vld [vmem:[%s1 + $0x28] sm:$0xff]
  %v21 = vld [vmem:[%s1 + $0x30] sm:$0xff]
  %v22 = vld [vmem:[%s1 + $0x38] sm:$0xff]
  %v23 = vld [vmem:[%s1 + $0x40] sm:$0xff]
  %v24 = vld [vmem:[%s1 + $0x48] sm:$0xff]
  %v25 = vld [vmem:[%s1 + $0x50] sm:$0xff]
  %v26 = vld [vmem:[%s1 + $0x58] sm:$0xff]
  %v27 = vld [vmem:[%s1 + $0x60] sm:$0xff]
  %v28 = vld [vmem:[%s1 + $0x68] sm:$0xff]
  %v29 = vld [vmem:[%s1 + $0x70] sm:$0xff]
  %v30 = vld [vmem:[%s1 + $0x78] sm:$0xff]
  %v31 = vld [vmem:[%s1 + $0x80] sm:$0xff]
  %v32 = vld [vmem:[%s1 + $0x88] sm:$0xff]
  %v33 = vld [vmem:[%s1 + $0x90] sm:$0xff]
  %v34 = vld [vmem:[%s1 + $0x98] sm:$0xff]
  %v35 = vld [vmem:[%s1 + $0xa0] sm:$0xff]
  %v36 = vld [vmem:[%s1 + $0xa8] sm:$0xff]
  %v37 = vld [vmem:[%s1 + $0xb0] sm:$0xff]
  %v38 = vld [vmem:[%s1 + $0xb8] sm:$0xff]
  %v39 = vld [vmem:[%s1 + $0xc0] sm:$0xff]
  %v40 = vld [vmem:[%s1 + $0xc8] sm:$0xff]
  %v41 = vld [vmem:[%s1 + $0xd0] sm:$0xff]
  %v42 = vld [vmem:[%s1 + $0xd8] sm:$0xff]
  %v43 = vld [vmem:[%s1 + $0xe0] sm:$0xff]
  %v44 = vld [vmem:[%s1 + $0xe8] sm:$0xff]
  %v45 = vld [vmem:[%s1 + $0xf0] sm:$0xff]
  %v46 = vld [vmem:[%s1 + $0xf8] sm:$0xff]
  %v47 = vld [vmem:[%s1 + $0x100] sm:$0xff]
  %v48 = vld [vmem:[%s1 + $0x108] sm:$0xff]
  %v49 = vld [vmem:[%s1 + $0x110] sm:$0xff]
  %v50 = vld [vmem:[%s1 + $0x118] sm:$0xff]
  %v51 = vld [vmem:[%s1 + $0x120] sm:$0xff]
  %v52 = vld [vmem:[%s1 + $0x128] sm:$0xff]
  %v53 = vld [vmem:[%s1 + $0x130] sm:$0xff]
  %v54 = vld [vmem:[%s1 + $0x138] sm:$0xff]
  %v55 = vld [vmem:[%s1 + $0x140] sm:$0xff]
  %v56 = vld [vmem:[%s1 + $0x148] sm:$0xff]
  %v57 = vld [vmem:[%s1 + $0x150] sm:$0xff]
  %v58 = vld [vmem:[%s1 + $0x158] sm:$0xff]
  %v59 = vld [vmem:[%s1 + $0x160] sm:$0xff]
  %v60 = vld [vmem:[%s1 + $0x168] sm:$0xff]
  %v61 = vld [vmem:[%s1 + $0x170] sm:$0xff]
  %v62 = vld [vmem:[%s1 + $0x178] sm:$0xff]
  %v63 = vld [vmem:[%s1 + $0x180] sm:$0xff]
  %v64 = vld [vmem:[%s1 + $0x188] sm:$0xff]
  %v65 = vld [vmem:[%s1 + $0x190] sm:$0xff]
  %v66 = vld [vmem:[%s1 + $0x198] sm:$0xff]
  %v67 = vld [vmem:[%s1 + $0x1a0] sm:$0xff]
  %v68 = vld [vmem:[%s1 + $0x1a8] sm:$0xff]
  %v69 = vld [vmem:[%s1 + $0x1b0] sm:$0xff]
  %v70 = vld [vmem:[%s1 + $0x1b8] sm:$0xff]
  %v71 = vld [vmem:[%s1 + $0x1c0] sm:$0xff]
  %v72 = vld [vmem:[%s1 + $0x1c8] sm:$0xff]
  %v73 = vld [vmem:[%s1 + $0x1d0] sm:$0xff]
  %v74 = vld [vmem:[%s1 + $0x1d8] sm:$0xff]
  %v75 = vld [vmem:[%s1 + $0x1e0] sm:$0xff]
  %v76 = vld [vmem:[%s1 + $0x1e8] sm:$0xff]
  %v77 = vld [vmem:[%s1 + $0x1f0] sm:$0xff]
  %v78 = vld [vmem:[%s1 + $0x1f8] sm:$0xff]
  %v83 = vunpack.c.l.b16 %v11
  %v84 = vunpack.c.h.b16 %v11
  %v85 = vunpack.c.l.b16 %v12
  %v86 = vunpack.c.h.b16 %v12
  %v87 = vunpack.c.l.b16 %v13
  %v88 = vunpack.c.h.b16 %v13
  %v89 = vunpack.c.l.b16 %v14
  %v90 = vunpack.c.h.b16 %v14
  %v91 = vpack.c.b16 %v85, %v83
  %v92 = vpack.c.b16 %v86, %v84
  %v93 = vpack.c.b16 %v89, %v87
  %v94 = vpack.c.b16 %v90, %v88
  %v163 = vunpack.c.l.b16 %v15
  %v164 = vunpack.c.h.b16 %v15
  %v165 = vunpack.c.l.b16 %v16
  %v166 = vunpack.c.h.b16 %v16
  %v167 = vunpack.c.l.b16 %v17
  %v168 = vunpack.c.h.b16 %v17
  %v169 = vunpack.c.l.b16 %v18
  %v170 = vunpack.c.h.b16 %v18
  %v171 = vunpack.c.l.b16 %v19
  %v172 = vunpack.c.h.b16 %v19
  %v173 = vunpack.c.l.b16 %v20
  %v174 = vunpack.c.h.b16 %v20
  %v175 = vunpack.c.l.b16 %v21
  %v176 = vunpack.c.h.b16 %v21
  %v177 = vunpack.c.l.b16 %v22
  %v178 = vunpack.c.h.b16 %v22
  %v179 = vunpack.c.l.b16 %v23
  %v180 = vunpack.c.h.b16 %v23
  %v181 = vunpack.c.l.b16 %v24
  %v182 = vunpack.c.h.b16 %v24
  %v183 = vunpack.c.l.b16 %v25
  %v184 = vunpack.c.h.b16 %v25
  %v185 = vunpack.c.l.b16 %v26
  %v186 = vunpack.c.h.b16 %v26
  %v187 = vunpack.c.l.b16 %v27
  %v188 = vunpack.c.h.b16 %v27
  %v189 = vunpack.c.l.b16 %v28
  %v190 = vunpack.c.h.b16 %v28
  %v191 = vunpack.c.l.b16 %v29
  %v192 = vunpack.c.h.b16 %v29
  %v193 = vunpack.c.l.b16 %v30
  %v194 = vunpack.c.h.b16 %v30
  %v195 = vunpack.c.l.b16 %v31
  %v196 = vunpack.c.h.b16 %v31
  %v197 = vunpack.c.l.b16 %v32
  %v198 = vunpack.c.h.b16 %v32
  %v199 = vunpack.c.l.b16 %v33
  %v200 = vunpack.c.h.b16 %v33
  %v201 = vunpack.c.l.b16 %v34
  %v202 = vunpack.c.h.b16 %v34
  %v203 = vunpack.c.l.b16 %v35
  %v204 = vunpack.c.h.b16 %v35
  %v205 = vunpack.c.l.b16 %v36
  %v206 = vunpack.c.h.b16 %v36
  %v207 = vunpack.c.l.b16 %v37
  %v208 = vunpack.c.h.b16 %v37
  %v209 = vunpack.c.l.b16 %v38
  %v210 = vunpack.c.h.b16 %v38
  %v211 = vunpack.c.l.b16 %v39
  %v212 = vunpack.c.h.b16 %v39
  %v213 = vunpack.c.l.b16 %v40
  %v214 = vunpack.c.h.b16 %v40
  %v215 = vunpack.c.l.b16 %v41
  %v216 = vunpack.c.h.b16 %v41
  %v217 = vunpack.c.l.b16 %v42
  %v218 = vunpack.c.h.b16 %v42
  %v219 = vunpack.c.l.b16 %v43
  %v220 = vunpack.c.h.b16 %v43
  %v221 = vunpack.c.l.b16 %v44
  %v222 = vunpack.c.h.b16 %v44
  %v223 = vunpack.c.l.b16 %v45
  %v224 = vunpack.c.h.b16 %v45
  %v225 = vunpack.c.l.b16 %v46
  %v226 = vunpack.c.h.b16 %v46
  %v227 = vunpack.c.l.b16 %v47
  %v228 = vunpack.c.h.b16 %v47
  %v229 = vunpack.c.l.b16 %v48
  %v230 = vunpack.c.h.b16 %v48
  %v231 = vunpack.c.l.b16 %v49
  %v232 = vunpack.c.h.b16 %v49
  %v233 = vunpack.c.l.b16 %v50
  %v234 = vunpack.c.h.b16 %v50
  %v235 = vunpack.c.l.b16 %v51
  %v236 = vunpack.c.h.b16 %v51
  %v237 = vunpack.c.l.b16 %v52
  %v238 = vunpack.c.h.b16 %v52
  %v239 = vunpack.c.l.b16 %v53
  %v240 = vunpack.c.h.b16 %v53
  %v241 = vunpack.c.l.b16 %v54
  %v242 = vunpack.c.h.b16 %v54
  %v243 = vunpack.c.l.b16 %v55
  %v244 = vunpack.c.h.b16 %v55
  %v245 = vunpack.c.l.b16 %v56
  %v246 = vunpack.c.h.b16 %v56
  %v247 = vunpack.c.l.b16 %v57
  %v248 = vunpack.c.h.b16 %v57
  %v249 = vunpack.c.l.b16 %v58
  %v250 = vunpack.c.h.b16 %v58
  %v251 = vunpack.c.l.b16 %v59
  %v252 = vunpack.c.h.b16 %v59
  %v253 = vunpack.c.l.b16 %v60
  %v254 = vunpack.c.h.b16 %v60
  %v255 = vunpack.c.l.b16 %v61
  %v256 = vunpack.c.h.b16 %v61
  %v257 = vunpack.c.l.b16 %v62
  %v258 = vunpack.c.h.b16 %v62
  %v259 = vunpack.c.l.b16 %v63
  %v260 = vunpack.c.h.b16 %v63
  %v261 = vunpack.c.l.b16 %v64
  %v262 = vunpack.c.h.b16 %v64
  %v263 = vunpack.c.l.b16 %v65
  %v264 = vunpack.c.h.b16 %v65
  %v265 = vunpack.c.l.b16 %v66
  %v266 = vunpack.c.h.b16 %v66
  %v267 = vunpack.c.l.b16 %v67
  %v268 = vunpack.c.h.b16 %v67
  %v269 = vunpack.c.l.b16 %v68
  %v270 = vunpack.c.h.b16 %v68
  %v271 = vunpack.c.l.b16 %v69
  %v272 = vunpack.c.h.b16 %v69
  %v273 = vunpack.c.l.b16 %v70
  %v274 = vunpack.c.h.b16 %v70
  %v275 = vunpack.c.l.b16 %v71
  %v276 = vunpack.c.h.b16 %v71
  %v277 = vunpack.c.l.b16 %v72
  %v278 = vunpack.c.h.b16 %v72
  %v279 = vunpack.c.l.b16 %v73
  %v280 = vunpack.c.h.b16 %v73
  %v281 = vunpack.c.l.b16 %v74
  %v282 = vunpack.c.h.b16 %v74
  %v283 = vunpack.c.l.b16 %v75
  %v284 = vunpack.c.h.b16 %v75
  %v285 = vunpack.c.l.b16 %v76
  %v286 = vunpack.c.h.b16 %v76
  %v287 = vunpack.c.l.b16 %v77
  %v288 = vunpack.c.h.b16 %v77
  %v289 = vunpack.c.l.b16 %v78
  %v290 = vunpack.c.h.b16 %v78
  %v291 = vpack.c.b16 %v167, %v163
  %v292 = vpack.c.b16 %v168, %v164
  %v293 = vpack.c.b16 %v169, %v165
  %v294 = vpack.c.b16 %v170, %v166
  %v295 = vpack.c.b16 %v175, %v171
  %v296 = vpack.c.b16 %v176, %v172
  %v297 = vpack.c.b16 %v177, %v173
  %v298 = vpack.c.b16 %v178, %v174
  %v299 = vpack.c.b16 %v183, %v179
  %v300 = vpack.c.b16 %v184, %v180
  %v301 = vpack.c.b16 %v185, %v181
  %v302 = vpack.c.b16 %v186, %v182
  %v303 = vpack.c.b16 %v191, %v187
  %v304 = vpack.c.b16 %v192, %v188
  %v305 = vpack.c.b16 %v193, %v189
  %v306 = vpack.c.b16 %v194, %v190
  %v307 = vpack.c.b16 %v199, %v195
  %v308 = vpack.c.b16 %v200, %v196
  %v309 = vpack.c.b16 %v201, %v197
  %v310 = vpack.c.b16 %v202, %v198
  %v311 = vpack.c.b16 %v207, %v203
  %v312 = vpack.c.b16 %v208, %v204
  %v313 = vpack.c.b16 %v209, %v205
  %v314 = vpack.c.b16 %v210, %v206
  %v315 = vpack.c.b16 %v215, %v211
  %v316 = vpack.c.b16 %v216, %v212
  %v317 = vpack.c.b16 %v217, %v213
  %v318 = vpack.c.b16 %v218, %v214
  %v319 = vpack.c.b16 %v223, %v219
  %v320 = vpack.c.b16 %v224, %v220
  %v321 = vpack.c.b16 %v225, %v221
  %v322 = vpack.c.b16 %v226, %v222
  %v323 = vpack.c.b16 %v231, %v227
  %v324 = vpack.c.b16 %v232, %v228
  %v325 = vpack.c.b16 %v233, %v229
  %v326 = vpack.c.b16 %v234, %v230
  %v327 = vpack.c.b16 %v239, %v235
  %v328 = vpack.c.b16 %v240, %v236
  %v329 = vpack.c.b16 %v241, %v237
  %v330 = vpack.c.b16 %v242, %v238
  %v331 = vpack.c.b16 %v247, %v243
  %v332 = vpack.c.b16 %v248, %v244
  %v333 = vpack.c.b16 %v249, %v245
  %v334 = vpack.c.b16 %v250, %v246
  %v335 = vpack.c.b16 %v255, %v251
  %v336 = vpack.c.b16 %v256, %v252
  %v337 = vpack.c.b16 %v257, %v253
  %v338 = vpack.c.b16 %v258, %v254
  %v339 = vpack.c.b16 %v263, %v259
  %v340 = vpack.c.b16 %v264, %v260
  %v341 = vpack.c.b16 %v265, %v261
  %v342 = vpack.c.b16 %v266, %v262
  %v343 = vpack.c.b16 %v271, %v267
  %v344 = vpack.c.b16 %v272, %v268
  %v345 = vpack.c.b16 %v273, %v269
  %v346 = vpack.c.b16 %v274, %v270
  %v347 = vpack.c.b16 %v279, %v275
  %v348 = vpack.c.b16 %v280, %v276
  %v349 = vpack.c.b16 %v281, %v277
  %v350 = vpack.c.b16 %v282, %v278
  %v351 = vpack.c.b16 %v287, %v283
  %v352 = vpack.c.b16 %v288, %v284
  %v353 = vpack.c.b16 %v289, %v285
  %v354 = vpack.c.b16 %v290, %v286
  %419 = vmatprep.subr.bf16.mxu0 %v292
  %420 = vmatpush1.bf16.msra.mxu0 %v291
  %421 = vmatprep.subr.bf16.mxu0 %v296
  %422 = vmatpush1.bf16.msra.mxu0 %v295
  %423 = vmatprep.subr.bf16.mxu0 %v300
  %424 = vmatpush1.bf16.msra.mxu0 %v299
  %425 = vmatprep.subr.bf16.mxu0 %v304
  %426 = vmatpush1.bf16.msra.mxu0 %v303
  %427 = vmatprep.subr.bf16.mxu0 %v308
  %428 = vmatpush1.bf16.msra.mxu0 %v307
  %429 = vmatprep.subr.bf16.mxu0 %v312
  %430 = vmatpush1.bf16.msra.mxu0 %v311
  %431 = vmatprep.subr.bf16.mxu0 %v316
  %432 = vmatpush1.bf16.msra.mxu0 %v315
  %433 = vmatprep.subr.bf16.mxu0 %v320
  %434 = vmatpush1.bf16.msra.mxu0 %v319
  %435 = vmatprep.subr.bf16.mxu0 %v324
  %436 = vmatpush1.bf16.msra.mxu0 %v323
  %437 = vmatprep.subr.bf16.mxu0 %v328
  %438 = vmatpush1.bf16.msra.mxu0 %v327
  %439 = vmatprep.subr.bf16.mxu0 %v332
  %440 = vmatpush1.bf16.msra.mxu0 %v331
  %441 = vmatprep.subr.bf16.mxu0 %v336
  %442 = vmatpush1.bf16.msra.mxu0 %v335
  %443 = vmatprep.subr.bf16.mxu0 %v340
  %444 = vmatpush1.bf16.msra.mxu0 %v339
  %445 = vmatprep.subr.bf16.mxu0 %v344
  %446 = vmatpush1.bf16.msra.mxu0 %v343
  %447 = vmatprep.subr.bf16.mxu0 %v348
  %448 = vmatpush1.bf16.msra.mxu0 %v347
  %449 = vmatprep.subr.bf16.mxu0 %v352
  %450 = vmatpush1.bf16.msra.mxu0 %v351
  %451 = vmatprep.mubr.bf16.mxu0 %v92
  %452 = vmatmul.mubr.bf16.gmra.mrb[0].mxu0 %v91
  %v453 = vpop.f32.mrb[0].mxu0
  %v454 = vadd.f32 0.0, %v453
  %v455 = vpop.f32.mrb[0].mxu0
  %v456 = vadd.f32 0.0, %v455
  %v457 = vpop.f32.mrb[0].mxu0
  %v458 = vadd.f32 0.0, %v457
  %v459 = vpop.f32.mrb[0].mxu0
  %v460 = vadd.f32 0.0, %v459
  %461 = vmatprep.mubr.bf16.mxu0 %v94
  %462 = vmatmul.mubr.bf16.gmra.mrb[0].mxu0 %v93
  %v463 = vpop.f32.mrb[0].mxu0
  %v464 = vadd.f32 0.0, %v463
  %v465 = vpop.f32.mrb[0].mxu0
  %v466 = vadd.f32 0.0, %v465
  %v467 = vpop.f32.mrb[0].mxu0
  %v468 = vadd.f32 0.0, %v467
  %v469 = vpop.f32.mrb[0].mxu0
  %v470 = vadd.f32 0.0, %v469
  %471 = vdwg.mxu0
  %472 = vmatprep.subr.bf16.mxu0 %v294
  %473 = vmatpush1.bf16.msra.mxu0 %v293
  %474 = vmatprep.subr.bf16.mxu0 %v298
  %475 = vmatpush1.bf16.msra.mxu0 %v297
  %476 = vmatprep.subr.bf16.mxu0 %v302
  %477 = vmatpush1.bf16.msra.mxu0 %v301
  %478 = vmatprep.subr.bf16.mxu0 %v306
  %479 = vmatpush1.bf16.msra.mxu0 %v305
  %480 = vmatprep.subr.bf16.mxu0 %v310
  %481 = vmatpush1.bf16.msra.mxu0 %v309
  %482 = vmatprep.subr.bf16.mxu0 %v314
  %483 = vmatpush1.bf16.msra.mxu0 %v313
  %484 = vmatprep.subr.bf16.mxu0 %v318
  %485 = vmatpush1.bf16.msra.mxu0 %v317
  %486 = vmatprep.subr.bf16.mxu0 %v322
  %487 = vmatpush1.bf16.msra.mxu0 %v321
  %488 = vmatprep.subr.bf16.mxu0 %v326
  %489 = vmatpush1.bf16.msra.mxu0 %v325
  %490 = vmatprep.subr.bf16.mxu0 %v330
  %491 = vmatpush1.bf16.msra.mxu0 %v329
  %492 = vmatprep.subr.bf16.mxu0 %v334
  %493 = vmatpush1.bf16.msra.mxu0 %v333
  %494 = vmatprep.subr.bf16.mxu0 %v338
  %495 = vmatpush1.bf16.msra.mxu0 %v337
  %496 = vmatprep.subr.bf16.mxu0 %v342
  %497 = vmatpush1.bf16.msra.mxu0 %v341
  %498 = vmatprep.subr.bf16.mxu0 %v346
  %499 = vmatpush1.bf16.msra.mxu0 %v345
  %500 = vmatprep.subr.bf16.mxu0 %v350
  %501 = vmatpush1.bf16.msra.mxu0 %v349
  %502 = vmatprep.subr.bf16.mxu0 %v354
  %503 = vmatpush1.bf16.msra.mxu0 %v353
  %504 = vmatprep.mubr.bf16.mxu0 %v92
  %505 = vmatmul.mubr.bf16.gmra.mrb[0].mxu0 %v91
  %v506 = vpop.f32.mrb[0].mxu0
  %v507 = vadd.f32 0.0, %v506
  %v508 = vpop.f32.mrb[0].mxu0
  %v509 = vadd.f32 0.0, %v508
  %v510 = vpop.f32.mrb[0].mxu0
  %v511 = vadd.f32 0.0, %v510
  %v512 = vpop.f32.mrb[0].mxu0
  %v513 = vadd.f32 0.0, %v512
  %514 = vmatprep.mubr.bf16.mxu0 %v94
  %515 = vmatmul.mubr.bf16.gmra.mrb[0].mxu0 %v93
  %v516 = vpop.f32.mrb[0].mxu0
  %v517 = vadd.f32 0.0, %v516
  %v518 = vpop.f32.mrb[0].mxu0
  %v519 = vadd.f32 0.0, %v518
  %v520 = vpop.f32.mrb[0].mxu0
  %v521 = vadd.f32 0.0, %v520
  %v522 = vpop.f32.mrb[0].mxu0
  %v523 = vadd.f32 0.0, %v522
  %524 = vdwg.mxu0
  %v525 = vmul.f32 %v454, %v454
  %v526 = vmul.f32 %v456, %v456
  %v527 = vmul.f32 %v458, %v458
  %v528 = vmul.f32 %v460, %v460
  %v529 = vmul.f32 %v464, %v464
  %v530 = vmul.f32 %v466, %v466
  %v531 = vmul.f32 %v468, %v468
  %v532 = vmul.f32 %v470, %v470
  %v533 = vmul.f32 %v507, %v507
  %v534 = vmul.f32 %v509, %v509
  %v535 = vmul.f32 %v511, %v511
  %v536 = vmul.f32 %v513, %v513
  %v537 = vmul.f32 %v517, %v517
  %v538 = vmul.f32 %v519, %v519
  %v539 = vmul.f32 %v521, %v521
  %v540 = vmul.f32 %v523, %v523
  %v541 = vadd.f32 %v525, %v533
  %v542 = vadd.f32 %v526, %v534
  %v543 = vadd.f32 %v527, %v535
  %v544 = vadd.f32 %v528, %v536
  %v545 = vadd.f32 %v529, %v537
  %v546 = vadd.f32 %v530, %v538
  %v547 = vadd.f32 %v531, %v539
  %v548 = vadd.f32 %v532, %v540
  %v549 = vrsqrt.pop %v541
  %v550 = vmul.f32 %v541, %v549
  %vm551 = vcmp.eq.f32.partialorder %v541, inf
  %v552 = vsel %vm551, %v541, %v550
  %vm553 = vcmp.eq.f32.partialorder %v541, 0.0
  %v554 = vand.u32 %v541, 2147483648
  %v555 = vsel %vm553, %v554, %v552
  %v556 = vrsqrt.pop %v542
  %v557 = vmul.f32 %v542, %v556
  %vm558 = vcmp.eq.f32.partialorder %v542, inf
  %v559 = vsel %vm558, %v542, %v557
  %vm560 = vcmp.eq.f32.partialorder %v542, 0.0
  %v561 = vand.u32 %v542, 2147483648
  %v562 = vsel %vm560, %v561, %v559
  %v563 = vrsqrt.pop %v543
  %v564 = vmul.f32 %v543, %v563
  %vm565 = vcmp.eq.f32.partialorder %v543, inf
  %v566 = vsel %vm565, %v543, %v564
  %vm567 = vcmp.eq.f32.partialorder %v543, 0.0
  %v568 = vand.u32 %v543, 2147483648
  %v569 = vsel %vm567, %v568, %v566
  %v570 = vrsqrt.pop %v544
  %v571 = vmul.f32 %v544, %v570
  %vm572 = vcmp.eq.f32.partialorder %v544, inf
  %v573 = vsel %vm572, %v544, %v571
  %vm574 = vcmp.eq.f32.partialorder %v544, 0.0
  %v575 = vand.u32 %v544, 2147483648
  %v576 = vsel %vm574, %v575, %v573
  %v577 = vrsqrt.pop %v545
  %v578 = vmul.f32 %v545, %v577
  %vm579 = vcmp.eq.f32.partialorder %v545, inf
  %v580 = vsel %vm579, %v545, %v578
  %vm581 = vcmp.eq.f32.partialorder %v545, 0.0
  %v582 = vand.u32 %v545, 2147483648
  %v583 = vsel %vm581, %v582, %v580
  %v584 = vrsqrt.pop %v546
  %v585 = vmul.f32 %v546, %v584
  %vm586 = vcmp.eq.f32.partialorder %v546, inf
  %v587 = vsel %vm586, %v546, %v585
  %vm588 = vcmp.eq.f32.partialorder %v546, 0.0
  %v589 = vand.u32 %v546, 2147483648
  %v590 = vsel %vm588, %v589, %v587
  %v591 = vrsqrt.pop %v547
  %v592 = vmul.f32 %v547, %v591
  %vm593 = vcmp.eq.f32.partialorder %v547, inf
  %v594 = vsel %vm593, %v547, %v592
  %vm595 = vcmp.eq.f32.partialorder %v547, 0.0
  %v596 = vand.u32 %v547, 2147483648
  %v597 = vsel %vm595, %v596, %v594
  %v598 = vrsqrt.pop %v548
  %v599 = vmul.f32 %v548, %v598
  %vm600 = vcmp.eq.f32.partialorder %v548, inf
  %v601 = vsel %vm600, %v548, %v599
  %vm602 = vcmp.eq.f32.partialorder %v548, 0.0
  %v603 = vand.u32 %v548, 2147483648
  %v604 = vsel %vm602, %v603, %v601
  %605 = vst [vmem:[%s2] sm:$0xff] %v555
  %606 = vst [vmem:[%s2 + $0x8] sm:$0xff] %v562
  %607 = vst [vmem:[%s2 + $0x10] sm:$0xff] %v569
  %608 = vst [vmem:[%s2 + $0x18] sm:$0xff] %v576
  %609 = vst [vmem:[%s2 + $0x20] sm:$0xff] %v583
  %610 = vst [vmem:[%s2 + $0x28] sm:$0xff] %v590
  %611 = vst [vmem:[%s2 + $0x30] sm:$0xff] %v597
  %612 = vst [vmem:[%s2 + $0x38] sm:$0xff] %v604
  // Predicated region
  $region10: #{spectral_discriminator_forward.7} parent=0 // pred_check
    _
  $region11: #{spectral_discriminator_forward.7} parent=0 // pred_check_branch
    %614 = sbr.rel (0) target = $region13
  $region12: #{spectral_discriminator_forward.7} parent=0 // pred_region
    _
  $region13: #{spectral_discriminator_forward.7} parent=0 // pred_fallthru
    _
  // Predicated region
  $region14: #{spectral_discriminator_forward.7} parent=0 // pred_check
    _
  $region15: #{spectral_discriminator_forward.7} parent=0 // pred_check_branch
    %616 = sbr.rel (0) target = $region17
  $region16: #{spectral_discriminator_forward.7} parent=0 // pred_region
    _
  $region17: #{spectral_discriminator_forward.7} parent=0 // pred_fallthru
    _

// kernel: spectral_discriminator_forward.8
$region0: #{spectral_discriminator_forward.8}
  #allocation0 [shape = 'u32[]', space=smem, size = 0x4, offset = 0x4, fixed_abs, tag = 'smem constant byte address 0x4 - core index']
  #allocation1 [shape = 'u32[144,128]{1,0:T(1,128)}', space=vmem, size = 0x12000, scoped, tag = 'internal scratch']
  %s0 = inlined_call_operand.vmem [shape: bf16[8,27], index: 0, kind: input, shape index: {}]
  %s1 = inlined_call_operand.vmem [shape: f32[8,1], index: 1, kind: input, shape index: {}]
  %s2 = inlined_call_operand.vmem [shape: bf16[27,3072], index: 2, kind: input, shape index: {}]
  %s3 = inlined_call_operand.vmem [shape: f32[8,3072], index: 3, kind: output, shape index: {}]
  %s4 = sld [smem:[#allocation0]]
  $region68: #{spectral_discriminator_forward.8} parent=0
    _
  %s6 = ssub.s32 1, %s4
  %s7 = scalar_select 0, %s6, %s4
  $region1: #{spectral_discriminator_forward.8} parent=0
    #allocation2 [shape = 'u8[131072]{0}', space=vmem, size = 0x20000, scoped, tag = 'input window, operand 2']
    loop: start=0, step=1, limit=5
    $region2: #{spectral_discriminator_forward.8} parent=1 // loop_pre_header
      _
    $region3: #{spectral_discriminator_forward.8} parent=1 // loop_header
      %s9 = sphi 0, %s13
      %p10 = scmp.ge.s32.totalorder %s9, 5
      %s17 = sphi 0, %s17
      %s19 = sphi 0, %s17
      %s20 = sphi 0, %s19
      %s34 = sphi 0, %s20
      %s38 = sphi 0, %s38
      %s40 = sphi 0, %s38
      %s41 = sphi 0, %s40
      %s55 = sphi 0, %s41
      %s61 = sphi 0, %s63
      %s64 = sphi 0, %s61
      %s65 = sphi 0, %s64
      %s81 = sphi 0, %s65
      %s87 = sphi 0, %s89
      %s90 = sphi 0, %s87
      %s91 = sphi 0, %s90
      %s107 = sphi 0, %s91
    $region4: #{spectral_discriminator_forward.8} parent=1 // loop_header_branch
      %12 = sbr.rel (%p10) target = $region8
    $region5: #{spectral_discriminator_forward.8} parent=1 // loop_body
      %s14 = ssub.s32 %s9, 1
      %s15 = ssub.s32 %s9, 2
      %s16 = sadd.s32 %s9, 1
      %s18 = sadd.s32 %s17, 1
      %p21 = scmp.eq.s32.totalorder %s9, 2
      %p22 = scmp.ne.s32.totalorder %s17, %s19
      %p23 = scmp.eq.s32.totalorder %s9, 0
      %p24 = por %p22, %p23
      %p25 = scmp.ne.s32.totalorder %s17, %s19
      %p26 = scmp.eq.s32.totalorder %s14, 2
      %p27 = por %p25, %p26
      %p28 = scmp.ne.s32.totalorder %s19, %s20
      %p29 = scmp.eq.s32.totalorder %s14, 0
      %p30 = por %p28, %p29
      %p31 = scmp.ne.s32.totalorder %s19, %s20
      %p32 = scmp.eq.s32.totalorder %s15, 2
      %p33 = por %p31, %p32
      %p35 = scmp.ne.s32.totalorder %s20, %s34
      %p36 = scmp.eq.s32.totalorder %s15, 0
      %p37 = por %p35, %p36
      %s39 = sadd.s32 %s38, 1
      %p42 = scmp.eq.s32.totalorder %s9, 2
      %p43 = scmp.ne.s32.totalorder %s38, %s40
      %p44 = scmp.eq.s32.totalorder %s9, 0
      %p45 = por %p43, %p44
      %p46 = scmp.ne.s32.totalorder %s38, %s40
      %p47 = scmp.eq.s32.totalorder %s14, 2
      %p48 = por %p46, %p47
      %p49 = scmp.ne.s32.totalorder %s40, %s41
      %p50 = scmp.eq.s32.totalorder %s14, 0
      %p51 = por %p49, %p50
      %p52 = scmp.ne.s32.totalorder %s40, %s41
      %p53 = scmp.eq.s32.totalorder %s15, 2
      %p54 = por %p52, %p53
      %p56 = scmp.ne.s32.totalorder %s41, %s55
      %p57 = scmp.eq.s32.totalorder %s15, 0
      %p58 = por %p56, %p57
      %s59 = ssub.s32 %s9, %s16
      %p60 = scmp.eq.s32.totalorder %s59, 0
      %s62 = sadd.s32 %s61, 1
      %s63 = scalar_select %p60, %s61, %s62
      %p66 = pneg %p60
      %p67 = scmp.eq.s32.totalorder %s9, 2
      %p68 = por %p66, %p67
      %p69 = scmp.ne.s32.totalorder %s61, %s64
      %p70 = scmp.eq.s32.totalorder %s9, 0
      %p71 = por %p69, %p70
      %p72 = scmp.ne.s32.totalorder %s61, %s64
      %p73 = scmp.eq.s32.totalorder %s14, 2
      %p74 = por %p72, %p73
      %p75 = scmp.ne.s32.totalorder %s64, %s65
      %p76 = scmp.eq.s32.totalorder %s14, 0
      %p77 = por %p75, %p76
      %p78 = scmp.ne.s32.totalorder %s64, %s65
      %p79 = scmp.eq.s32.totalorder %s15, 2
      %p80 = por %p78, %p79
      %p82 = scmp.ne.s32.totalorder %s65, %s81
      %p83 = scmp.eq.s32.totalorder %s15, 0
      %p84 = por %p82, %p83
      %s85 = ssub.s32 %s9, %s16
      %p86 = scmp.eq.s32.totalorder %s85, 0
      %s88 = sadd.s32 %s87, 1
      %s89 = scalar_select %p86, %s87, %s88
      %p92 = pneg %p86
      %p93 = scmp.eq.s32.totalorder %s9, 2
      %p94 = por %p92, %p93
      %p95 = scmp.ne.s32.totalorder %s87, %s90
      %p96 = scmp.eq.s32.totalorder %s9, 0
      %p97 = por %p95, %p96
      %p98 = scmp.ne.s32.totalorder %s87, %s90
      %p99 = scmp.eq.s32.totalorder %s14, 2
      %p100 = por %p98, %p99
      %p101 = scmp.ne.s32.totalorder %s90, %s91
      %p102 = scmp.eq.s32.totalorder %s14, 0
      %p103 = por %p101, %p102
      %p104 = scmp.ne.s32.totalorder %s90, %s91
      %p105 = scmp.eq.s32.totalorder %s15, 2
      %p106 = por %p104, %p105
      %p108 = scmp.ne.s32.totalorder %s91, %s107
      %p109 = scmp.eq.s32.totalorder %s15, 0
      %p110 = por %p108, %p109
      %p111 = scmp.le.s32.totalorder 1, %s9
      %p112 = scmp.lt.s32.totalorder %s9, 4
      %p113 = pnand %p111, %p112
      %p114 = pneg %p113
      // Predicated region
      $region9: #{spectral_discriminator_forward.8} parent=5 // pred_check
        _
      $region10: #{spectral_discriminator_forward.8} parent=5 // pred_check_branch
        %116 = sbr.rel (%p113) target = $region12
      $region11: #{spectral_discriminator_forward.8} parent=5 // pred_region
        %s117 = ssub.s32 %s9, 1
        // Predicated region
        $region13: #{spectral_discriminator_forward.8} parent=11 // pred_check
          %p118 = pneg %p30
        $region14: #{spectral_discriminator_forward.8} parent=11 // pred_check_branch
          %120 = sbr.rel (%p118) target = $region16
        $region15: #{spectral_discriminator_forward.8} parent=11 // pred_region
          _
        $region16: #{spectral_discriminator_forward.8} parent=11 // pred_fallthru
          _
        // Predicated region
        $region17: #{spectral_discriminator_forward.8} parent=11 // pred_check
          %p121 = pneg %p51
        $region18: #{spectral_discriminator_forward.8} parent=11 // pred_check_branch
          %123 = sbr.rel (%p121) target = $region20
        $region19: #{spectral_discriminator_forward.8} parent=11 // pred_region
          _
        $region20: #{spectral_discriminator_forward.8} parent=11 // pred_fallthru
          _
      $region12: #{spectral_discriminator_forward.8} parent=5 // pred_fallthru
        _
      %p124 = scmp.lt.s32.totalorder %s9, 3
      // Predicated region
      $region21: #{spectral_discriminator_forward.8} parent=5 // pred_check
        %p125 = pneg %p124
      $region22: #{spectral_discriminator_forward.8} parent=5 // pred_check_branch
        %127 = sbr.rel (%p125) target = $region24
      $region23: #{spectral_discriminator_forward.8} parent=5 // pred_region
        // Predicated region
        $region25: #{spectral_discriminator_forward.8} parent=23 // pred_check
          %p128 = pneg %p71
        $region26: #{spectral_discriminator_forward.8} parent=23 // pred_check_branch
          %130 = sbr.rel (%p128) target = $region28
        $region27: #{spectral_discriminator_forward.8} parent=23 // pred_region
          %s131 = sand.u32 %s61, 1
          %s132 = sand.u32 %s61, 1
          %s133 = smul.addr %s132, 128
          %s134 = scalar_lea.vmem [#allocation2], %s133
          %s135 = smul.u32 8, %s9
          %s136 = smul.addr %s135, 4
          %s137 = scalar_lea.vmem %s2, %s136
          // Predicated region
          $region29: #{spectral_discriminator_forward.8} parent=27 // pred_check
            _
          $region30: #{spectral_discriminator_forward.8} parent=27 // pred_check_branch
            %139 = sbr.rel (0) target = $region32
          $region31: #{spectral_discriminator_forward.8} parent=27 // pred_region
            // Predicated region
            $region33: #{spectral_discriminator_forward.8} parent=31 // pred_check
              _
            $region34: #{spectral_discriminator_forward.8} parent=31 // pred_check_branch
              %141 = sbr.rel (0) target = $region36
            $region35: #{spectral_discriminator_forward.8} parent=31 // pred_region
              loop: start=0, step=1, limit=1
              $region37: #{spectral_discriminator_forward.8} parent=35 // loop_pre_header
                _
              $region38: #{spectral_discriminator_forward.8} parent=35 // loop_header
                %s143 = sphi 0, %s147
                %p144 = scmp.ge.s32.totalorder %s143, 1
                %s148 = sphi %s137, %s137
                %s149 = sphi %s134, %s134
              $region39: #{spectral_discriminator_forward.8} parent=35 // loop_header_branch
                %146 = sbr.rel (%p144) target = $region43
              $region40: #{spectral_discriminator_forward.8} parent=35 // loop_body
                %v150 = vld [vmem:[%s148] sm:$0xff]
                %151 = vst [vmem:[%s149] sm:$0xff] %v150
                %v152 = vld [vmem:[%s148 + $0x8] sm:$0xff]
                %153 = vst [vmem:[%s149 + $0x8] sm:$0xff] %v152
                %v154 = vld [vmem:[%s148 + $0x10] sm:$0xff]
                %155 = vst [vmem:[%s149 + $0x10] sm:$0xff] %v154
                %v156 = vld [vmem:[%s148 + $0x18] sm:$0xff]
                %157 = vst [vmem:[%s149 + $0x18] sm:$0xff] %v156
                %v158 = vld [vmem:[%s148 + $0x60] sm:$0xff]
                %159 = vst [vmem:[%s149 + $0x20] sm:$0xff] %v158
                %v160 = vld [vmem:[%s148 + $0x68] sm:$0xff]
                %161 = vst [vmem:[%s149 + $0x28] sm:$0xff] %v160
                %v162 = vld [vmem:[%s148 + $0x70] sm:$0xff]
                %163 = vst [vmem:[%s149 + $0x30] sm:$0xff] %v162
                %v164 = vld [vmem:[%s148 + $0x78] sm:$0xff]
                %165 = vst [vmem:[%s149 + $0x38] sm:$0xff] %v164
                %v166 = vld [vmem:[%s148 + $0xc0] sm:$0xff]
                %167 = vst [vmem:[%s149 + $0x40] sm:$0xff] %v166
                %v168 = vld [vmem:[%s148 + $0xc8] sm:$0xff]
                %169 = vst [vmem:[%s149 + $0x48] sm:$0xff] %v168
                %v170 = vld [vmem:[%s148 + $0xd0] sm:$0xff]
                %171 = vst [vmem:[%s149 + $0x50] sm:$0xff] %v170
                %v172 = vld [vmem:[%s148 + $0xd8] sm:$0xff]
                %173 = vst [vmem:[%s149 + $0x58] sm:$0xff] %v172
                %v174 = vld [vmem:[%s148 + $0x120] sm:$0xff]
                %175 = vst [vmem:[%s149 + $0x60] sm:$0xff] %v174
                %v176 = vld [vmem:[%s148 + $0x128] sm:$0xff]
                %177 = vst [vmem:[%s149 + $0x68] sm:$0xff] %v176
                %v178 = vld [vmem:[%s148 + $0x130] sm:$0xff]
                %179 = vst [vmem:[%s149 + $0x70] sm:$0xff] %v178
                %v180 = vld [vmem:[%s148 + $0x138] sm:$0xff]
                %181 = vst [vmem:[%s149 + $0x78] sm:$0xff] %v180
              $region41: #{spectral_discriminator_forward.8} parent=35 // loop_footer
                %s147 = sadd.s32 1, %s143
              $region42: #{spectral_discriminator_forward.8} parent=35 // loop_footer_branch
                %142 = sbr.rel target = $region38
              $region43: #{spectral_discriminator_forward.8} parent=35 // loop_exit
                _
            $region36: #{spectral_discriminator_forward.8} parent=31 // pred_fallthru
              _
            // Predicated region
            $region44: #{spectral_discriminator_forward.8} parent=31 // pred_check
              _
            $region45: #{spectral_discriminator_forward.8} parent=31 // pred_check_branch
              %183 = sbr.rel target = $region47
            $region46: #{spectral_discriminator_forward.8} parent=31 // pred_region
              _
            $region47: #{spectral_discriminator_forward.8} parent=31 // pred_fallthru
              _
          $region32: #{spectral_discriminator_forward.8} parent=27 // pred_fallthru
            _
          %184 = vnop
        $region28: #{spectral_discriminator_forward.8} parent=23 // pred_fallthru
          _
      $region24: #{spectral_discriminator_forward.8} parent=5 // pred_fallthru
        _
      %p185 = scmp.le.s32.totalorder 1, %s9
      %p186 = scmp.lt.s32.totalorder %s9, 4
      %p187 = pnand %p185, %p186
      %p188 = pneg %p187
      // Predicated region
      $region48: #{spectral_discriminator_forward.8} parent=5 // pred_check
        _
      $region49: #{spectral_discriminator_forward.8} parent=5 // pred_check_branch
        %190 = sbr.rel (%p187) target = $region51
      $region50: #{spectral_discriminator_forward.8} parent=5 // pred_region
        %s191 = ssub.s32 %s9, 1
        %s192 = sand.u32 %s64, 1
        %s193 = sand.u32 %s64, 1
        %s194 = smul.addr %s193, 128
        %s195 = scalar_lea.vmem [#allocation2], %s194
        // Predicated region
        $region52: #{spectral_discriminator_forward.8} parent=50 // pred_check
          %p196 = pneg %p77
        $region53: #{spectral_discriminator_forward.8} parent=50 // pred_check_branch
          %198 = sbr.rel (%p196) target = $region55
        $region54: #{spectral_discriminator_forward.8} parent=50 // pred_region
          _
        $region55: #{spectral_discriminator_forward.8} parent=50 // pred_fallthru
          _
        %p199 = pneg %p30
        %p200 = pneg %p27
        %p201 = pneg %p51
        %p202 = pneg %p48
        %s203 = sand.u32 %s64, 1
        %s204 = sand.u32 %s64, 1
        %s205 = smul.addr %s204, 128
        %s206 = scalar_lea.vmem [#allocation2], %s205
        %p207 = pneg %p77
        %p208 = pneg %p74
        %p209 = pneg %p103
        %p210 = pneg %p100
        %s211 = smul.u32 8, %s14
        %p212 = scmp.lt.s32.totalorder %s211, 23
        %s213 = scalar_select %p212, %s211, 23
        %s214 = smul.addr %s213, 8
        %s215 = scalar_lea.vmem %s3, %s214
        %s216 = smul.u32 8, %s14
        %s217 = smul.u32 8, %s14
        %p218 = scmp.lt.s32.totalorder %s217, 23
        %s219 = scalar_select %p218, %s217, 23
        %s220 = smul.addr %s219, 8
        %s221 = scalar_lea.vmem %s3, %s220
        %s222 = smul.u32 8, %s14
        %v224 = vld [vmem:[%s0] sm:$0xf]
        %v225 = vld [vmem:[%s195] sm:$0xff]
        %v226 = vld [vmem:[%s195 + $0x8] sm:$0xff]
        %v227 = vld [vmem:[%s195 + $0x10] sm:$0xff]
        %v228 = vld [vmem:[%s195 + $0x18] sm:$0xff]
        %v229 = vld [vmem:[%s195 + $0x20] sm:$0xff]
        %v230 = vld [vmem:[%s195 + $0x28] sm:$0xff]
        %v231 = vld [vmem:[%s195 + $0x30] sm:$0xff]
        %v232 = vld [vmem:[%s195 + $0x38] sm:$0xff]
        %v233 = vld [vmem:[%s195 + $0x40] sm:$0xff]
        %v234 = vld [vmem:[%s195 + $0x48] sm:$0xff]
        %v235 = vld [vmem:[%s195 + $0x50] sm:$0xff]
        %v236 = vld [vmem:[%s195 + $0x58] sm:$0xff]
        %v237 = vld [vmem:[%s195 + $0x60] sm:$0x33]
        %v238 = vld [vmem:[%s195 + $0x68] sm:$0x33]
        %v239 = vld [vmem:[%s195 + $0x70] sm:$0x33]
        %v240 = vld [vmem:[%s195 + $0x78] sm:$0x33]
        %v241 = vld [vmem:[%s1] sm:$0xff]
        %243 = vset.pattern.permute.xlu0 0
        %244 = vperm.xlu0 %243, %v241
        %v245 = vpop.permute.xlu0 %244
        %v263 = vunpack.c.l.b16 %v225
        %v264 = vunpack.c.h.b16 %v225
        %v265 = vunpack.c.l.b16 %v226
        %v266 = vunpack.c.h.b16 %v226
        %v267 = vunpack.c.l.b16 %v227
        %v268 = vunpack.c.h.b16 %v227
        %v269 = vunpack.c.l.b16 %v228
        %v270 = vunpack.c.h.b16 %v228
        %v271 = vunpack.c.l.b16 %v229
        %v272 = vunpack.c.h.b16 %v229
        %v273 = vunpack.c.l.b16 %v230
        %v274 = vunpack.c.h.b16 %v230
        %v275 = vunpack.c.l.b16 %v231
        %v276 = vunpack.c.h.b16 %v231
        %v277 = vunpack.c.l.b16 %v232
        %v278 = vunpack.c.h.b16 %v232
        %v279 = vunpack.c.l.b16 %v233
        %v280 = vunpack.c.h.b16 %v233
        %v281 = vunpack.c.l.b16 %v234
        %v282 = vunpack.c.h.b16 %v234
        %v283 = vunpack.c.l.b16 %v235
        %v284 = vunpack.c.h.b16 %v235
        %v285 = vunpack.c.l.b16 %v236
        %v286 = vunpack.c.h.b16 %v236
        %v287 = vunpack.c.l.b16 %v237
        %v288 = vunpack.c.h.b16 %v237
        %v289 = vunpack.c.l.b16 %v238
        %v290 = vunpack.c.h.b16 %v238
        %v291 = vunpack.c.l.b16 %v239
        %v292 = vunpack.c.h.b16 %v239
        %v293 = vunpack.c.l.b16 %v240
        %v294 = vunpack.c.h.b16 %v240
        %v295 = vpack.c.b16 %v271, %v263
        %v296 = vpack.c.b16 %v272, %v264
        %v297 = vpack.c.b16 %v273, %v265
        %v298 = vpack.c.b16 %v274, %v266
        %v299 = vpack.c.b16 %v275, %v267
        %v300 = vpack.c.b16 %v276, %v268
        %v301 = vpack.c.b16 %v277, %v269
        %v302 = vpack.c.b16 %v278, %v270
        %v303 = vpack.c.b16 %v287, %v279
        %v304 = vpack.c.b16 %v288, %v280
        %v305 = vpack.c.b16 %v289, %v281
        %v306 = vpack.c.b16 %v290, %v282
        %v307 = vpack.c.b16 %v291, %v283
        %v308 = vpack.c.b16 %v292, %v284
        %v309 = vpack.c.b16 %v293, %v285
        %v310 = vpack.c.b16 %v294, %v286
        %vm319 = vcmask 220160
        %v321 = vsel %vm319, %v224, 0
        %vm323 = vcmask 1044480
        %vm324 = vcmask 1045504
        %v325 = vsel %vm323, 4294967295, 65535
        %v326 = vsel %vm324, %v325, 0
        %v328 = vand.u32 %v303, %v326
        %v331 = vand.u32 %v304, %v326
        %v334 = vand.u32 %v305, %v326
        %v337 = vand.u32 %v306, %v326
        %v340 = vand.u32 %v307, %v326
        %v343 = vand.u32 %v308, %v326
        %v346 = vand.u32 %v309, %v326
        %v349 = vand.u32 %v310, %v326
        %351 = vmatprep.subr.bf16.mxu0 %v296
        %352 = vmatpush1.bf16.msra.mxu0 %v295
        %353 = vmatprep.subr.bf16.mxu0 %v331
        %354 = vmatpush1.bf16.msra.mxu0 %v328
        %355 = vmatprep.subr.bf16.mxu0 0
        %356 = vmatpush1.bf16.msra.mxu0 0
        %357 = vmatprep.subr.bf16.mxu0 0
        %358 = vmatpush1.bf16.msra.mxu0 0
        %359 = vmatprep.subr.bf16.mxu0 0
        %360 = vmatpush1.bf16.msra.mxu0 0
        %361 = vmatprep.subr.bf16.mxu0 0
        %362 = vmatpush1.bf16.msra.mxu0 0
        %363 = vmatprep.subr.bf16.mxu0 0
        %364 = vmatpush1.bf16.msra.mxu0 0
        %365 = vmatprep.subr.bf16.mxu0 0
        %366 = vmatpush1.bf16.msra.mxu0 0
        %367 = vmatprep.subr.bf16.mxu0 0
        %368 = vmatpush1.bf16.msra.mxu0 0
        %369 = vmatprep.subr.bf16.mxu0 0
        %370 = vmatpush1.bf16.msra.mxu0 0
        %371 = vmatprep.subr.bf16.mxu0 0
        %372 = vmatpush1.bf16.msra.mxu0 0
        %373 = vmatprep.subr.bf16.mxu0 0
        %374 = vmatpush1.bf16.msra.mxu0 0
        %375 = vmatprep.subr.bf16.mxu0 0
        %376 = vmatpush1.bf16.msra.mxu0 0
        %377 = vmatprep.subr.bf16.mxu0 0
        %378 = vmatpush1.bf16.msra.mxu0 0
        %379 = vmatprep.subr.bf16.mxu0 0
        %380 = vmatpush1.bf16.msra.mxu0 0
        %381 = vmatprep.subr.bf16.mxu0 0
        %382 = vmatpush1.bf16.msra.mxu0 0
        %383 = vmatprep.mubr.bf16.mxu0 0
        %384 = vmatmul.mubr.bf16.gmra.mrb[0].mxu0 %v321
        %v385 = vpop.f32.mrb[0].mxu0
        %v386 = vadd.f32 %v245, %v385
        %v387 = vpop.f32.mrb[0].mxu0
        %v388 = vadd.f32 %v245, %v387
        %v389 = vpop.f32.mrb[0].mxu0
        %v390 = vpop.f32.mrb[0].mxu0
        %391 = vdwg.mxu0
        %392 = vmatprep.subr.bf16.mxu0 %v298
        %393 = vmatpush1.bf16.msra.mxu0 %v297
        %394 = vmatprep.subr.bf16.mxu0 %v337
        %395 = vmatpush1.bf16.msra.mxu0 %v334
        %396 = vmatprep.subr.bf16.mxu0 0
        %397 = vmatpush1.bf16.msra.mxu0 0
        %398 = vmatprep.subr.bf16.mxu0 0
        %399 = vmatpush1.bf16.msra.mxu0 0
        %400 = vmatprep.subr.bf16.mxu0 0
        %401 = vmatpush1.bf16.msra.mxu0 0
        %402 = vmatprep.subr.bf16.mxu0 0
        %403 = vmatpush1.bf16.msra.mxu0 0
        %404 = vmatprep.subr.bf16.mxu0 0
        %405 = vmatpush1.bf16.msra.mxu0 0
        %406 = vmatprep.subr.bf16.mxu0 0
        %407 = vmatpush1.bf16.msra.mxu0 0
        %408 = vmatprep.subr.bf16.mxu0 0
        %409 = vmatpush1.bf16.msra.mxu0 0
        %410 = vmatprep.subr.bf16.mxu0 0
        %411 = vmatpush1.bf16.msra.mxu0 0
        %412 = vmatprep.subr.bf16.mxu0 0
        %413 = vmatpush1.bf16.msra.mxu0 0
        %414 = vmatprep.subr.bf16.mxu0 0
        %415 = vmatpush1.bf16.msra.mxu0 0
        %416 = vmatprep.subr.bf16.mxu0 0
        %417 = vmatpush1.bf16.msra.mxu0 0
        %418 = vmatprep.subr.bf16.mxu0 0
        %419 = vmatpush1.bf16.msra.mxu0 0
        %420 = vmatprep.subr.bf16.mxu0 0
        %421 = vmatpush1.bf16.msra.mxu0 0
        %422 = vmatprep.subr.bf16.mxu0 0
        %423 = vmatpush1.bf16.msra.mxu0 0
        %424 = vmatprep.mubr.bf16.mxu0 0
        %425 = vmatmul.mubr.bf16.gmra.mrb[0].mxu0 %v321
        %v426 = vpop.f32.mrb[0].mxu0
        %v427 = vadd.f32 %v245, %v426
        %v428 = vpop.f32.mrb[0].mxu0
        %v429 = vadd.f32 %v245, %v428
        %v430 = vpop.f32.mrb[0].mxu0
        %v431 = vpop.f32.mrb[0].mxu0
        %432 = vdwg.mxu0
        %433 = vmatprep.subr.bf16.mxu0 %v300
        %434 = vmatpush1.bf16.msra.mxu0 %v299
        %435 = vmatprep.subr.bf16.mxu0 %v343
        %436 = vmatpush1.bf16.msra.mxu0 %v340
        %437 = vmatprep.subr.bf16.mxu0 0
        %438 = vmatpush1.bf16.msra.mxu0 0
        %439 = vmatprep.subr.bf16.mxu0 0
        %440 = vmatpush1.bf16.msra.mxu0 0
        %441 = vmatprep.subr.bf16.mxu0 0
        %442 = vmatpush1.bf16.msra.mxu0 0
        %443 = vmatprep.subr.bf16.mxu0 0
        %444 = vmatpush1.bf16.msra.mxu0 0
        %445 = vmatprep.subr.bf16.mxu0 0
        %446 = vmatpush1.bf16.msra.mxu0 0
        %447 = vmatprep.subr.bf16.mxu0 0
        %448 = vmatpush1.bf16.msra.mxu0 0
        %449 = vmatprep.subr.bf16.mxu0 0
        %450 = vmatpush1.bf16.msra.mxu0 0
        %451 = vmatprep.subr.bf16.mxu0 0
        %452 = vmatpush1.bf16.msra.mxu0 0
        %453 = vmatprep.subr.bf16.mxu0 0
        %454 = vmatpush1.bf16.msra.mxu0 0
        %455 = vmatprep.subr.bf16.mxu0 0
        %456 = vmatpush1.bf16.msra.mxu0 0
        %457 = vmatprep.subr.bf16.mxu0 0
        %458 = vmatpush1.bf16.msra.mxu0 0
        %459 = vmatprep.subr.bf16.mxu0 0
        %460 = vmatpush1.bf16.msra.mxu0 0
        %461 = vmatprep.subr.bf16.mxu0 0
        %462 = vmatpush1.bf16.msra.mxu0 0
        %463 = vmatprep.subr.bf16.mxu0 0
        %464 = vmatpush1.bf16.msra.mxu0 0
        %465 = vmatprep.mubr.bf16.mxu0 0
        %466 = vmatmul.mubr.bf16.gmra.mrb[0].mxu0 %v321
        %v467 = vpop.f32.mrb[0].mxu0
        %v468 = vadd.f32 %v245, %v467
        %v469 = vpop.f32.mrb[0].mxu0
        %v470 = vadd.f32 %v245, %v469
        %v471 = vpop.f32.mrb[0].mxu0
        %v472 = vpop.f32.mrb[0].mxu0
        %473 = vdwg.mxu0
        %474 = vmatprep.subr.bf16.mxu0 %v302
        %475 = vmatpush1.bf16.msra.mxu0 %v301
        %476 = vmatprep.subr.bf16.mxu0 %v349
        %477 = vmatpush1.bf16.msra.mxu0 %v346
        %478 = vmatprep.subr.bf16.mxu0 0
        %479 = vmatpush1.bf16.msra.mxu0 0
        %480 = vmatprep.subr.bf16.mxu0 0
        %481 = vmatpush1.bf16.msra.mxu0 0
        %482 = vmatprep.subr.bf16.mxu0 0
        %483 = vmatpush1.bf16.msra.mxu0 0
        %484 = vmatprep.subr.bf16.mxu0 0
        %485 = vmatpush1.bf16.msra.mxu0 0
        %486 = vmatprep.subr.bf16.mxu0 0
        %487 = vmatpush1.bf16.msra.mxu0 0
        %488 = vmatprep.subr.bf16.mxu0 0
        %489 = vmatpush1.bf16.msra.mxu0 0
        %490 = vmatprep.subr.bf16.mxu0 0
        %491 = vmatpush1.bf16.msra.mxu0 0
        %492 = vmatprep.subr.bf16.mxu0 0
        %493 = vmatpush1.bf16.msra.mxu0 0
        %494 = vmatprep.subr.bf16.mxu0 0
        %495 = vmatpush1.bf16.msra.mxu0 0
        %496 = vmatprep.subr.bf16.mxu0 0
        %497 = vmatpush1.bf16.msra.mxu0 0
        %498 = vmatprep.subr.bf16.mxu0 0
        %499 = vmatpush1.bf16.msra.mxu0 0
        %500 = vmatprep.subr.bf16.mxu0 0
        %501 = vmatpush1.bf16.msra.mxu0 0
        %502 = vmatprep.subr.bf16.mxu0 0
        %503 = vmatpush1.bf16.msra.mxu0 0
        %504 = vmatprep.subr.bf16.mxu0 0
        %505 = vmatpush1.bf16.msra.mxu0 0
        %506 = vmatprep.mubr.bf16.mxu0 0
        %507 = vmatmul.mubr.bf16.gmra.mrb[0].mxu0 %v321
        %v508 = vpop.f32.mrb[0].mxu0
        %v509 = vadd.f32 %v245, %v508
        %v510 = vpop.f32.mrb[0].mxu0
        %v511 = vadd.f32 %v245, %v510
        %v512 = vpop.f32.mrb[0].mxu0
        %v513 = vpop.f32.mrb[0].mxu0
        %514 = vdwg.mxu0
        %vm515 = vcmp.ge.f32.partialorder %v386, 0.0
        %vm516 = vcmp.ge.f32.partialorder %v388, 0.0
        %vm517 = vcmp.ge.f32.partialorder %v427, 0.0
        %vm518 = vcmp.ge.f32.partialorder %v429, 0.0
        %vm519 = vcmp.ge.f32.partialorder %v468, 0.0
        %vm520 = vcmp.ge.f32.partialorder %v470, 0.0
        %vm521 = vcmp.ge.f32.partialorder %v509, 0.0
        %vm522 = vcmp.ge.f32.partialorder %v511, 0.0
        %v523 = vmul.f32 %v386, 0.2
        %v524 = vmul.f32 %v388, 0.2
        %v525 = vmul.f32 %v427, 0.2
        %v526 = vmul.f32 %v429, 0.2
        %v527 = vmul.f32 %v468, 0.2
        %v528 = vmul.f32 %v470, 0.2
        %v529 = vmul.f32 %v509, 0.2
        %v530 = vmul.f32 %v511, 0.2
        %v531 = vsel %vm515, %v386, %v523
        %v532 = vsel %vm516, %v388, %v524
        %v533 = vsel %vm517, %v427, %v525
        %v534 = vsel %vm518, %v429, %v526
        %v535 = vsel %vm519, %v468, %v527
        %v536 = vsel %vm520, %v470, %v528
        %v537 = vsel %vm521, %v509, %v529
        %v538 = vsel %vm522, %v511, %v530
        %539 = vst [vmem:[%s221] sm:$0xff] %v531
        %540 = vst [vmem:[%s221 + $0x8] sm:$0xff] %v532
        %541 = vst [vmem:[%s221 + $0x10] sm:$0xff] %v533
        %542 = vst [vmem:[%s221 + $0x18] sm:$0xff] %v534
        %543 = vst [vmem:[%s221 + $0x20] sm:$0xff] %v535
        %544 = vst [vmem:[%s221 + $0x28] sm:$0xff] %v536
        %545 = vst [vmem:[%s221 + $0x30] sm:$0xff] %v537
        %546 = vst [vmem:[%s221 + $0x38] sm:$0xff] %v538
        %s547 = smul.u32 8, %s14
        %p548 = scmp.lt.s32.totalorder %s547, 23
        %s549 = scalar_select %p548, %s547, 23
        %s550 = smul.addr %s549, 8
        %s551 = scalar_lea.vmem %s3, %s550
        // Predicated region
        $region56: #{spectral_discriminator_forward.8} parent=50 // pred_check
          %p552 = pneg %p100
        $region57: #{spectral_discriminator_forward.8} parent=50 // pred_check_branch
          %554 = sbr.rel (%p552) target = $region59
        $region58: #{spectral_discriminator_forward.8} parent=50 // pred_region
          %s555 = smul.u32 8, %s14
        $region59: #{spectral_discriminator_forward.8} parent=50 // pred_fallthru
          _
      $region51: #{spectral_discriminator_forward.8} parent=5 // pred_fallthru
        _
      %p556 = scmp.le.s32.totalorder 2, %s9
      // Predicated region
      $region60: #{spectral_discriminator_forward.8} parent=5 // pred_check
        %p557 = pneg %p556
      $region61: #{spectral_discriminator_forward.8} parent=5 // pred_check_branch
        %559 = sbr.rel (%p557) target = $region63
      $region62: #{spectral_discriminator_forward.8} parent=5 // pred_region
        %s560 = ssub.s32 %s9, 2
        // Predicated region
        $region64: #{spectral_discriminator_forward.8} parent=62 // pred_check
          %p561 = pneg %p106
        $region65: #{spectral_discriminator_forward.8} parent=62 // pred_check_branch
          %563 = sbr.rel (%p561) target = $region67
        $region66: #{spectral_discriminator_forward.8} parent=62 // pred_region
          %s564 = smul.u32 8, %s15
          %p565 = scmp.lt.s32.totalorder %s564, 23
          %s566 = scalar_select %p565, %s564, 23
          %s567 = smul.addr %s566, 8
          %s568 = scalar_lea.vmem %s3, %s567
        $region67: #{spectral_discriminator_forward.8} parent=62 // pred_fallthru
          _
      $region63: #{spectral_discriminator_forward.8} parent=5 // pred_fallthru
        _
    $region6: #{spectral_discriminator_forward.8} parent=1 // loop_footer
      %s13 = sadd.s32 1, %s9
    $region7: #{spectral_discriminator_forward.8} parent=1 // loop_footer_branch
      %8 = sbr.rel target = $region3
    $region8: #{spectral_discriminator_forward.8} parent=1 // loop_exit
      _

// kernel: spectral_discriminator_forward.9
$region0: #{spectral_discriminator_forward.9}
  #allocation0 [shape = 'u32[]', space=smem, size = 0x4, offset = 0x4, fixed_abs, tag = 'smem constant byte address 0x4 - core index']
  #allocation1 [shape = 'u32[144,128]{1,0:T(1,128)}', space=vmem, size = 0x12000, scoped, tag = 'internal scratch']
  %s0 = inlined_call_operand.vmem [shape: bf16[8,216], index: 0, kind: input, shape index: {}]
  %s1 = inlined_call_operand.vmem [shape: f32[8,1], index: 1, kind: input, shape index: {}]
  %s2 = inlined_call_operand.vmem [shape: bf16[216,2048], index: 2, kind: input, shape index: {}]
  %s3 = inlined_call_operand.vmem [shape: f32[8,2048], index: 3, kind: output, shape index: {}]
  %s4 = sld [smem:[#allocation0]]
  $region68: #{spectral_discriminator_forward.9} parent=0
    _
  %s6 = ssub.s32 1, %s4
  %s7 = scalar_select 0, %s6, %s4
  $region1: #{spectral_discriminator_forward.9} parent=0
    #allocation2 [shape = 'u8[884736]{0}', space=vmem, size = 0xd8000, scoped, tag = 'input window, operand 2']
    loop: start=0, step=1, limit=4
    $region2: #{spectral_discriminator_forward.9} parent=1 // loop_pre_header
      _
    $region3: #{spectral_discriminator_forward.9} parent=1 // loop_header
      %s9 = sphi 0, %s13
      %p10 = scmp.ge.s32.totalorder %s9, 4
      %s17 = sphi 0, %s17
      %s19 = sphi 0, %s17
      %s20 = sphi 0, %s19
      %s34 = sphi 0, %s20
      %s38 = sphi 0, %s38
      %s40 = sphi 0, %s38
      %s41 = sphi 0, %s40
      %s55 = sphi 0, %s41
      %s61 = sphi 0, %s63
      %s64 = sphi 0, %s61
      %s65 = sphi 0, %s64
      %s81 = sphi 0, %s65
      %s87 = sphi 0, %s89
      %s90 = sphi 0, %s87
      %s91 = sphi 0, %s90
      %s107 = sphi 0, %s91
    $region4: #{spectral_discriminator_forward.9} parent=1 // loop_header_branch
      %12 = sbr.rel (%p10) target = $region8
    $region5: #{spectral_discriminator_forward.9} parent=1 // loop_body
      %s14 = ssub.s32 %s9, 1
      %s15 = ssub.s32 %s9, 2
      %s16 = sadd.s32 %s9, 1
      %s18 = sadd.s32 %s17, 1
      %p21 = scmp.eq.s32.totalorder %s9, 1
      %p22 = scmp.ne.s32.totalorder %s17, %s19
      %p23 = scmp.eq.s32.totalorder %s9, 0
      %p24 = por %p22, %p23
      %p25 = scmp.ne.s32.totalorder %s17, %s19
      %p26 = scmp.eq.s32.totalorder %s14, 1
      %p27 = por %p25, %p26
      %p28 = scmp.ne.s32.totalorder %s19, %s20
      %p29 = scmp.eq.s32.totalorder %s14, 0
      %p30 = por %p28, %p29
      %p31 = scmp.ne.s32.totalorder %s19, %s20
      %p32 = scmp.eq.s32.totalorder %s15, 1
      %p33 = por %p31, %p32
      %p35 = scmp.ne.s32.totalorder %s20, %s34
      %p36 = scmp.eq.s32.totalorder %s15, 0
      %p37 = por %p35, %p36
      %s39 = sadd.s32 %s38, 1
      %p42 = scmp.eq.s32.totalorder %s9, 1
      %p43 = scmp.ne.s32.totalorder %s38, %s40
      %p44 = scmp.eq.s32.totalorder %s9, 0
      %p45 = por %p43, %p44
      %p46 = scmp.ne.s32.totalorder %s38, %s40
      %p47 = scmp.eq.s32.totalorder %s14, 1
      %p48 = por %p46, %p47
      %p49 = scmp.ne.s32.totalorder %s40, %s41
      %p50 = scmp.eq.s32.totalorder %s14, 0
      %p51 = por %p49, %p50
      %p52 = scmp.ne.s32.totalorder %s40, %s41
      %p53 = scmp.eq.s32.totalorder %s15, 1
      %p54 = por %p52, %p53
      %p56 = scmp.ne.s32.totalorder %s41, %s55
      %p57 = scmp.eq.s32.totalorder %s15, 0
      %p58 = por %p56, %p57
      %s59 = ssub.s32 %s9, %s16
      %p60 = scmp.eq.s32.totalorder %s59, 0
      %s62 = sadd.s32 %s61, 1
      %s63 = scalar_select %p60, %s61, %s62
      %p66 = pneg %p60
      %p67 = scmp.eq.s32.totalorder %s9, 1
      %p68 = por %p66, %p67
      %p69 = scmp.ne.s32.totalorder %s61, %s64
      %p70 = scmp.eq.s32.totalorder %s9, 0
      %p71 = por %p69, %p70
      %p72 = scmp.ne.s32.totalorder %s61, %s64
      %p73 = scmp.eq.s32.totalorder %s14, 1
      %p74 = por %p72, %p73
      %p75 = scmp.ne.s32.totalorder %s64, %s65
      %p76 = scmp.eq.s32.totalorder %s14, 0
      %p77 = por %p75, %p76
      %p78 = scmp.ne.s32.totalorder %s64, %s65
      %p79 = scmp.eq.s32.totalorder %s15, 1
      %p80 = por %p78, %p79
      %p82 = scmp.ne.s32.totalorder %s65, %s81
      %p83 = scmp.eq.s32.totalorder %s15, 0
      %p84 = por %p82, %p83
      %s85 = ssub.s32 %s9, %s16
      %p86 = scmp.eq.s32.totalorder %s85, 0
      %s88 = sadd.s32 %s87, 1
      %s89 = scalar_select %p86, %s87, %s88
      %p92 = pneg %p86
      %p93 = scmp.eq.s32.totalorder %s9, 1
      %p94 = por %p92, %p93
      %p95 = scmp.ne.s32.totalorder %s87, %s90
      %p96 = scmp.eq.s32.totalorder %s9, 0
      %p97 = por %p95, %p96
      %p98 = scmp.ne.s32.totalorder %s87, %s90
      %p99 = scmp.eq.s32.totalorder %s14, 1
      %p100 = por %p98, %p99
      %p101 = scmp.ne.s32.totalorder %s90, %s91
      %p102 = scmp.eq.s32.totalorder %s14, 0
      %p103 = por %p101, %p102
      %p104 = scmp.ne.s32.totalorder %s90, %s91
      %p105 = scmp.eq.s32.totalorder %s15, 1
      %p106 = por %p104, %p105
      %p108 = scmp.ne.s32.totalorder %s91, %s107
      %p109 = scmp.eq.s32.totalorder %s15, 0
      %p110 = por %p108, %p109
      %p111 = scmp.le.s32.totalorder 1, %s9
      %p112 = scmp.lt.s32.totalorder %s9, 3
      %p113 = pnand %p111, %p112
      %p114 = pneg %p113
      // Predicated region
      $region9: #{spectral_discriminator_forward.9} parent=5 // pred_check
        _
      $region10: #{spectral_discriminator_forward.9} parent=5 // pred_check_branch
        %116 = sbr.rel (%p113) target = $region12
      $region11: #{spectral_discriminator_forward.9} parent=5 // pred_region
        %s117 = ssub.s32 %s9, 1
        // Predicated region
        $region13: #{spectral_discriminator_forward.9} parent=11 // pred_check
          %p118 = pneg %p30
        $region14: #{spectral_discriminator_forward.9} parent=11 // pred_check_branch
          %120 = sbr.rel (%p118) target = $region16
        $region15: #{spectral_discriminator_forward.9} parent=11 // pred_region
          _
        $region16: #{spectral_discriminator_forward.9} parent=11 // pred_fallthru
          _
        // Predicated region
        $region17: #{spectral_discriminator_forward.9} parent=11 // pred_check
          %p121 = pneg %p51
        $region18: #{spectral_discriminator_forward.9} parent=11 // pred_check_branch
          %123 = sbr.rel (%p121) target = $region20
        $region19: #{spectral_discriminator_forward.9} parent=11 // pred_region
          _
        $region20: #{spectral_discriminator_forward.9} parent=11 // pred_fallthru
          _
      $region12: #{spectral_discriminator_forward.9} parent=5 // pred_fallthru
        _
      %p124 = scmp.lt.s32.totalorder %s9, 2
      // Predicated region
      $region21: #{spectral_discriminator_forward.9} parent=5 // pred_check
        %p125 = pneg %p124
      $region22: #{spectral_discriminator_forward.9} parent=5 // pred_check_branch
        %127 = sbr.rel (%p125) target = $region24
      $region23: #{spectral_discriminator_forward.9} parent=5 // pred_region
        // Predicated region
        $region25: #{spectral_discriminator_forward.9} parent=23 // pred_check
          %p128 = pneg %p71
        $region26: #{spectral_discriminator_forward.9} parent=23 // pred_check_branch
          %130 = sbr.rel (%p128) target = $region28
        $region27: #{spectral_discriminator_forward.9} parent=23 // pred_region
          %s131 = sand.u32 %s61, 1
          %s132 = sand.u32 %s61, 1
          %s133 = smul.addr %s132, 864
          %s134 = scalar_lea.vmem [#allocation2], %s133
          %s135 = smul.u32 8, %s9
          %s136 = smul.addr %s135, 4
          %s137 = scalar_lea.vmem %s2, %s136
          // Predicated region
          $region29: #{spectral_discriminator_forward.9} parent=27 // pred_check
            _
          $region30: #{spectral_discriminator_forward.9} parent=27 // pred_check_branch
            %139 = sbr.rel (0) target = $region32
          $region31: #{spectral_discriminator_forward.9} parent=27 // pred_region
            // Predicated region
            $region33: #{spectral_discriminator_forward.9} parent=31 // pred_check
              _
            $region34: #{spectral_discriminator_forward.9} parent=31 // pred_check_branch
              %141 = sbr.rel (0) target = $region36
            $region35: #{spectral_discriminator_forward.9} parent=31 // pred_region
              loop: start=0, step=1, limit=1
              $region37: #{spectral_discriminator_forward.9} parent=35 // loop_pre_header
                _
              $region38: #{spectral_discriminator_forward.9} parent=35 // loop_header
                %s143 = sphi 0, %s147
                %p144 = scmp.ge.s32.totalorder %s143, 1
                %s148 = sphi %s137, %s137
                %s149 = sphi %s134, %s134
              $region39: #{spectral_discriminator_forward.9} parent=35 // loop_header_branch
                %146 = sbr.rel (%p144) target = $region43
              $region40: #{spectral_discriminator_forward.9} parent=35 // loop_body
                %v150 = vld [vmem:[%s148] sm:$0xff]
                %151 = vst [vmem:[%s149] sm:$0xff] %v150
                %v152 = vld [vmem:[%s148 + $0x8] sm:$0xff]
                %153 = vst [vmem:[%s149 + $0x8] sm:$0xff] %v152
                %v154 = vld [vmem:[%s148 + $0x10] sm:$0xff]
                %155 = vst [vmem:[%s149 + $0x10] sm:$0xff] %v154
                %v156 = vld [vmem:[%s148 + $0x18] sm:$0xff]
                %157 = vst [vmem:[%s149 + $0x18] sm:$0xff] %v156
                %v158 = vld [vmem:[%s148 + $0x40] sm:$0xff]
                %159 = vst [vmem:[%s149 + $0x20] sm:$0xff] %v158
                %v160 = vld [vmem:[%s148 + $0x48] sm:$0xff]
                %161 = vst [vmem:[%s149 + $0x28] sm:$0xff] %v160
                %v162 = vld [vmem:[%s148 + $0x50] sm:$0xff]
                %163 = vst [vmem:[%s149 + $0x30] sm:$0xff] %v162
                %v164 = vld [vmem:[%s148 + $0x58] sm:$0xff]
                %165 = vst [vmem:[%s149 + $0x38] sm:$0xff] %v164
                %v166 = vld [vmem:[%s148 + $0x80] sm:$0xff]
                %167 = vst [vmem:[%s149 + $0x40] sm:$0xff] %v166
                %v168 = vld [vmem:[%s148 + $0x88] sm:$0xff]
                %169 = vst [vmem:[%s149 + $0x48] sm:$0xff] %v168
                %v170 = vld [vmem:[%s148 + $0x90] sm:$0xff]
                %171 = vst [vmem:[%s149 + $0x50] sm:$0xff] %v170
                %v172 = vld [vmem:[%s148 + $0x98] sm:$0xff]
                %173 = vst [vmem:[%s149 + $0x58] sm:$0xff] %v172
                %v174 = vld [vmem:[%s148 + $0xc0] sm:$0xff]
                %175 = vst [vmem:[%s149 + $0x60] sm:$0xff] %v174
                %v176 = vld [vmem:[%s148 + $0xc8] sm:$0xff]
                %177 = vst [vmem:[%s149 + $0x68] sm:$0xff] %v176
                %v178 = vld [vmem:[%s148 + $0xd0] sm:$0xff]
                %179 = vst [vmem:[%s149 + $0x70] sm:$0xff] %v178
                %v180 = vld [vmem:[%s148 + $0xd8] sm:$0xff]
                %181 = vst [vmem:[%s149 + $0x78] sm:$0xff] %v180
                %v182 = vld [vmem:[%s148 + $0x100] sm:$0xff]
                %183 = vst [vmem:[%s149 + $0x80] sm:$0xff] %v182
                %v184 = vld [vmem:[%s148 + $0x108] sm:$0xff]
                %185 = vst [vmem:[%s149 + $0x88] sm:$0xff] %v184
                %v186 = vld [vmem:[%s148 + $0x110] sm:$0xff]
                %187 = vst [vmem:[%s149 + $0x90] sm:$0xff] %v186
                %v188 = vld [vmem:[%s148 + $0x118] sm:$0xff]
                %189 = vst [vmem:[%s149 + $0x98] sm:$0xff] %v188
                %v190 = vld [vmem:[%s148 + $0x140] sm:$0xff]
                %191 = vst [vmem:[%s149 + $0xa0] sm:$0xff] %v190
                %v192 = vld [vmem:[%s148 + $0x148] sm:$0xff]
                %193 = vst [vmem:[%s149 + $0xa8] sm:$0xff] %v192
                %v194 = vld [vmem:[%s148 + $0x150] sm:$0xff]
                %195 = vst [vmem:[%s149 + $0xb0] sm:$0xff] %v194
                %v196 = vld [vmem:[%s148 + $0x158] sm:$0xff]
                %197 = vst [vmem:[%s149 + $0xb8] sm:$0xff] %v196
                %v198 = vld [vmem:[%s148 + $0x180] sm:$0xff]
                %199 = vst [vmem:[%s149 + $0xc0] sm:$0xff] %v198
                %v200 = vld [vmem:[%s148 + $0x188] sm:$0xff]
                %201 = vst [vmem:[%s149 + $0xc8] sm:$0xff] %v200
                %v202 = vld [vmem:[%s148 + $0x190] sm:$0xff]
                %203 = vst [vmem:[%s149 + $0xd0] sm:$0xff] %v202
                %v204 = vld [vmem:[%s148 + $0x198] sm:$0xff]
                %205 = vst [vmem:[%s149 + $0xd8] sm:$0xff] %v204
                %v206 = vld [vmem:[%s148 + $0x1c0] sm:$0xff]
                %207 = vst [vmem:[%s149 + $0xe0] sm:$0xff] %v206
                %v208 = vld [vmem:[%s148 + $0x1c8] sm:$0xff]
                %209 = vst [vmem:[%s149 + $0xe8] sm:$0xff] %v208
                %v210 = vld [vmem:[%s148 + $0x1d0] sm:$0xff]
                %211 = vst [vmem:[%s149 + $0xf0] sm:$0xff] %v210
                %v212 = vld [vmem:[%s148 + $0x1d8] sm:$0xff]
                %213 = vst [vmem:[%s149 + $0xf8] sm:$0xff] %v212
                %v214 = vld [vmem:[%s148 + $0x200] sm:$0xff]
                %215 = vst [vmem:[%s149 + $0x100] sm:$0xff] %v214
                %v216 = vld [vmem:[%s148 + $0x208] sm:$0xff]
                %217 = vst [vmem:[%s149 + $0x108] sm:$0xff] %v216
                %v218 = vld [vmem:[%s148 + $0x210] sm:$0xff]
                %219 = vst [vmem:[%s149 + $0x110] sm:$0xff] %v218
                %v220 = vld [vmem:[%s148 + $0x218] sm:$0xff]
                %221 = vst [vmem:[%s149 + $0x118] sm:$0xff] %v220
                %v222 = vld [vmem:[%s148 + $0x240] sm:$0xff]
                %223 = vst [vmem:[%s149 + $0x120] sm:$0xff] %v222
                %v224 = vld [vmem:[%s148 + $0x248] sm:$0xff]
                %225 = vst [vmem:[%s149 + $0x128] sm:$0xff] %v224
                %v226 = vld [vmem:[%s148 + $0x250] sm:$0xff]
                %227 = vst [vmem:[%s149 + $0x130] sm:$0xff] %v226
                %v228 = vld [vmem:[%s148 + $0x258] sm:$0xff]
                %229 = vst [vmem:[%s149 + $0x138] sm:$0xff] %v228
                %v230 = vld [vmem:[%s148 + $0x280] sm:$0xff]
                %231 = vst [vmem:[%s149 + $0x140] sm:$0xff] %v230
                %v232 = vld [vmem:[%s148 + $0x288] sm:$0xff]
                %233 = vst [vmem:[%s149 + $0x148] sm:$0xff] %v232
                %v234 = vld [vmem:[%s148 + $0x290] sm:$0xff]
                %235 = vst [vmem:[%s149 + $0x150] sm:$0xff] %v234
                %v236 = vld [vmem:[%s148 + $0x298] sm:$0xff]
                %237 = vst [vmem:[%s149 + $0x158] sm:$0xff] %v236
                %v238 = vld [vmem:[%s148 + $0x2c0] sm:$0xff]
                %239 = vst [vmem:[%s149 + $0x160] sm:$0xff] %v238
                %v240 = vld [vmem:[%s148 + $0x2c8] sm:$0xff]
                %241 = vst [vmem:[%s149 + $0x168] sm:$0xff] %v240
                %v242 = vld [vmem:[%s148 + $0x2d0] sm:$0xff]
                %243 = vst [vmem:[%s149 + $0x170] sm:$0xff] %v242
                %v244 = vld [vmem:[%s148 + $0x2d8] sm:$0xff]
                %245 = vst [vmem:[%s149 + $0x178] sm:$0xff] %v244
                %v246 = vld [vmem:[%s148 + $0x300] sm:$0xff]
                %247 = vst [vmem:[%s149 + $0x180] sm:$0xff] %v246
                %v248 = vld [vmem:[%s148 + $0x308] sm:$0xff]
                %249 = vst [vmem:[%s149 + $0x188] sm:$0xff] %v248
                %v250 = vld [vmem:[%s148 + $0x310] sm:$0xff]
                %251 = vst [vmem:[%s149 + $0x190] sm:$0xff] %v250
                %v252 = vld [vmem:[%s148 + $0x318] sm:$0xff]
                %253 = vst [vmem:[%s149 + $0x198] sm:$0xff] %v252
                %v254 = vld [vmem:[%s148 + $0x340] sm:$0xff]
                %255 = vst [vmem:[%s149 + $0x1a0] sm:$0xff] %v254
                %v256 = vld [vmem:[%s148 + $0x348] sm:$0xff]
                %257 = vst [vmem:[%s149 + $0x1a8] sm:$0xff] %v256
                %v258 = vld [vmem:[%s148 + $0x350] sm:$0xff]
                %259 = vst [vmem:[%s149 + $0x1b0] sm:$0xff] %v258
                %v260 = vld [vmem:[%s148 + $0x358] sm:$0xff]
                %261 = vst [vmem:[%s149 + $0x1b8] sm:$0xff] %v260
                %v262 = vld [vmem:[%s148 + $0x380] sm:$0xff]
                %263 = vst [vmem:[%s149 + $0x1c0] sm:$0xff] %v262
                %v264 = vld [vmem:[%s148 + $0x388] sm:$0xff]
                %265 = vst [vmem:[%s149 + $0x1c8] sm:$0xff] %v264
                %v266 = vld [vmem:[%s148 + $0x390] sm:$0xff]
                %267 = vst [vmem:[%s149 + $0x1d0] sm:$0xff] %v266
                %v268 = vld [vmem:[%s148 + $0x398] sm:$0xff]
                %269 = vst [vmem:[%s149 + $0x1d8] sm:$0xff] %v268
                %v270 = vld [vmem:[%s148 + $0x3c0] sm:$0xff]
                %271 = vst [vmem:[%s149 + $0x1e0] sm:$0xff] %v270
                %v272 = vld [vmem:[%s148 + $0x3c8] sm:$0xff]
                %273 = vst [vmem:[%s149 + $0x1e8] sm:$0xff] %v272
                %v274 = vld [vmem:[%s148 + $0x3d0] sm:$0xff]
                %275 = vst [vmem:[%s149 + $0x1f0] sm:$0xff] %v274
                %v276 = vld [vmem:[%s148 + $0x3d8] sm:$0xff]
                %277 = vst [vmem:[%s149 + $0x1f8] sm:$0xff] %v276
                %v278 = vld [vmem:[%s148 + $0x400] sm:$0xff]
                %279 = vst [vmem:[%s149 + $0x200] sm:$0xff] %v278
                %v280 = vld [vmem:[%s148 + $0x408] sm:$0xff]
                %281 = vst [vmem:[%s149 + $0x208] sm:$0xff] %v280
                %v282 = vld [vmem:[%s148 + $0x410] sm:$0xff]
                %283 = vst [vmem:[%s149 + $0x210] sm:$0xff] %v282
                %v284 = vld [vmem:[%s148 + $0x418] sm:$0xff]
                %285 = vst [vmem:[%s149 + $0x218] sm:$0xff] %v284
                %v286 = vld [vmem:[%s148 + $0x440] sm:$0xff]
                %287 = vst [vmem:[%s149 + $0x220] sm:$0xff] %v286
                %v288 = vld [vmem:[%s148 + $0x448] sm:$0xff]
                %289 = vst [vmem:[%s149 + $0x228] sm:$0xff] %v288
                %v290 = vld [vmem:[%s148 + $0x450] sm:$0xff]
                %291 = vst [vmem:[%s149 + $0x230] sm:$0xff] %v290
                %v292 = vld [vmem:[%s148 + $0x458] sm:$0xff]
                %293 = vst [vmem:[%s149 + $0x238] sm:$0xff] %v292
                %v294 = vld [vmem:[%s148 + $0x480] sm:$0xff]
                %295 = vst [vmem:[%s149 + $0x240] sm:$0xff] %v294
                %v296 = vld [vmem:[%s148 + $0x488] sm:$0xff]
                %297 = vst [vmem:[%s149 + $0x248] sm:$0xff] %v296
                %v298 = vld [vmem:[%s148 + $0x490] sm:$0xff]
                %299 = vst [vmem:[%s149 + $0x250] sm:$0xff] %v298
                %v300 = vld [vmem:[%s148 + $0x498] sm:$0xff]
                %301 = vst [vmem:[%s149 + $0x258] sm:$0xff] %v300
                %v302 = vld [vmem:[%s148 + $0x4c0] sm:$0xff]
                %303 = vst [vmem:[%s149 + $0x260] sm:$0xff] %v302
                %v304 = vld [vmem:[%s148 + $0x4c8] sm:$0xff]
                %305 = vst [vmem:[%s149 + $0x268] sm:$0xff] %v304
                %v306 = vld [vmem:[%s148 + $0x4d0] sm:$0xff]
                %307 = vst [vmem:[%s149 + $0x270] sm:$0xff] %v306
                %v308 = vld [vmem:[%s148 + $0x4d8] sm:$0xff]
                %309 = vst [vmem:[%s149 + $0x278] sm:$0xff] %v308
                %v310 = vld [vmem:[%s148 + $0x500] sm:$0xff]
                %311 = vst [vmem:[%s149 + $0x280] sm:$0xff] %v310
                %v312 = vld [vmem:[%s148 + $0x508] sm:$0xff]
                %313 = vst [vmem:[%s149 + $0x288] sm:$0xff] %v312
                %v314 = vld [vmem:[%s148 + $0x510] sm:$0xff]
                %315 = vst [vmem:[%s149 + $0x290] sm:$0xff] %v314
                %v316 = vld [vmem:[%s148 + $0x518] sm:$0xff]
                %317 = vst [vmem:[%s149 + $0x298] sm:$0xff] %v316
                %v318 = vld [vmem:[%s148 + $0x540] sm:$0xff]
                %319 = vst [vmem:[%s149 + $0x2a0] sm:$0xff] %v318
                %v320 = vld [vmem:[%s148 + $0x548] sm:$0xff]
                %321 = vst [vmem:[%s149 + $0x2a8] sm:$0xff] %v320
                %v322 = vld [vmem:[%s148 + $0x550] sm:$0xff]
                %323 = vst [vmem:[%s149 + $0x2b0] sm:$0xff] %v322
                %v324 = vld [vmem:[%s148 + $0x558] sm:$0xff]
                %325 = vst [vmem:[%s149 + $0x2b8] sm:$0xff] %v324
                %v326 = vld [vmem:[%s148 + $0x580] sm:$0xff]
                %327 = vst [vmem:[%s149 + $0x2c0] sm:$0xff] %v326
                %v328 = vld [vmem:[%s148 + $0x588] sm:$0xff]
                %329 = vst [vmem:[%s149 + $0x2c8] sm:$0xff] %v328
                %v330 = vld [vmem:[%s148 + $0x590] sm:$0xff]
                %331 = vst [vmem:[%s149 + $0x2d0] sm:$0xff] %v330
                %v332 = vld [vmem:[%s148 + $0x598] sm:$0xff]
                %333 = vst [vmem:[%s149 + $0x2d8] sm:$0xff] %v332
                %v334 = vld [vmem:[%s148 + $0x5c0] sm:$0xff]
                %335 = vst [vmem:[%s149 + $0x2e0] sm:$0xff] %v334
                %v336 = vld [vmem:[%s148 + $0x5c8] sm:$0xff]
                %337 = vst [vmem:[%s149 + $0x2e8] sm:$0xff] %v336
                %v338 = vld [vmem:[%s148 + $0x5d0] sm:$0xff]
                %339 = vst [vmem:[%s149 + $0x2f0] sm:$0xff] %v338
                %v340 = vld [vmem:[%s148 + $0x5d8] sm:$0xff]
                %341 = vst [vmem:[%s149 + $0x2f8] sm:$0xff] %v340
                %v342 = vld [vmem:[%s148 + $0x600] sm:$0xff]
                %343 = vst [vmem:[%s149 + $0x300] sm:$0xff] %v342
                %v344 = vld [vmem:[%s148 + $0x608] sm:$0xff]
                %345 = vst [vmem:[%s149 + $0x308] sm:$0xff] %v344
                %v346 = vld [vmem:[%s148 + $0x610] sm:$0xff]
                %347 = vst [vmem:[%s149 + $0x310] sm:$0xff] %v346
                %v348 = vld [vmem:[%s148 + $0x618] sm:$0xff]
                %349 = vst [vmem:[%s149 + $0x318] sm:$0xff] %v348
                %v350 = vld [vmem:[%s148 + $0x640] sm:$0xff]
                %351 = vst [vmem:[%s149 + $0x320] sm:$0xff] %v350
                %v352 = vld [vmem:[%s148 + $0x648] sm:$0xff]
                %353 = vst [vmem:[%s149 + $0x328] sm:$0xff] %v352
                %v354 = vld [vmem:[%s148 + $0x650] sm:$0xff]
                %355 = vst [vmem:[%s149 + $0x330] sm:$0xff] %v354
                %v356 = vld [vmem:[%s148 + $0x658] sm:$0xff]
                %357 = vst [vmem:[%s149 + $0x338] sm:$0xff] %v356
                %v358 = vld [vmem:[%s148 + $0x680] sm:$0xff]
                %359 = vst [vmem:[%s149 + $0x340] sm:$0xff] %v358
                %v360 = vld [vmem:[%s148 + $0x688] sm:$0xff]
                %361 = vst [vmem:[%s149 + $0x348] sm:$0xff] %v360
                %v362 = vld [vmem:[%s148 + $0x690] sm:$0xff]
                %363 = vst [vmem:[%s149 + $0x350] sm:$0xff] %v362
                %v364 = vld [vmem:[%s148 + $0x698] sm:$0xff]
                %365 = vst [vmem:[%s149 + $0x358] sm:$0xff] %v364
              $region41: #{spectral_discriminator_forward.9} parent=35 // loop_footer
                %s147 = sadd.s32 1, %s143
              $region42: #{spectral_discriminator_forward.9} parent=35 // loop_footer_branch
                %142 = sbr.rel target = $region38
              $region43: #{spectral_discriminator_forward.9} parent=35 // loop_exit
                _
            $region36: #{spectral_discriminator_forward.9} parent=31 // pred_fallthru
              _
            // Predicated region
            $region44: #{spectral_discriminator_forward.9} parent=31 // pred_check
              _
            $region45: #{spectral_discriminator_forward.9} parent=31 // pred_check_branch
              %367 = sbr.rel target = $region47
            $region46: #{spectral_discriminator_forward.9} parent=31 // pred_region
              _
            $region47: #{spectral_discriminator_forward.9} parent=31 // pred_fallthru
              _
          $region32: #{spectral_discriminator_forward.9} parent=27 // pred_fallthru
            _
          %368 = vnop
        $region28: #{spectral_discriminator_forward.9} parent=23 // pred_fallthru
          _
      $region24: #{spectral_discriminator_forward.9} parent=5 // pred_fallthru
        _
      %p369 = scmp.le.s32.totalorder 1, %s9
      %p370 = scmp.lt.s32.totalorder %s9, 3
      %p371 = pnand %p369, %p370
      %p372 = pneg %p371
      // Predicated region
      $region48: #{spectral_discriminator_forward.9} parent=5 // pred_check
        _
      $region49: #{spectral_discriminator_forward.9} parent=5 // pred_check_branch
        %374 = sbr.rel (%p371) target = $region51
      $region50: #{spectral_discriminator_forward.9} parent=5 // pred_region
        %s375 = ssub.s32 %s9, 1
        %s376 = sand.u32 %s64, 1
        %s377 = sand.u32 %s64, 1
        %s378 = smul.addr %s377, 864
        %s379 = scalar_lea.vmem [#allocation2], %s378
        // Predicated region
        $region52: #{spectral_discriminator_forward.9} parent=50 // pred_check
          %p380 = pneg %p77
        $region53: #{spectral_discriminator_forward.9} parent=50 // pred_check_branch
          %382 = sbr.rel (%p380) target = $region55
        $region54: #{spectral_discriminator_forward.9} parent=50 // pred_region
          _
        $region55: #{spectral_discriminator_forward.9} parent=50 // pred_fallthru
          _
        %p383 = pneg %p30
        %p384 = pneg %p27
        %p385 = pneg %p51
        %p386 = pneg %p48
        %s387 = sand.u32 %s64, 1
        %s388 = sand.u32 %s64, 1
        %s389 = smul.addr %s388, 864
        %s390 = scalar_lea.vmem [#allocation2], %s389
        %p391 = pneg %p77
        %p392 = pneg %p74
        %p393 = pneg %p103
        %p394 = pneg %p100
        %s395 = smul.u32 8, %s14
        %p396 = scmp.lt.s32.totalorder %s395, 15
        %s397 = scalar_select %p396, %s395, 15
        %s398 = smul.addr %s397, 8
        %s399 = scalar_lea.vmem %s3, %s398
        %s400 = smul.u32 8, %s14
        %s401 = smul.u32 8, %s14
        %p402 = scmp.lt.s32.totalorder %s401, 15
        %s403 = scalar_select %p402, %s401, 15
        %s404 = smul.addr %s403, 8
        %s405 = scalar_lea.vmem %s3, %s404
        %s406 = smul.u32 8, %s14
        %v408 = vld [vmem:[%s0] sm:$0xff]
        %v409 = vld [vmem:[%s379] sm:$0xff]
        %v410 = vld [vmem:[%s379 + $0x8] sm:$0xff]
        %v411 = vld [vmem:[%s379 + $0x10] sm:$0xff]
        %v412 = vld [vmem:[%s379 + $0x18] sm:$0xff]
        %v413 = vld [vmem:[%s379 + $0x20] sm:$0xff]
        %v414 = vld [vmem:[%s379 + $0x28] sm:$0xff]
        %v415 = vld [vmem:[%s379 + $0x30] sm:$0xff]
        %v416 = vld [vmem:[%s379 + $0x38] sm:$0xff]
        %v417 = vld [vmem:[%s379 + $0x40] sm:$0xff]
        %v418 = vld [vmem:[%s379 + $0x48] sm:$0xff]
        %v419 = vld [vmem:[%s379 + $0x50] sm:$0xff]
        %v420 = vld [vmem:[%s379 + $0x58] sm:$0xff]
        %v421 = vld [vmem:[%s379 + $0x60] sm:$0xff]
        %v422 = vld [vmem:[%s379 + $0x68] sm:$0xff]
        %v423 = vld [vmem:[%s379 + $0x70] sm:$0xff]
        %v424 = vld [vmem:[%s379 + $0x78] sm:$0xff]
        %v425 = vld [vmem:[%s379 + $0x80] sm:$0xff]
        %v426 = vld [vmem:[%s379 + $0x88] sm:$0xff]
        %v427 = vld [vmem:[%s379 + $0x90] sm:$0xff]
        %v428 = vld [vmem:[%s379 + $0x98] sm:$0xff]
        %v429 = vld [vmem:[%s379 + $0xa0] sm:$0xff]
        %v430 = vld [vmem:[%s379 + $0xa8] sm:$0xff]
        %v431 = vld [vmem:[%s379 + $0xb0] sm:$0xff]
        %v432 = vld [vmem:[%s379 + $0xb8] sm:$0xff]
        %v433 = vld [vmem:[%s379 + $0xc0] sm:$0xff]
        %v434 = vld [vmem:[%s379 + $0xc8] sm:$0xff]
        %v435 = vld [vmem:[%s379 + $0xd0] sm:$0xff]
        %v436 = vld [vmem:[%s379 + $0xd8] sm:$0xff]
        %v437 = vld [vmem:[%s379 + $0xe0] sm:$0xff]
        %v438 = vld [vmem:[%s379 + $0xe8] sm:$0xff]
        %v439 = vld [vmem:[%s379 + $0xf0] sm:$0xff]
        %v440 = vld [vmem:[%s379 + $0xf8] sm:$0xff]
        %v441 = vld [vmem:[%s379 + $0x100] sm:$0xff]
        %v442 = vld [vmem:[%s379 + $0x108] sm:$0xff]
        %v443 = vld [vmem:[%s379 + $0x110] sm:$0xff]
        %v444 = vld [vmem:[%s379 + $0x118] sm:$0xff]
        %v445 = vld [vmem:[%s379 + $0x120] sm:$0xff]
        %v446 = vld [vmem:[%s379 + $0x128] sm:$0xff]
        %v447 = vld [vmem:[%s379 + $0x130] sm:$0xff]
        %v448 = vld [vmem:[%s379 + $0x138] sm:$0xff]
        %v449 = vld [vmem:[%s379 + $0x140] sm:$0xff]
        %v450 = vld [vmem:[%s379 + $0x148] sm:$0xff]
        %v451 = vld [vmem:[%s379 + $0x150] sm:$0xff]
        %v452 = vld [vmem:[%s379 + $0x158] sm:$0xff]
        %v453 = vld [vmem:[%s379 + $0x160] sm:$0xff]
        %v454 = vld [vmem:[%s379 + $0x168] sm:$0xff]
        %v455 = vld [vmem:[%s379 + $0x170] sm:$0xff]
        %v456 = vld [vmem:[%s379 + $0x178] sm:$0xff]
        %v457 = vld [vmem:[%s379 + $0x180] sm:$0xff]
        %v458 = vld [vmem:[%s379 + $0x188] sm:$0xff]
        %v459 = vld [vmem:[%s379 + $0x190] sm:$0xff]
        %v460 = vld [vmem:[%s379 + $0x198] sm:$0xff]
        %v461 = vld [vmem:[%s379 + $0x1a0] sm:$0xff]
        %v462 = vld [vmem:[%s379 + $0x1a8] sm:$0xff]
        %v463 = vld [vmem:[%s379 + $0x1b0] sm:$0xff]
        %v464 = vld [vmem:[%s379 + $0x1b8] sm:$0xff]
        %v465 = vld [vmem:[%s379 + $0x1c0] sm:$0xff]
        %v466 = vld [vmem:[%s379 + $0x1c8] sm:$0xff]
        %v467 = vld [vmem:[%s379 + $0x1d0] sm:$0xff]
        %v468 = vld [vmem:[%s379 + $0x1d8] sm:$0xff]
        %v469 = vld [vmem:[%s379 + $0x1e0] sm:$0xff]
        %v470 = vld [vmem:[%s379 + $0x1e8] sm:$0xff]
        %v471 = vld [vmem:[%s379 + $0x1f0] sm:$0xff]
        %v472 = vld [vmem:[%s379 + $0x1f8] sm:$0xff]
        %v473 = vld [vmem:[%s379 + $0x200] sm:$0xff]
        %v474 = vld [vmem:[%s379 + $0x208] sm:$0xff]
        %v475 = vld [vmem:[%s379 + $0x210] sm:$0xff]
        %v476 = vld [vmem:[%s379 + $0x218] sm:$0xff]
        %v477 = vld [vmem:[%s379 + $0x220] sm:$0xff]
        %v478 = vld [vmem:[%s379 + $0x228] sm:$0xff]
        %v479 = vld [vmem:[%s379 + $0x230] sm:$0xff]
        %v480 = vld [vmem:[%s379 + $0x238] sm:$0xff]
        %v481 = vld [vmem:[%s379 + $0x240] sm:$0xff]
        %v482 = vld [vmem:[%s379 + $0x248] sm:$0xff]
        %v483 = vld [vmem:[%s379 + $0x250] sm:$0xff]
        %v484 = vld [vmem:[%s379 + $0x258] sm:$0xff]
        %v485 = vld [vmem:[%s379 + $0x260] sm:$0xff]
        %v486 = vld [vmem:[%s379 + $0x268] sm:$0xff]
        %v487 = vld [vmem:[%s379 + $0x270] sm:$0xff]
        %v488 = vld [vmem:[%s379 + $0x278] sm:$0xff]
        %v489 = vld [vmem:[%s379 + $0x280] sm:$0xff]
        %v490 = vld [vmem:[%s379 + $0x288] sm:$0xff]
        %v491 = vld [vmem:[%s379 + $0x290] sm:$0xff]
        %v492 = vld [vmem:[%s379 + $0x298] sm:$0xff]
        %v493 = vld [vmem:[%s379 + $0x2a0] sm:$0xff]
        %v494 = vld [vmem:[%s379 + $0x2a8] sm:$0xff]
        %v495 = vld [vmem:[%s379 + $0x2b0] sm:$0xff]
        %v496 = vld [vmem:[%s379 + $0x2b8] sm:$0xff]
        %v497 = vld [vmem:[%s379 + $0x2c0] sm:$0xff]
        %v498 = vld [vmem:[%s379 + $0x2c8] sm:$0xff]
        %v499 = vld [vmem:[%s379 + $0x2d0] sm:$0xff]
        %v500 = vld [vmem:[%s379 + $0x2d8] sm:$0xff]
        %v501 = vld [vmem:[%s379 + $0x2e0] sm:$0xff]
        %v502 = vld [vmem:[%s379 + $0x2e8] sm:$0xff]
        %v503 = vld [vmem:[%s379 + $0x2f0] sm:$0xff]
        %v504 = vld [vmem:[%s379 + $0x2f8] sm:$0xff]
        %v505 = vld [vmem:[%s379 + $0x300] sm:$0xff]
        %v506 = vld [vmem:[%s379 + $0x308] sm:$0xff]
        %v507 = vld [vmem:[%s379 + $0x310] sm:$0xff]
        %v508 = vld [vmem:[%s379 + $0x318] sm:$0xff]
        %v509 = vld [vmem:[%s379 + $0x320] sm:$0xff]
        %v510 = vld [vmem:[%s379 + $0x328] sm:$0xff]
        %v511 = vld [vmem:[%s379 + $0x330] sm:$0xff]
        %v512 = vld [vmem:[%s379 + $0x338] sm:$0xff]
        %v513 = vld [vmem:[%s379 + $0x340] sm:$0xff]
        %v514 = vld [vmem:[%s379 + $0x348] sm:$0xff]
        %v515 = vld [vmem:[%s379 + $0x350] sm:$0xff]
        %v516 = vld [vmem:[%s379 + $0x358] sm:$0xff]
        %v517 = vld [vmem:[%s1] sm:$0xff]
        %519 = vset.pattern.permute.xlu0 0
        %520 = vperm.xlu0 %519, %v517
        %v521 = vpop.permute.xlu0 %520
        %v524 = vunpack.c.l.b16 %v408
        %v525 = vunpack.c.h.b16 %v408
        %v526 = vpack.c.b16 %v524, %v524
        %v527 = vpack.c.b16 %v525, %v525
        %v637 = vunpack.c.l.b16 %v409
        %v638 = vunpack.c.h.b16 %v409
        %v639 = vunpack.c.l.b16 %v410
        %v640 = vunpack.c.h.b16 %v410
        %v641 = vunpack.c.l.b16 %v411
        %v642 = vunpack.c.h.b16 %v411
        %v643 = vunpack.c.l.b16 %v412
        %v644 = vunpack.c.h.b16 %v412
        %v645 = vunpack.c.l.b16 %v413
        %v646 = vunpack.c.h.b16 %v413
        %v647 = vunpack.c.l.b16 %v414
        %v648 = vunpack.c.h.b16 %v414
        %v649 = vunpack.c.l.b16 %v415
        %v650 = vunpack.c.h.b16 %v415
        %v651 = vunpack.c.l.b16 %v416
        %v652 = vunpack.c.h.b16 %v416
        %v653 = vunpack.c.l.b16 %v417
        %v654 = vunpack.c.h.b16 %v417
        %v655 = vunpack.c.l.b16 %v418
        %v656 = vunpack.c.h.b16 %v418
        %v657 = vunpack.c.l.b16 %v419
        %v658 = vunpack.c.h.b16 %v419
        %v659 = vunpack.c.l.b16 %v420
        %v660 = vunpack.c.h.b16 %v420
        %v661 = vunpack.c.l.b16 %v421
        %v662 = vunpack.c.h.b16 %v421
        %v663 = vunpack.c.l.b16 %v422
        %v664 = vunpack.c.h.b16 %v422
        %v665 = vunpack.c.l.b16 %v423
        %v666 = vunpack.c.h.b16 %v423
        %v667 = vunpack.c.l.b16 %v424
        %v668 = vunpack.c.h.b16 %v424
        %v669 = vunpack.c.l.b16 %v425
        %v670 = vunpack.c.h.b16 %v425
        %v671 = vunpack.c.l.b16 %v426
        %v672 = vunpack.c.h.b16 %v426
        %v673 = vunpack.c.l.b16 %v427
        %v674 = vunpack.c.h.b16 %v427
        %v675 = vunpack.c.l.b16 %v428
        %v676 = vunpack.c.h.b16 %v428
        %v677 = vunpack.c.l.b16 %v429
        %v678 = vunpack.c.h.b16 %v429
        %v679 = vunpack.c.l.b16 %v430
        %v680 = vunpack.c.h.b16 %v430
        %v681 = vunpack.c.l.b16 %v431
        %v682 = vunpack.c.h.b16 %v431
        %v683 = vunpack.c.l.b16 %v432
        %v684 = vunpack.c.h.b16 %v432
        %v685 = vunpack.c.l.b16 %v433
        %v686 = vunpack.c.h.b16 %v433
        %v687 = vunpack.c.l.b16 %v434
        %v688 = vunpack.c.h.b16 %v434
        %v689 = vunpack.c.l.b16 %v435
        %v690 = vunpack.c.h.b16 %v435
        %v691 = vunpack.c.l.b16 %v436
        %v692 = vunpack.c.h.b16 %v436
        %v693 = vunpack.c.l.b16 %v437
        %v694 = vunpack.c.h.b16 %v437
        %v695 = vunpack.c.l.b16 %v438
        %v696 = vunpack.c.h.b16 %v438
        %v697 = vunpack.c.l.b16 %v439
        %v698 = vunpack.c.h.b16 %v439
        %v699 = vunpack.c.l.b16 %v440
        %v700 = vunpack.c.h.b16 %v440
        %v701 = vunpack.c.l.b16 %v441
        %v702 = vunpack.c.h.b16 %v441
        %v703 = vunpack.c.l.b16 %v442
        %v704 = vunpack.c.h.b16 %v442
        %v705 = vunpack.c.l.b16 %v443
        %v706 = vunpack.c.h.b16 %v443
        %v707 = vunpack.c.l.b16 %v444
        %v708 = vunpack.c.h.b16 %v444
        %v709 = vunpack.c.l.b16 %v445
        %v710 = vunpack.c.h.b16 %v445
        %v711 = vunpack.c.l.b16 %v446
        %v712 = vunpack.c.h.b16 %v446
        %v713 = vunpack.c.l.b16 %v447
        %v714 = vunpack.c.h.b16 %v447
        %v715 = vunpack.c.l.b16 %v448
        %v716 = vunpack.c.h.b16 %v448
        %v717 = vunpack.c.l.b16 %v449
        %v718 = vunpack.c.h.b16 %v449
        %v719 = vunpack.c.l.b16 %v450
        %v720 = vunpack.c.h.b16 %v450
        %v721 = vunpack.c.l.b16 %v451
        %v722 = vunpack.c.h.b16 %v451
        %v723 = vunpack.c.l.b16 %v452
        %v724 = vunpack.c.h.b16 %v452
        %v725 = vunpack.c.l.b16 %v453
        %v726 = vunpack.c.h.b16 %v453
        %v727 = vunpack.c.l.b16 %v454
        %v728 = vunpack.c.h.b16 %v454
        %v729 = vunpack.c.l.b16 %v455
        %v730 = vunpack.c.h.b16 %v455
        %v731 = vunpack.c.l.b16 %v456
        %v732 = vunpack.c.h.b16 %v456
        %v733 = vunpack.c.l.b16 %v457
        %v734 = vunpack.c.h.b16 %v457
        %v735 = vunpack.c.l.b16 %v458
        %v736 = vunpack.c.h.b16 %v458
        %v737 = vunpack.c.l.b16 %v459
        %v738 = vunpack.c.h.b16 %v459
        %v739 = vunpack.c.l.b16 %v460
        %v740 = vunpack.c.h.b16 %v460
        %v741 = vunpack.c.l.b16 %v461
        %v742 = vunpack.c.h.b16 %v461
        %v743 = vunpack.c.l.b16 %v462
        %v744 = vunpack.c.h.b16 %v462
        %v745 = vunpack.c.l.b16 %v463
        %v746 = vunpack.c.h.b16 %v463
        %v747 = vunpack.c.l.b16 %v464
        %v748 = vunpack.c.h.b16 %v464
        %v749 = vunpack.c.l.b16 %v465
        %v750 = vunpack.c.h.b16 %v465
        %v751 = vunpack.c.l.b16 %v466
        %v752 = vunpack.c.h.b16 %v466
        %v753 = vunpack.c.l.b16 %v467
        %v754 = vunpack.c.h.b16 %v467
        %v755 = vunpack.c.l.b16 %v468
        %v756 = vunpack.c.h.b16 %v468
        %v757 = vunpack.c.l.b16 %v469
        %v758 = vunpack.c.h.b16 %v469
        %v759 = vunpack.c.l.b16 %v470
        %v760 = vunpack.c.h.b16 %v470
        %v761 = vunpack.c.l.b16 %v471
        %v762 = vunpack.c.h.b16 %v471
        %v763 = vunpack.c.l.b16 %v472
        %v764 = vunpack.c.h.b16 %v472
        %v765 = vunpack.c.l.b16 %v473
        %v766 = vunpack.c.h.b16 %v473
        %v767 = vunpack.c.l.b16 %v474
        %v768 = vunpack.c.h.b16 %v474
        %v769 = vunpack.c.l.b16 %v475
        %v770 = vunpack.c.h.b16 %v475
        %v771 = vunpack.c.l.b16 %v476
        %v772 = vunpack.c.h.b16 %v476
        %v773 = vunpack.c.l.b16 %v477
        %v774 = vunpack.c.h.b16 %v477
        %v775 = vunpack.c.l.b16 %v478
        %v776 = vunpack.c.h.b16 %v478
        %v777 = vunpack.c.l.b16 %v479
        %v778 = vunpack.c.h.b16 %v479
        %v779 = vunpack.c.l.b16 %v480
        %v780 = vunpack.c.h.b16 %v480
        %v781 = vunpack.c.l.b16 %v481
        %v782 = vunpack.c.h.b16 %v481
        %v783 = vunpack.c.l.b16 %v482
        %v784 = vunpack.c.h.b16 %v482
        %v785 = vunpack.c.l.b16 %v483
        %v786 = vunpack.c.h.b16 %v483
        %v787 = vunpack.c.l.b16 %v484
        %v788 = vunpack.c.h.b16 %v484
        %v789 = vunpack.c.l.b16 %v485
        %v790 = vunpack.c.h.b16 %v485
        %v791 = vunpack.c.l.b16 %v486
        %v792 = vunpack.c.h.b16 %v486
        %v793 = vunpack.c.l.b16 %v487
        %v794 = vunpack.c.h.b16 %v487
        %v795 = vunpack.c.l.b16 %v488
        %v796 = vunpack.c.h.b16 %v488
        %v797 = vunpack.c.l.b16 %v489
        %v798 = vunpack.c.h.b16 %v489
        %v799 = vunpack.c.l.b16 %v490
        %v800 = vunpack.c.h.b16 %v490
        %v801 = vunpack.c.l.b16 %v491
        %v802 = vunpack.c.h.b16 %v491
        %v803 = vunpack.c.l.b16 %v492
        %v804 = vunpack.c.h.b16 %v492
        %v805 = vunpack.c.l.b16 %v493
        %v806 = vunpack.c.h.b16 %v493
        %v807 = vunpack.c.l.b16 %v494
        %v808 = vunpack.c.h.b16 %v494
        %v809 = vunpack.c.l.b16 %v495
        %v810 = vunpack.c.h.b16 %v495
        %v811 = vunpack.c.l.b16 %v496
        %v812 = vunpack.c.h.b16 %v496
        %v813 = vunpack.c.l.b16 %v497
        %v814 = vunpack.c.h.b16 %v497
        %v815 = vunpack.c.l.b16 %v498
        %v816 = vunpack.c.h.b16 %v498
        %v817 = vunpack.c.l.b16 %v499
        %v818 = vunpack.c.h.b16 %v499
        %v819 = vunpack.c.l.b16 %v500
        %v820 = vunpack.c.h.b16 %v500
        %v821 = vunpack.c.l.b16 %v501
        %v822 = vunpack.c.h.b16 %v501
        %v823 = vunpack.c.l.b16 %v502
        %v824 = vunpack.c.h.b16 %v502
        %v825 = vunpack.c.l.b16 %v503
        %v826 = vunpack.c.h.b16 %v503
        %v827 = vunpack.c.l.b16 %v504
        %v828 = vunpack.c.h.b16 %v504
        %v829 = vunpack.c.l.b16 %v505
        %v830 = vunpack.c.h.b16 %v505
        %v831 = vunpack.c.l.b16 %v506
        %v832 = vunpack.c.h.b16 %v506
        %v833 = vunpack.c.l.b16 %v507
        %v834 = vunpack.c.h.b16 %v507
        %v835 = vunpack.c.l.b16 %v508
        %v836 = vunpack.c.h.b16 %v508
        %v837 = vunpack.c.l.b16 %v509
        %v838 = vunpack.c.h.b16 %v509
        %v839 = vunpack.c.l.b16 %v510
        %v840 = vunpack.c.h.b16 %v510
        %v841 = vunpack.c.l.b16 %v511
        %v842 = vunpack.c.h.b16 %v511
        %v843 = vunpack.c.l.b16 %v512
        %v844 = vunpack.c.h.b16 %v512
        %v845 = vunpack.c.l.b16 %v513
        %v846 = vunpack.c.h.b16 %v513
        %v847 = vunpack.c.l.b16 %v514
        %v848 = vunpack.c.h.b16 %v514
        %v849 = vunpack.c.l.b16 %v515
        %v850 = vunpack.c.h.b16 %v515
        %v851 = vunpack.c.l.b16 %v516
        %v852 = vunpack.c.h.b16 %v516
        %v853 = vpack.c.b16 %v645, %v637
        %v854 = vpack.c.b16 %v646, %v638
        %v855 = vpack.c.b16 %v647, %v639
        %v856 = vpack.c.b16 %v648, %v640
        %v857 = vpack.c.b16 %v649, %v641
        %v858 = vpack.c.b16 %v650, %v642
        %v859 = vpack.c.b16 %v651, %v643
        %v860 = vpack.c.b16 %v652, %v644
        %v861 = vpack.c.b16 %v661, %v653
        %v862 = vpack.c.b16 %v662, %v654
        %v863 = vpack.c.b16 %v663, %v655
        %v864 = vpack.c.b16 %v664, %v656
        %v865 = vpack.c.b16 %v665, %v657
        %v866 = vpack.c.b16 %v666, %v658
        %v867 = vpack.c.b16 %v667, %v659
        %v868 = vpack.c.b16 %v668, %v660
        %v869 = vpack.c.b16 %v677, %v669
        %v870 = vpack.c.b16 %v678, %v670
        %v871 = vpack.c.b16 %v679, %v671
        %v872 = vpack.c.b16 %v680, %v672
        %v873 = vpack.c.b16 %v681, %v673
        %v874 = vpack.c.b16 %v682, %v674
        %v875 = vpack.c.b16 %v683, %v675
        %v876 = vpack.c.b16 %v684, %v676
        %v877 = vpack.c.b16 %v693, %v685
        %v878 = vpack.c.b16 %v694, %v686
        %v879 = vpack.c.b16 %v695, %v687
        %v880 = vpack.c.b16 %v696, %v688
        %v881 = vpack.c.b16 %v697, %v689
        %v882 = vpack.c.b16 %v698, %v690
        %v883 = vpack.c.b16 %v699, %v691
        %v884 = vpack.c.b16 %v700, %v692
        %v885 = vpack.c.b16 %v709, %v701
        %v886 = vpack.c.b16 %v710, %v702
        %v887 = vpack.c.b16 %v711, %v703
        %v888 = vpack.c.b16 %v712, %v704
        %v889 = vpack.c.b16 %v713, %v705
        %v890 = vpack.c.b16 %v714, %v706
        %v891 = vpack.c.b16 %v715, %v707
        %v892 = vpack.c.b16 %v716, %v708
        %v893 = vpack.c.b16 %v725, %v717
        %v894 = vpack.c.b16 %v726, %v718
        %v895 = vpack.c.b16 %v727, %v719
        %v896 = vpack.c.b16 %v728, %v720
        %v897 = vpack.c.b16 %v729, %v721
        %v898 = vpack.c.b16 %v730, %v722
        %v899 = vpack.c.b16 %v731, %v723
        %v900 = vpack.c.b16 %v732, %v724
        %v901 = vpack.c.b16 %v741, %v733
        %v902 = vpack.c.b16 %v742, %v734
        %v903 = vpack.c.b16 %v743, %v735
        %v904 = vpack.c.b16 %v744, %v736
        %v905 = vpack.c.b16 %v745, %v737
        %v906 = vpack.c.b16 %v746, %v738
        %v907 = vpack.c.b16 %v747, %v739
        %v908 = vpack.c.b16 %v748, %v740
        %v909 = vpack.c.b16 %v757, %v749
        %v910 = vpack.c.b16 %v758, %v750
        %v911 = vpack.c.b16 %v759, %v751
        %v912 = vpack.c.b16 %v760, %v752
        %v913 = vpack.c.b16 %v761, %v753
        %v914 = vpack.c.b16 %v762, %v754
        %v915 = vpack.c.b16 %v763, %v755
        %v916 = vpack.c.b16 %v764, %v756
        %v917 = vpack.c.b16 %v773, %v765
        %v918 = vpack.c.b16 %v774, %v766
        %v919 = vpack.c.b16 %v775, %v767
        %v920 = vpack.c.b16 %v776, %v768
        %v921 = vpack.c.b16 %v777, %v769
        %v922 = vpack.c.b16 %v778, %v770
        %v923 = vpack.c.b16 %v779, %v771
        %v924 = vpack.c.b16 %v780, %v772
        %v925 = vpack.c.b16 %v789, %v781
        %v926 = vpack.c.b16 %v790, %v782
        %v927 = vpack.c.b16 %v791, %v783
        %v928 = vpack.c.b16 %v792, %v784
        %v929 = vpack.c.b16 %v793, %v785
        %v930 = vpack.c.b16 %v794, %v786
        %v931 = vpack.c.b16 %v795, %v787
        %v932 = vpack.c.b16 %v796, %v788
        %v933 = vpack.c.b16 %v805, %v797
        %v934 = vpack.c.b16 %v806, %v798
        %v935 = vpack.c.b16 %v807, %v799
        %v936 = vpack.c.b16 %v808, %v800
        %v937 = vpack.c.b16 %v809, %v801
        %v938 = vpack.c.b16 %v810, %v802
        %v939 = vpack.c.b16 %v811, %v803
        %v940 = vpack.c.b16 %v812, %v804
        %v941 = vpack.c.b16 %v821, %v813
        %v942 = vpack.c.b16 %v822, %v814
        %v943 = vpack.c.b16 %v823, %v815
        %v944 = vpack.c.b16 %v824, %v816
        %v945 = vpack.c.b16 %v825, %v817
        %v946 = vpack.c.b16 %v826, %v818
        %v947 = vpack.c.b16 %v827, %v819
        %v948 = vpack.c.b16 %v828, %v820
        %v949 = vpack.c.b16 %v837, %v829
        %v950 = vpack.c.b16 %v838, %v830
        %v951 = vpack.c.b16 %v839, %v831
        %v952 = vpack.c.b16 %v840, %v832
        %v953 = vpack.c.b16 %v841, %v833
        %v954 = vpack.c.b16 %v842, %v834
        %v955 = vpack.c.b16 %v843, %v835
        %v956 = vpack.c.b16 %v844, %v836
        %v957 = vpack.c.b16 %v845, %v845
        %v958 = vpack.c.b16 %v846, %v846
        %v959 = vpack.c.b16 %v847, %v847
        %v960 = vpack.c.b16 %v848, %v848
        %v961 = vpack.c.b16 %v849, %v849
        %v962 = vpack.c.b16 %v850, %v850
        %v963 = vpack.c.b16 %v851, %v851
        %v964 = vpack.c.b16 %v852, %v852
        %vm1069 = vcmask 719872
        %v1071 = vsel %vm1069, %v527, 0
        %vm1073 = vcmask 1043456
        %v1075 = vsel %vm1073, %v957, 0
        %v1078 = vsel %vm1073, %v958, 0
        %v1081 = vsel %vm1073, %v959, 0
        %v1084 = vsel %vm1073, %v960, 0
        %v1087 = vsel %vm1073, %v961, 0
        %v1090 = vsel %vm1073, %v962, 0
        %v1093 = vsel %vm1073, %v963, 0
        %v1096 = vsel %vm1073, %v964, 0
        %1098 = vmatprep.subr.bf16.mxu0 %v854
        %1099 = vmatpush1.bf16.msra.mxu0 %v853
        %1100 = vmatprep.subr.bf16.mxu0 %v862
        %1101 = vmatpush1.bf16.msra.mxu0 %v861
        %1102 = vmatprep.subr.bf16.mxu0 %v870
        %1103 = vmatpush1.bf16.msra.mxu0 %v869
        %1104 = vmatprep.subr.bf16.mxu0 %v878
        %1105 = vmatpush1.bf16.msra.mxu0 %v877
        %1106 = vmatprep.subr.bf16.mxu0 %v886
        %1107 = vmatpush1.bf16.msra.mxu0 %v885
        %1108 = vmatprep.subr.bf16.mxu0 %v894
        %1109 = vmatpush1.bf16.msra.mxu0 %v893
        %1110 = vmatprep.subr.bf16.mxu0 %v902
        %1111 = vmatpush1.bf16.msra.mxu0 %v901
        %1112 = vmatprep.subr.bf16.mxu0 %v910
        %1113 = vmatpush1.bf16.msra.mxu0 %v909
        %1114 = vmatprep.subr.bf16.mxu0 %v918
        %1115 = vmatpush1.bf16.msra.mxu0 %v917
        %1116 = vmatprep.subr.bf16.mxu0 %v926
        %1117 = vmatpush1.bf16.msra.mxu0 %v925
        %1118 = vmatprep.subr.bf16.mxu0 %v934
        %1119 = vmatpush1.bf16.msra.mxu0 %v933
        %1120 = vmatprep.subr.bf16.mxu0 %v942
        %1121 = vmatpush1.bf16.msra.mxu0 %v941
        %1122 = vmatprep.subr.bf16.mxu0 %v950
        %1123 = vmatpush1.bf16.msra.mxu0 %v949
        %1124 = vmatprep.subr.bf16.mxu0 %v1078
        %1125 = vmatpush1.bf16.msra.mxu0 %v1075
        %1126 = vmatprep.subr.bf16.mxu0 0
        %1127 = vmatpush1.bf16.msra.mxu0 0
        %1128 = vmatprep.subr.bf16.mxu0 0
        %1129 = vmatpush1.bf16.msra.mxu0 0
        %1130 = vmatprep.mubr.bf16.mxu0 %v1071
        %1131 = vmatmul.mubr.bf16.gmra.mrb[0].mxu0 %v526
        %v1132 = vpop.f32.mrb[0].mxu0
        %v1133 = vadd.f32 %v521, %v1132
        %v1134 = vpop.f32.mrb[0].mxu0
        %v1135 = vadd.f32 %v521, %v1134
        %v1136 = vpop.f32.mrb[0].mxu0
        %v1137 = vpop.f32.mrb[0].mxu0
        %1138 = vdwg.mxu0
        %1139 = vmatprep.subr.bf16.mxu0 %v856
        %1140 = vmatpush1.bf16.msra.mxu0 %v855
        %1141 = vmatprep.subr.bf16.mxu0 %v864
        %1142 = vmatpush1.bf16.msra.mxu0 %v863
        %1143 = vmatprep.subr.bf16.mxu0 %v872
        %1144 = vmatpush1.bf16.msra.mxu0 %v871
        %1145 = vmatprep.subr.bf16.mxu0 %v880
        %1146 = vmatpush1.bf16.msra.mxu0 %v879
        %1147 = vmatprep.subr.bf16.mxu0 %v888
        %1148 = vmatpush1.bf16.msra.mxu0 %v887
        %1149 = vmatprep.subr.bf16.mxu0 %v896
        %1150 = vmatpush1.bf16.msra.mxu0 %v895
        %1151 = vmatprep.subr.bf16.mxu0 %v904
        %1152 = vmatpush1.bf16.msra.mxu0 %v903
        %1153 = vmatprep.subr.bf16.mxu0 %v912
        %1154 = vmatpush1.bf16.msra.mxu0 %v911
        %1155 = vmatprep.subr.bf16.mxu0 %v920
        %1156 = vmatpush1.bf16.msra.mxu0 %v919
        %1157 = vmatprep.subr.bf16.mxu0 %v928
        %1158 = vmatpush1.bf16.msra.mxu0 %v927
        %1159 = vmatprep.subr.bf16.mxu0 %v936
        %1160 = vmatpush1.bf16.msra.mxu0 %v935
        %1161 = vmatprep.subr.bf16.mxu0 %v944
        %1162 = vmatpush1.bf16.msra.mxu0 %v943
        %1163 = vmatprep.subr.bf16.mxu0 %v952
        %1164 = vmatpush1.bf16.msra.mxu0 %v951
        %1165 = vmatprep.subr.bf16.mxu0 %v1084
        %1166 = vmatpush1.bf16.msra.mxu0 %v1081
        %1167 = vmatprep.subr.bf16.mxu0 0
        %1168 = vmatpush1.bf16.msra.mxu0 0
        %1169 = vmatprep.subr.bf16.mxu0 0
        %1170 = vmatpush1.bf16.msra.mxu0 0
        %1171 = vmatprep.mubr.bf16.mxu0 %v1071
        %1172 = vmatmul.mubr.bf16.gmra.mrb[0].mxu0 %v526
        %v1173 = vpop.f32.mrb[0].mxu0
        %v1174 = vadd.f32 %v521, %v1173
        %v1175 = vpop.f32.mrb[0].mxu0
        %v1176 = vadd.f32 %v521, %v1175
        %v1177 = vpop.f32.mrb[0].mxu0
        %v1178 = vpop.f32.mrb[0].mxu0
        %1179 = vdwg.mxu0
        %1180 = vmatprep.subr.bf16.mxu0 %v858
        %1181 = vmatpush1.bf16.msra.mxu0 %v857
        %1182 = vmatprep.subr.bf16.mxu0 %v866
        %1183 = vmatpush1.bf16.msra.mxu0 %v865
        %1184 = vmatprep.subr.bf16.mxu0 %v874
        %1185 = vmatpush1.bf16.msra.mxu0 %v873
        %1186 = vmatprep.subr.bf16.mxu0 %v882
        %1187 = vmatpush1.bf16.msra.mxu0 %v881
        %1188 = vmatprep.subr.bf16.mxu0 %v890
        %1189 = vmatpush1.bf16.msra.mxu0 %v889
        %1190 = vmatprep.subr.bf16.mxu0 %v898
        %1191 = vmatpush1.bf16.msra.mxu0 %v897
        %1192 = vmatprep.subr.bf16.mxu0 %v906
        %1193 = vmatpush1.bf16.msra.mxu0 %v905
        %1194 = vmatprep.subr.bf16.mxu0 %v914
        %1195 = vmatpush1.bf16.msra.mxu0 %v913
        %1196 = vmatprep.subr.bf16.mxu0 %v922
        %1197 = vmatpush1.bf16.msra.mxu0 %v921
        %1198 = vmatprep.subr.bf16.mxu0 %v930
        %1199 = vmatpush1.bf16.msra.mxu0 %v929
        %1200 = vmatprep.subr.bf16.mxu0 %v938
        %1201 = vmatpush1.bf16.msra.mxu0 %v937
        %1202 = vmatprep.subr.bf16.mxu0 %v946
        %1203 = vmatpush1.bf16.msra.mxu0 %v945
        %1204 = vmatprep.subr.bf16.mxu0 %v954
        %1205 = vmatpush1.bf16.msra.mxu0 %v953
        %1206 = vmatprep.subr.bf16.mxu0 %v1090
        %1207 = vmatpush1.bf16.msra.mxu0 %v1087
        %1208 = vmatprep.subr.bf16.mxu0 0
        %1209 = vmatpush1.bf16.msra.mxu0 0
        %1210 = vmatprep.subr.bf16.mxu0 0
        %1211 = vmatpush1.bf16.msra.mxu0 0
        %1212 = vmatprep.mubr.bf16.mxu0 %v1071
        %1213 = vmatmul.mubr.bf16.gmra.mrb[0].mxu0 %v526
        %v1214 = vpop.f32.mrb[0].mxu0
        %v1215 = vadd.f32 %v521, %v1214
        %v1216 = vpop.f32.mrb[0].mxu0
        %v1217 = vadd.f32 %v521, %v1216
        %v1218 = vpop.f32.mrb[0].mxu0
        %v1219 = vpop.f32.mrb[0].mxu0
        %1220 = vdwg.mxu0
        %1221 = vmatprep.subr.bf16.mxu0 %v860
        %1222 = vmatpush1.bf16.msra.mxu0 %v859
        %1223 = vmatprep.subr.bf16.mxu0 %v868
        %1224 = vmatpush1.bf16.msra.mxu0 %v867
        %1225 = vmatprep.subr.bf16.mxu0 %v876
        %1226 = vmatpush1.bf16.msra.mxu0 %v875
        %1227 = vmatprep.subr.bf16.mxu0 %v884
        %1228 = vmatpush1.bf16.msra.mxu0 %v883
        %1229 = vmatprep.subr.bf16.mxu0 %v892
        %1230 = vmatpush1.bf16.msra.mxu0 %v891
        %1231 = vmatprep.subr.bf16.mxu0 %v900
        %1232 = vmatpush1.bf16.msra.mxu0 %v899
        %1233 = vmatprep.subr.bf16.mxu0 %v908
        %1234 = vmatpush1.bf16.msra.mxu0 %v907
        %1235 = vmatprep.subr.bf16.mxu0 %v916
        %1236 = vmatpush1.bf16.msra.mxu0 %v915
        %1237 = vmatprep.subr.bf16.mxu0 %v924
        %1238 = vmatpush1.bf16.msra.mxu0 %v923
        %1239 = vmatprep.subr.bf16.mxu0 %v932
        %1240 = vmatpush1.bf16.msra.mxu0 %v931
        %1241 = vmatprep.subr.bf16.mxu0 %v940
        %1242 = vmatpush1.bf16.msra.mxu0 %v939
        %1243 = vmatprep.subr.bf16.mxu0 %v948
        %1244 = vmatpush1.bf16.msra.mxu0 %v947
        %1245 = vmatprep.subr.bf16.mxu0 %v956
        %1246 = vmatpush1.bf16.msra.mxu0 %v955
        %1247 = vmatprep.subr.bf16.mxu0 %v1096
        %1248 = vmatpush1.bf16.msra.mxu0 %v1093
        %1249 = vmatprep.subr.bf16.mxu0 0
        %1250 = vmatpush1.bf16.msra.mxu0 0
        %1251 = vmatprep.subr.bf16.mxu0 0
        %1252 = vmatpush1.bf16.msra.mxu0 0
        %1253 = vmatprep.mubr.bf16.mxu0 %v1071
        %1254 = vmatmul.mubr.bf16.gmra.mrb[0].mxu0 %v526
        %v1255 = vpop.f32.mrb[0].mxu0
        %v1256 = vadd.f32 %v521, %v1255
        %v1257 = vpop.f32.mrb[0].mxu0
        %v1258 = vadd.f32 %v521, %v1257
        %v1259 = vpop.f32.mrb[0].mxu0
        %v1260 = vpop.f32.mrb[0].mxu0
        %1261 = vdwg.mxu0
        %vm1262 = vcmp.ge.f32.partialorder %v1133, 0.0
        %vm1263 = vcmp.ge.f32.partialorder %v1135, 0.0
        %vm1264 = vcmp.ge.f32.partialorder %v1174, 0.0
        %vm1265 = vcmp.ge.f32.partialorder %v1176, 0.0
        %vm1266 = vcmp.ge.f32.partialorder %v1215, 0.0
        %vm1267 = vcmp.ge.f32.partialorder %v1217, 0.0
        %vm1268 = vcmp.ge.f32.partialorder %v1256, 0.0
        %vm1269 = vcmp.ge.f32.partialorder %v1258, 0.0
        %v1270 = vmul.f32 %v1133, 0.2
        %v1271 = vmul.f32 %v1135, 0.2
        %v1272 = vmul.f32 %v1174, 0.2
        %v1273 = vmul.f32 %v1176, 0.2
        %v1274 = vmul.f32 %v1215, 0.2
        %v1275 = vmul.f32 %v1217, 0.2
        %v1276 = vmul.f32 %v1256, 0.2
        %v1277 = vmul.f32 %v1258, 0.2
        %v1278 = vsel %vm1262, %v1133, %v1270
        %v1279 = vsel %vm1263, %v1135, %v1271
        %v1280 = vsel %vm1264, %v1174, %v1272
        %v1281 = vsel %vm1265, %v1176, %v1273
        %v1282 = vsel %vm1266, %v1215, %v1274
        %v1283 = vsel %vm1267, %v1217, %v1275
        %v1284 = vsel %vm1268, %v1256, %v1276
        %v1285 = vsel %vm1269, %v1258, %v1277
        %1286 = vst [vmem:[%s405] sm:$0xff] %v1278
        %1287 = vst [vmem:[%s405 + $0x8] sm:$0xff] %v1279
        %1288 = vst [vmem:[%s405 + $0x10] sm:$0xff] %v1280
        %1289 = vst [vmem:[%s405 + $0x18] sm:$0xff] %v1281
        %1290 = vst [vmem:[%s405 + $0x20] sm:$0xff] %v1282
        %1291 = vst [vmem:[%s405 + $0x28] sm:$0xff] %v1283
        %1292 = vst [vmem:[%s405 + $0x30] sm:$0xff] %v1284
        %1293 = vst [vmem:[%s405 + $0x38] sm:$0xff] %v1285
        %s1294 = smul.u32 8, %s14
        %p1295 = scmp.lt.s32.totalorder %s1294, 15
        %s1296 = scalar_select %p1295, %s1294, 15
        %s1297 = smul.addr %s1296, 8
        %s1298 = scalar_lea.vmem %s3, %s1297
        // Predicated region
        $region56: #{spectral_discriminator_forward.9} parent=50 // pred_check
          %p1299 = pneg %p100
        $region57: #{spectral_discriminator_forward.9} parent=50 // pred_check_branch
          %1301 = sbr.rel (%p1299) target = $region59
        $region58: #{spectral_discriminator_forward.9} parent=50 // pred_region
          %s1302 = smul.u32 8, %s14
        $region59: #{spectral_discriminator_forward.9} parent=50 // pred_fallthru
          _
      $region51: #{spectral_discriminator_forward.9} parent=5 // pred_fallthru
        _
      %p1303 = scmp.le.s32.totalorder 2, %s9
      // Predicated region
      $region60: #{spectral_discriminator_forward.9} parent=5 // pred_check
        %p1304 = pneg %p1303
      $region61: #{spectral_discriminator_forward.9} parent=5 // pred_check_branch
        %1306 = sbr.rel (%p1304) target = $region63
      $region62: #{spectral_discriminator_forward.9} parent=5 // pred_region
        %s1307 = ssub.s32 %s9, 2
        // Predicated region
        $region64: #{spectral_discriminator_forward.9} parent=62 // pred_check
          %p1308 = pneg %p106
        $region65: #{spectral_discriminator_forward.9} parent=62 // pred_check_branch
          %1310 = sbr.rel (%p1308) target = $region67
        $region66: #{spectral_discriminator_forward.9} parent=62 // pred_region
          %s1311 = smul.u32 8, %s15
          %p1312 = scmp.lt.s32.totalorder %s1311, 15
          %s1313 = scalar_select %p1312, %s1311, 15
          %s1314 = smul.addr %s1313, 8
          %s1315 = scalar_lea.vmem %s3, %s1314
        $region67: #{spectral_discriminator_forward.9} parent=62 // pred_fallthru
          _
      $region63: #{spectral_discriminator_forward.9} parent=5 // pred_fallthru
        _
    $region6: #{spectral_discriminator_forward.9} parent=1 // loop_footer
      %s13 = sadd.s32 1, %s9
    $region7: #{spectral_discriminator_forward.9} parent=1 // loop_footer_branch
      %8 = sbr.rel target = $region3
    $region8: #{spectral_discriminator_forward.9} parent=1 // loop_exit
      _

// kernel: spectral_discriminator_forward.10
$region0: #{spectral_discriminator_forward.10}
  #allocation0 [shape = 'u32[]', space=smem, size = 0x4, offset = 0x4, fixed_abs, tag = 'smem constant byte address 0x4 - core index']
  #allocation1 [shape = 'u32[144,128]{1,0:T(1,128)}', space=vmem, size = 0x12000, scoped, tag = 'internal scratch']
  %s0 = inlined_call_operand.vmem [shape: bf16[8,216], index: 0, kind: input, shape index: {}]
  %s1 = inlined_call_operand.vmem [shape: f32[8,1], index: 1, kind: input, shape index: {}]
  %s2 = inlined_call_operand.vmem [shape: bf16[216,384], index: 2, kind: input, shape index: {}]
  %s3 = inlined_call_operand.vmem [shape: f32[8,384], index: 3, kind: output, shape index: {}]
  %s4 = sld [smem:[#allocation0]]
  $region22: #{spectral_discriminator_forward.10} parent=0
    _
  %s6 = ssub.s32 1, %s4
  %s7 = scalar_select 0, %s6, %s4
  // Predicated region
  $region2: #{spectral_discriminator_forward.10} parent=0 // pred_check
    _
  $region3: #{spectral_discriminator_forward.10} parent=0 // pred_check_branch
    %9 = sbr.rel (0) target = $region5
  $region4: #{spectral_discriminator_forward.10} parent=0 // pred_region
    _
  $region5: #{spectral_discriminator_forward.10} parent=0 // pred_fallthru
    _
  // Predicated region
  $region6: #{spectral_discriminator_forward.10} parent=0 // pred_check
    _
  $region7: #{spectral_discriminator_forward.10} parent=0 // pred_check_branch
    %11 = sbr.rel (0) target = $region9
  $region8: #{spectral_discriminator_forward.10} parent=0 // pred_region
    _
  $region9: #{spectral_discriminator_forward.10} parent=0 // pred_fallthru
    _
  // Predicated region
  $region10: #{spectral_discriminator_forward.10} parent=0 // pred_check
    _
  $region11: #{spectral_discriminator_forward.10} parent=0 // pred_check_branch
    %13 = sbr.rel (0) target = $region13
  $region12: #{spectral_discriminator_forward.10} parent=0 // pred_region
    _
  $region13: #{spectral_discriminator_forward.10} parent=0 // pred_fallthru
    _
  %v15 = vld [vmem:[%s0] sm:$0xff]
  %v16 = vld [vmem:[%s2] sm:$0xff]
  %v17 = vld [vmem:[%s2 + $0x8] sm:$0xf]
  %v18 = vld [vmem:[%s2 + $0xc] sm:$0xff]
  %v19 = vld [vmem:[%s2 + $0x14] sm:$0xf]
  %v20 = vld [vmem:[%s2 + $0x18] sm:$0xff]
  %v21 = vld [vmem:[%s2 + $0x20] sm:$0xf]
  %v22 = vld [vmem:[%s2 + $0x24] sm:$0xff]
  %v23 = vld [vmem:[%s2 + $0x2c] sm:$0xf]
  %v24 = vld [vmem:[%s2 + $0x30] sm:$0xff]
  %v25 = vld [vmem:[%s2 + $0x38] sm:$0xf]
  %v26 = vld [vmem:[%s2 + $0x3c] sm:$0xff]
  %v27 = vld [vmem:[%s2 + $0x44] sm:$0xf]
  %v28 = vld [vmem:[%s2 + $0x48] sm:$0xff]
  %v29 = vld [vmem:[%s2 + $0x50] sm:$0xf]
  %v30 = vld [vmem:[%s2 + $0x54] sm:$0xff]
  %v31 = vld [vmem:[%s2 + $0x5c] sm:$0xf]
  %v32 = vld [vmem:[%s2 + $0x60] sm:$0xff]
  %v33 = vld [vmem:[%s2 + $0x68] sm:$0xf]
  %v34 = vld [vmem:[%s2 + $0x6c] sm:$0xff]
  %v35 = vld [vmem:[%s2 + $0x74] sm:$0xf]
  %v36 = vld [vmem:[%s2 + $0x78] sm:$0xff]
  %v37 = vld [vmem:[%s2 + $0x80] sm:$0xf]
  %v38 = vld [vmem:[%s2 + $0x84] sm:$0xff]
  %v39 = vld [vmem:[%s2 + $0x8c] sm:$0xf]
  %v40 = vld [vmem:[%s2 + $0x90] sm:$0xff]
  %v41 = vld [vmem:[%s2 + $0x98] sm:$0xf]
  %v42 = vld [vmem:[%s2 + $0x9c] sm:$0xff]
  %v43 = vld [vmem:[%s2 + $0xa4] sm:$0xf]
  %v44 = vld [vmem:[%s2 + $0xa8] sm:$0xff]
  %v45 = vld [vmem:[%s2 + $0xb0] sm:$0xf]
  %v46 = vld [vmem:[%s2 + $0xb4] sm:$0xff]
  %v47 = vld [vmem:[%s2 + $0xbc] sm:$0xf]
  %v48 = vld [vmem:[%s2 + $0xc0] sm:$0xff]
  %v49 = vld [vmem:[%s2 + $0xc8] sm:$0xf]
  %v50 = vld [vmem:[%s2 + $0xcc] sm:$0xff]
  %v51 = vld [vmem:[%s2 + $0xd4] sm:$0xf]
  %v52 = vld [vmem:[%s2 + $0xd8] sm:$0xff]
  %v53 = vld [vmem:[%s2 + $0xe0] sm:$0xf]
  %v54 = vld [vmem:[%s2 + $0xe4] sm:$0xff]
  %v55 = vld [vmem:[%s2 + $0xec] sm:$0xf]
  %v56 = vld [vmem:[%s2 + $0xf0] sm:$0xff]
  %v57 = vld [vmem:[%s2 + $0xf8] sm:$0xf]
  %v58 = vld [vmem:[%s2 + $0xfc] sm:$0xff]
  %v59 = vld [vmem:[%s2 + $0x104] sm:$0xf]
  %v60 = vld [vmem:[%s2 + $0x108] sm:$0xff]
  %v61 = vld [vmem:[%s2 + $0x110] sm:$0xf]
  %v62 = vld [vmem:[%s2 + $0x114] sm:$0xff]
  %v63 = vld [vmem:[%s2 + $0x11c] sm:$0xf]
  %v64 = vld [vmem:[%s2 + $0x120] sm:$0xff]
  %v65 = vld [vmem:[%s2 + $0x128] sm:$0xf]
  %v66 = vld [vmem:[%s2 + $0x12c] sm:$0xff]
  %v67 = vld [vmem:[%s2 + $0x134] sm:$0xf]
  %v68 = vld [vmem:[%s2 + $0x138] sm:$0xff]
  %v69 = vld [vmem:[%s2 + $0x140] sm:$0xf]
  %v70 = vld [vmem:[%s1] sm:$0xff]
  %72 = vset.pattern.permute.xlu0 0
  %73 = vperm.xlu0 %72, %v70
  %v74 = vpop.permute.xlu0 %73
  %v77 = vunpack.c.l.b16 %v15
  %v78 = vunpack.c.h.b16 %v15
  %v79 = vpack.c.b16 %v77, %v77
  %v80 = vpack.c.b16 %v78, %v78
  %v136 = vunpack.c.l.b16 %v16
  %v137 = vunpack.c.h.b16 %v16
  %v138 = vunpack.c.l.b16 %v17
  %v139 = vunpack.c.l.b16 %v18
  %v140 = vunpack.c.h.b16 %v18
  %v141 = vunpack.c.l.b16 %v19
  %v142 = vunpack.c.l.b16 %v20
  %v143 = vunpack.c.h.b16 %v20
  %v144 = vunpack.c.l.b16 %v21
  %v145 = vunpack.c.l.b16 %v22
  %v146 = vunpack.c.h.b16 %v22
  %v147 = vunpack.c.l.b16 %v23
  %v148 = vunpack.c.l.b16 %v24
  %v149 = vunpack.c.h.b16 %v24
  %v150 = vunpack.c.l.b16 %v25
  %v151 = vunpack.c.l.b16 %v26
  %v152 = vunpack.c.h.b16 %v26
  %v153 = vunpack.c.l.b16 %v27
  %v154 = vunpack.c.l.b16 %v28
  %v155 = vunpack.c.h.b16 %v28
  %v156 = vunpack.c.l.b16 %v29
  %v157 = vunpack.c.l.b16 %v30
  %v158 = vunpack.c.h.b16 %v30
  %v159 = vunpack.c.l.b16 %v31
  %v160 = vunpack.c.l.b16 %v32
  %v161 = vunpack.c.h.b16 %v32
  %v162 = vunpack.c.l.b16 %v33
  %v163 = vunpack.c.l.b16 %v34
  %v164 = vunpack.c.h.b16 %v34
  %v165 = vunpack.c.l.b16 %v35
  %v166 = vunpack.c.l.b16 %v36
  %v167 = vunpack.c.h.b16 %v36
  %v168 = vunpack.c.l.b16 %v37
  %v169 = vunpack.c.l.b16 %v38
  %v170 = vunpack.c.h.b16 %v38
  %v171 = vunpack.c.l.b16 %v39
  %v172 = vunpack.c.l.b16 %v40
  %v173 = vunpack.c.h.b16 %v40
  %v174 = vunpack.c.l.b16 %v41
  %v175 = vunpack.c.l.b16 %v42
  %v176 = vunpack.c.h.b16 %v42
  %v177 = vunpack.c.l.b16 %v43
  %v178 = vunpack.c.l.b16 %v44
  %v179 = vunpack.c.h.b16 %v44
  %v180 = vunpack.c.l.b16 %v45
  %v181 = vunpack.c.l.b16 %v46
  %v182 = vunpack.c.h.b16 %v46
  %v183 = vunpack.c.l.b16 %v47
  %v184 = vunpack.c.l.b16 %v48
  %v185 = vunpack.c.h.b16 %v48
  %v186 = vunpack.c.l.b16 %v49
  %v187 = vunpack.c.l.b16 %v50
  %v188 = vunpack.c.h.b16 %v50
  %v189 = vunpack.c.l.b16 %v51
  %v190 = vunpack.c.l.b16 %v52
  %v191 = vunpack.c.h.b16 %v52
  %v192 = vunpack.c.l.b16 %v53
  %v193 = vunpack.c.l.b16 %v54
  %v194 = vunpack.c.h.b16 %v54
  %v195 = vunpack.c.l.b16 %v55
  %v196 = vunpack.c.l.b16 %v56
  %v197 = vunpack.c.h.b16 %v56
  %v198 = vunpack.c.l.b16 %v57
  %v199 = vunpack.c.l.b16 %v58
  %v200 = vunpack.c.h.b16 %v58
  %v201 = vunpack.c.l.b16 %v59
  %v202 = vunpack.c.l.b16 %v60
  %v203 = vunpack.c.h.b16 %v60
  %v204 = vunpack.c.l.b16 %v61
  %v205 = vunpack.c.l.b16 %v62
  %v206 = vunpack.c.h.b16 %v62
  %v207 = vunpack.c.l.b16 %v63
  %v208 = vunpack.c.l.b16 %v64
  %v209 = vunpack.c.h.b16 %v64
  %v210 = vunpack.c.l.b16 %v65
  %v211 = vunpack.c.l.b16 %v66
  %v212 = vunpack.c.h.b16 %v66
  %v213 = vunpack.c.l.b16 %v67
  %v214 = vunpack.c.l.b16 %v68
  %v215 = vunpack.c.h.b16 %v68
  %v216 = vunpack.c.l.b16 %v69
  %v217 = vpack.c.b16 %v139, %v136
  %v218 = vpack.c.b16 %v140, %v137
  %v219 = vpack.c.b16 %v141, %v138
  %v220 = vpack.c.b16 %v145, %v142
  %v221 = vpack.c.b16 %v146, %v143
  %v222 = vpack.c.b16 %v147, %v144
  %v223 = vpack.c.b16 %v151, %v148
  %v224 = vpack.c.b16 %v152, %v149
  %v225 = vpack.c.b16 %v153, %v150
  %v226 = vpack.c.b16 %v157, %v154
  %v227 = vpack.c.b16 %v158, %v155
  %v228 = vpack.c.b16 %v159, %v156
  %v229 = vpack.c.b16 %v163, %v160
  %v230 = vpack.c.b16 %v164, %v161
  %v231 = vpack.c.b16 %v165, %v162
  %v232 = vpack.c.b16 %v169, %v166
  %v233 = vpack.c.b16 %v170, %v167
  %v234 = vpack.c.b16 %v171, %v168
  %v235 = vpack.c.b16 %v175, %v172
  %v236 = vpack.c.b16 %v176, %v173
  %v237 = vpack.c.b16 %v177, %v174
  %v238 = vpack.c.b16 %v181, %v178
  %v239 = vpack.c.b16 %v182, %v179
  %v240 = vpack.c.b16 %v183, %v180
  %v241 = vpack.c.b16 %v187, %v184
  %v242 = vpack.c.b16 %v188, %v185
  %v243 = vpack.c.b16 %v189, %v186
  %v244 = vpack.c.b16 %v193, %v190
  %v245 = vpack.c.b16 %v194, %v191
  %v246 = vpack.c.b16 %v195, %v192
  %v247 = vpack.c.b16 %v199, %v196
  %v248 = vpack.c.b16 %v200, %v197
  %v249 = vpack.c.b16 %v201, %v198
  %v250 = vpack.c.b16 %v205, %v202
  %v251 = vpack.c.b16 %v206, %v203
  %v252 = vpack.c.b16 %v207, %v204
  %v253 = vpack.c.b16 %v211, %v208
  %v254 = vpack.c.b16 %v212, %v209
  %v255 = vpack.c.b16 %v213, %v210
  %v256 = vpack.c.b16 %v214, %v214
  %v257 = vpack.c.b16 %v215, %v215
  %v258 = vpack.c.b16 %v216, %v216
  %vm298 = vcmask 719872
  %v300 = vsel %vm298, %v80, 0
  %vm302 = vcmask 1043456
  %v304 = vsel %vm302, %v256, 0
  %v307 = vsel %vm302, %v257, 0
  %v310 = vsel %vm302, %v258, 0
  %312 = vmatprep.subr.bf16.mxu0 %v218
  %313 = vmatpush1.bf16.msra.mxu0 %v217
  %314 = vmatprep.subr.bf16.mxu0 %v221
  %315 = vmatpush1.bf16.msra.mxu0 %v220
  %316 = vmatprep.subr.bf16.mxu0 %v224
  %317 = vmatpush1.bf16.msra.mxu0 %v223
  %318 = vmatprep.subr.bf16.mxu0 %v227
  %319 = vmatpush1.bf16.msra.mxu0 %v226
  %320 = vmatprep.subr.bf16.mxu0 %v230
  %321 = vmatpush1.bf16.msra.mxu0 %v229
  %322 = vmatprep.subr.bf16.mxu0 %v233
  %323 = vmatpush1.bf16.msra.mxu0 %v232
  %324 = vmatprep.subr.bf16.mxu0 %v236
  %325 = vmatpush1.bf16.msra.mxu0 %v235
  %326 = vmatprep.subr.bf16.mxu0 %v239
  %327 = vmatpush1.bf16.msra.mxu0 %v238
  %328 = vmatprep.subr.bf16.mxu0 %v242
  %329 = vmatpush1.bf16.msra.mxu0 %v241
  %330 = vmatprep.subr.bf16.mxu0 %v245
  %331 = vmatpush1.bf16.msra.mxu0 %v244
  %332 = vmatprep.subr.bf16.mxu0 %v248
  %333 = vmatpush1.bf16.msra.mxu0 %v247
  %334 = vmatprep.subr.bf16.mxu0 %v251
  %335 = vmatpush1.bf16.msra.mxu0 %v250
  %336 = vmatprep.subr.bf16.mxu0 %v254
  %337 = vmatpush1.bf16.msra.mxu0 %v253
  %338 = vmatprep.subr.bf16.mxu0 %v307
  %339 = vmatpush1.bf16.msra.mxu0 %v304
  %340 = vmatprep.subr.bf16.mxu0 0
  %341 = vmatpush1.bf16.msra.mxu0 0
  %342 = vmatprep.subr.bf16.mxu0 0
  %343 = vmatpush1.bf16.msra.mxu0 0
  %344 = vmatprep.mubr.bf16.mxu0 %v300
  %345 = vmatmul.mubr.bf16.gmra.mrb[0].mxu0 %v79
  %v346 = vpop.f32.mrb[0].mxu0
  %v347 = vadd.f32 %v74, %v346
  %v348 = vpop.f32.mrb[0].mxu0
  %v349 = vadd.f32 %v74, %v348
  %v350 = vpop.f32.mrb[0].mxu0
  %v351 = vpop.f32.mrb[0].mxu0
  %352 = vdwg.mxu0
  %353 = vmatprep.subr.bf16.mxu0 0
  %354 = vmatpush1.bf16.msra.mxu0 %v219
  %355 = vmatprep.subr.bf16.mxu0 0
  %356 = vmatpush1.bf16.msra.mxu0 %v222
  %357 = vmatprep.subr.bf16.mxu0 0
  %358 = vmatpush1.bf16.msra.mxu0 %v225
  %359 = vmatprep.subr.bf16.mxu0 0
  %360 = vmatpush1.bf16.msra.mxu0 %v228
  %361 = vmatprep.subr.bf16.mxu0 0
  %362 = vmatpush1.bf16.msra.mxu0 %v231
  %363 = vmatprep.subr.bf16.mxu0 0
  %364 = vmatpush1.bf16.msra.mxu0 %v234
  %365 = vmatprep.subr.bf16.mxu0 0
  %366 = vmatpush1.bf16.msra.mxu0 %v237
  %367 = vmatprep.subr.bf16.mxu0 0
  %368 = vmatpush1.bf16.msra.mxu0 %v240
  %369 = vmatprep.subr.bf16.mxu0 0
  %370 = vmatpush1.bf16.msra.mxu0 %v243
  %371 = vmatprep.subr.bf16.mxu0 0
  %372 = vmatpush1.bf16.msra.mxu0 %v246
  %373 = vmatprep.subr.bf16.mxu0 0
  %374 = vmatpush1.bf16.msra.mxu0 %v249
  %375 = vmatprep.subr.bf16.mxu0 0
  %376 = vmatpush1.bf16.msra.mxu0 %v252
  %377 = vmatprep.subr.bf16.mxu0 0
  %378 = vmatpush1.bf16.msra.mxu0 %v255
  %379 = vmatprep.subr.bf16.mxu0 0
  %380 = vmatpush1.bf16.msra.mxu0 %v310
  %381 = vmatprep.subr.bf16.mxu0 0
  %382 = vmatpush1.bf16.msra.mxu0 0
  %383 = vmatprep.subr.bf16.mxu0 0
  %384 = vmatpush1.bf16.msra.mxu0 0
  %385 = vmatprep.mubr.bf16.mxu0 %v300
  %386 = vmatmul.mubr.bf16.gmra.mrb[0].mxu0 %v79
  %v387 = vpop.f32.mrb[0].mxu0
  %v388 = vadd.f32 %v74, %v387
  %v389 = vpop.f32.mrb[0].mxu0
  %v390 = vpop.f32.mrb[0].mxu0
  %v391 = vpop.f32.mrb[0].mxu0
  %392 = vdwg.mxu0
  %vm393 = vcmp.ge.f32.partialorder %v347, 0.0
  %vm394 = vcmp.ge.f32.partialorder %v349, 0.0
  %vm395 = vcmp.ge.f32.partialorder %v388, 0.0
  %v396 = vmul.f32 %v347, 0.2
  %v397 = vmul.f32 %v349, 0.2
  %v398 = vmul.f32 %v388, 0.2
  %v399 = vsel %vm393, %v347, %v396
  %v400 = vsel %vm394, %v349, %v397
  %v401 = vsel %vm395, %v388, %v398
  %402 = vst [vmem:[%s3] sm:$0xff] %v399
  %403 = vst [vmem:[%s3 + $0x8] sm:$0xff] %v400
  %404 = vst [vmem:[%s3 + $0x10] sm:$0xff] %v401
  // Predicated region
  $region14: #{spectral_discriminator_forward.10} parent=0 // pred_check
    _
  $region15: #{spectral_discriminator_forward.10} parent=0 // pred_check_branch
    %406 = sbr.rel (0) target = $region17
  $region16: #{spectral_discriminator_forward.10} parent=0 // pred_region
    _
  $region17: #{spectral_discriminator_forward.10} parent=0 // pred_fallthru
    _
  // Predicated region
  $region18: #{spectral_discriminator_forward.10} parent=0 // pred_check
    _
  $region19: #{spectral_discriminator_forward.10} parent=0 // pred_check_branch
    %408 = sbr.rel (0) target = $region21
  $region20: #{spectral_discriminator_forward.10} parent=0 // pred_region
    _
  $region21: #{spectral_discriminator_forward.10} parent=0 // pred_fallthru
    _

// kernel: spectral_discriminator_forward.11
$region0: #{spectral_discriminator_forward.11}
  #allocation0 [shape = 'u32[]', space=smem, size = 0x4, offset = 0x4, fixed_abs, tag = 'smem constant byte address 0x4 - core index']
  #allocation1 [shape = 'u32[144,128]{1,0:T(1,128)}', space=vmem, size = 0x12000, scoped, tag = 'internal scratch']
  %s0 = inlined_call_operand.vmem [shape: bf16[8,216], index: 0, kind: input, shape index: {}]
  %s1 = inlined_call_operand.vmem [shape: f32[8,1], index: 1, kind: input, shape index: {}]
  %s2 = inlined_call_operand.vmem [shape: bf16[216,128], index: 2, kind: input, shape index: {}]
  %s3 = inlined_call_operand.vmem [shape: f32[8,128], index: 3, kind: output, shape index: {}]
  %s4 = sld [smem:[#allocation0]]
  $region22: #{spectral_discriminator_forward.11} parent=0
    _
  %s6 = ssub.s32 1, %s4
  %s7 = scalar_select 0, %s6, %s4
  // Predicated region
  $region2: #{spectral_discriminator_forward.11} parent=0 // pred_check
    _
  $region3: #{spectral_discriminator_forward.11} parent=0 // pred_check_branch
    %9 = sbr.rel (0) target = $region5
  $region4: #{spectral_discriminator_forward.11} parent=0 // pred_region
    _
  $region5: #{spectral_discriminator_forward.11} parent=0 // pred_fallthru
    _
  // Predicated region
  $region6: #{spectral_discriminator_forward.11} parent=0 // pred_check
    _
  $region7: #{spectral_discriminator_forward.11} parent=0 // pred_check_branch
    %11 = sbr.rel (0) target = $region9
  $region8: #{spectral_discriminator_forward.11} parent=0 // pred_region
    _
  $region9: #{spectral_discriminator_forward.11} parent=0 // pred_fallthru
    _
  // Predicated region
  $region10: #{spectral_discriminator_forward.11} parent=0 // pred_check
    _
  $region11: #{spectral_discriminator_forward.11} parent=0 // pred_check_branch
    %13 = sbr.rel (0) target = $region13
  $region12: #{spectral_discriminator_forward.11} parent=0 // pred_region
    _
  $region13: #{spectral_discriminator_forward.11} parent=0 // pred_fallthru
    _
  %v15 = vld [vmem:[%s0] sm:$0xff]
  %v16 = vld [vmem:[%s2] sm:$0xf]
  %v17 = vld [vmem:[%s2 + $0x4] sm:$0xf]
  %v18 = vld [vmem:[%s2 + $0x8] sm:$0xf]
  %v19 = vld [vmem:[%s2 + $0xc] sm:$0xf]
  %v20 = vld [vmem:[%s2 + $0x10] sm:$0xf]
  %v21 = vld [vmem:[%s2 + $0x14] sm:$0xf]
  %v22 = vld [vmem:[%s2 + $0x18] sm:$0xf]
  %v23 = vld [vmem:[%s2 + $0x1c] sm:$0xf]
  %v24 = vld [vmem:[%s2 + $0x20] sm:$0xf]
  %v25 = vld [vmem:[%s2 + $0x24] sm:$0xf]
  %v26 = vld [vmem:[%s2 + $0x28] sm:$0xf]
  %v27 = vld [vmem:[%s2 + $0x2c] sm:$0xf]
  %v28 = vld [vmem:[%s2 + $0x30] sm:$0xf]
  %v29 = vld [vmem:[%s2 + $0x34] sm:$0xf]
  %v30 = vld [vmem:[%s2 + $0x38] sm:$0xf]
  %v31 = vld [vmem:[%s2 + $0x3c] sm:$0xf]
  %v32 = vld [vmem:[%s2 + $0x40] sm:$0xf]
  %v33 = vld [vmem:[%s2 + $0x44] sm:$0xf]
  %v34 = vld [vmem:[%s2 + $0x48] sm:$0xf]
  %v35 = vld [vmem:[%s2 + $0x4c] sm:$0xf]
  %v36 = vld [vmem:[%s2 + $0x50] sm:$0xf]
  %v37 = vld [vmem:[%s2 + $0x54] sm:$0xf]
  %v38 = vld [vmem:[%s2 + $0x58] sm:$0xf]
  %v39 = vld [vmem:[%s2 + $0x5c] sm:$0xf]
  %v40 = vld [vmem:[%s2 + $0x60] sm:$0xf]
  %v41 = vld [vmem:[%s2 + $0x64] sm:$0xf]
  %v42 = vld [vmem:[%s2 + $0x68] sm:$0xf]
  %v43 = vld [vmem:[%s1] sm:$0xff]
  %45 = vset.pattern.permute.xlu0 0
  %46 = vperm.xlu0 %45, %v43
  %v47 = vpop.permute.xlu0 %46
  %v50 = vunpack.c.l.b16 %v15
  %v51 = vunpack.c.h.b16 %v15
  %v52 = vpack.c.b16 %v50, %v50
  %v53 = vpack.c.b16 %v51, %v51
  %v82 = vunpack.c.l.b16 %v16
  %v83 = vunpack.c.l.b16 %v17
  %v84 = vunpack.c.l.b16 %v18
  %v85 = vunpack.c.l.b16 %v19
  %v86 = vunpack.c.l.b16 %v20
  %v87 = vunpack.c.l.b16 %v21
  %v88 = vunpack.c.l.b16 %v22
  %v89 = vunpack.c.l.b16 %v23
  %v90 = vunpack.c.l.b16 %v24
  %v91 = vunpack.c.l.b16 %v25
  %v92 = vunpack.c.l.b16 %v26
  %v93 = vunpack.c.l.b16 %v27
  %v94 = vunpack.c.l.b16 %v28
  %v95 = vunpack.c.l.b16 %v29
  %v96 = vunpack.c.l.b16 %v30
  %v97 = vunpack.c.l.b16 %v31
  %v98 = vunpack.c.l.b16 %v32
  %v99 = vunpack.c.l.b16 %v33
  %v100 = vunpack.c.l.b16 %v34
  %v101 = vunpack.c.l.b16 %v35
  %v102 = vunpack.c.l.b16 %v36
  %v103 = vunpack.c.l.b16 %v37
  %v104 = vunpack.c.l.b16 %v38
  %v105 = vunpack.c.l.b16 %v39
  %v106 = vunpack.c.l.b16 %v40
  %v107 = vunpack.c.l.b16 %v41
  %v108 = vunpack.c.l.b16 %v42
  %v109 = vpack.c.b16 %v83, %v82
  %v110 = vpack.c.b16 %v85, %v84
  %v111 = vpack.c.b16 %v87, %v86
  %v112 = vpack.c.b16 %v89, %v88
  %v113 = vpack.c.b16 %v91, %v90
  %v114 = vpack.c.b16 %v93, %v92
  %v115 = vpack.c.b16 %v95, %v94
  %v116 = vpack.c.b16 %v97, %v96
  %v117 = vpack.c.b16 %v99, %v98
  %v118 = vpack.c.b16 %v101, %v100
  %v119 = vpack.c.b16 %v103, %v102
  %v120 = vpack.c.b16 %v105, %v104
  %v121 = vpack.c.b16 %v107, %v106
  %v122 = vpack.c.b16 %v108, %v108
  %vm136 = vcmask 719872
  %v138 = vsel %vm136, %v53, 0
  %vm140 = vcmask 1043456
  %v142 = vsel %vm140, %v122, 0
  %144 = vmatprep.subr.bf16.mxu0 0
  %145 = vmatpush1.bf16.msra.mxu0 %v109
  %146 = vmatprep.subr.bf16.mxu0 0
  %147 = vmatpush1.bf16.msra.mxu0 %v110
  %148 = vmatprep.subr.bf16.mxu0 0
  %149 = vmatpush1.bf16.msra.mxu0 %v111
  %150 = vmatprep.subr.bf16.mxu0 0
  %151 = vmatpush1.bf16.msra.mxu0 %v112
  %152 = vmatprep.subr.bf16.mxu0 0
  %153 = vmatpush1.bf16.msra.mxu0 %v113
  %154 = vmatprep.subr.bf16.mxu0 0
  %155 = vmatpush1.bf16.msra.mxu0 %v114
  %156 = vmatprep.subr.bf16.mxu0 0
  %157 = vmatpush1.bf16.msra.mxu0 %v115
  %158 = vmatprep.subr.bf16.mxu0 0
  %159 = vmatpush1.bf16.msra.mxu0 %v116
  %160 = vmatprep.subr.bf16.mxu0 0
  %161 = vmatpush1.bf16.msra.mxu0 %v117
  %162 = vmatprep.subr.bf16.mxu0 0
  %163 = vmatpush1.bf16.msra.mxu0 %v118
  %164 = vmatprep.subr.bf16.mxu0 0
  %165 = vmatpush1.bf16.msra.mxu0 %v119
  %166 = vmatprep.subr.bf16.mxu0 0
  %167 = vmatpush1.bf16.msra.mxu0 %v120
  %168 = vmatprep.subr.bf16.mxu0 0
  %169 = vmatpush1.bf16.msra.mxu0 %v121
  %170 = vmatprep.subr.bf16.mxu0 0
  %171 = vmatpush1.bf16.msra.mxu0 %v142
  %172 = vmatprep.subr.bf16.mxu0 0
  %173 = vmatpush1.bf16.msra.mxu0 0
  %174 = vmatprep.subr.bf16.mxu0 0
  %175 = vmatpush1.bf16.msra.mxu0 0
  %176 = vmatprep.mubr.bf16.mxu0 %v138
  %177 = vmatmul.mubr.bf16.gmra.mrb[0].mxu0 %v52
  %v178 = vpop.f32.mrb[0].mxu0
  %v179 = vadd.f32 %v47, %v178
  %v180 = vpop.f32.mrb[0].mxu0
  %v181 = vpop.f32.mrb[0].mxu0
  %v182 = vpop.f32.mrb[0].mxu0
  %183 = vdwg.mxu0
  %vm184 = vcmp.ge.f32.partialorder %v179, 0.0
  %v185 = vmul.f32 %v179, 0.2
  %v186 = vsel %vm184, %v179, %v185
  %187 = vst [vmem:[%s3] sm:$0xff] %v186
  // Predicated region
  $region14: #{spectral_discriminator_forward.11} parent=0 // pred_check
    _
  $region15: #{spectral_discriminator_forward.11} parent=0 // pred_check_branch
    %189 = sbr.rel (0) target = $region17
  $region16: #{spectral_discriminator_forward.11} parent=0 // pred_region
    _
  $region17: #{spectral_discriminator_forward.11} parent=0 // pred_fallthru
    _
  // Predicated region
  $region18: #{spectral_discriminator_forward.11} parent=0 // pred_check
    _
  $region19: #{spectral_discriminator_forward.11} parent=0 // pred_check_branch
    %191 = sbr.rel (0) target = $region21
  $region20: #{spectral_discriminator_forward.11} parent=0 // pred_region
    _
  $region21: #{spectral_discriminator_forward.11} parent=0 // pred_fallthru
    _

// kernel: spectral_discriminator_forward.12
$region0: #{spectral_discriminator_forward.12}
  #allocation0 [shape = 'u32[]', space=smem, size = 0x4, offset = 0x4, fixed_abs, tag = 'smem constant byte address 0x4 - core index']
  #allocation1 [shape = 'u32[144,128]{1,0:T(1,128)}', space=vmem, size = 0x12000, scoped, tag = 'internal scratch']
  %s0 = inlined_call_operand.vmem [shape: bf16[8,72], index: 0, kind: input, shape index: {}]
  %s1 = inlined_call_operand.vmem [shape: f32[8,1], index: 1, kind: input, shape index: {}]
  %s2 = inlined_call_operand.vmem [shape: bf16[72,128], index: 2, kind: input, shape index: {}]
  %s3 = inlined_call_operand.vmem [shape: f32[8,128], index: 3, kind: output, shape index: {}]
  %s4 = sld [smem:[#allocation0]]
  $region22: #{spectral_discriminator_forward.12} parent=0
    _
  %s6 = ssub.s32 1, %s4
  %s7 = scalar_select 0, %s6, %s4
  // Predicated region
  $region2: #{spectral_discriminator_forward.12} parent=0 // pred_check
    _
  $region3: #{spectral_discriminator_forward.12} parent=0 // pred_check_branch
    %9 = sbr.rel (0) target = $region5
  $region4: #{spectral_discriminator_forward.12} parent=0 // pred_region
    _
  $region5: #{spectral_discriminator_forward.12} parent=0 // pred_fallthru
    _
  // Predicated region
  $region6: #{spectral_discriminator_forward.12} parent=0 // pred_check
    _
  $region7: #{spectral_discriminator_forward.12} parent=0 // pred_check_branch
    %11 = sbr.rel (0) target = $region9
  $region8: #{spectral_discriminator_forward.12} parent=0 // pred_region
    _
  $region9: #{spectral_discriminator_forward.12} parent=0 // pred_fallthru
    _
  // Predicated region
  $region10: #{spectral_discriminator_forward.12} parent=0 // pred_check
    _
  $region11: #{spectral_discriminator_forward.12} parent=0 // pred_check_branch
    %13 = sbr.rel (0) target = $region13
  $region12: #{spectral_discriminator_forward.12} parent=0 // pred_region
    _
  $region13: #{spectral_discriminator_forward.12} parent=0 // pred_fallthru
    _
  %v15 = vld [vmem:[%s0] sm:$0xf]
  %v16 = vld [vmem:[%s2] sm:$0xf]
  %v17 = vld [vmem:[%s2 + $0x4] sm:$0xf]
  %v18 = vld [vmem:[%s2 + $0x8] sm:$0xf]
  %v19 = vld [vmem:[%s2 + $0xc] sm:$0xf]
  %v20 = vld [vmem:[%s2 + $0x10] sm:$0xf]
  %v21 = vld [vmem:[%s2 + $0x14] sm:$0xf]
  %v22 = vld [vmem:[%s2 + $0x18] sm:$0xf]
  %v23 = vld [vmem:[%s2 + $0x1c] sm:$0xf]
  %v24 = vld [vmem:[%s2 + $0x20] sm:$0xf]
  %v25 = vld [vmem:[%s1] sm:$0xff]
  %27 = vset.pattern.permute.xlu0 0
  %28 = vperm.xlu0 %27, %v25
  %v29 = vpop.permute.xlu0 %28
  %v40 = vunpack.c.l.b16 %v16
  %v41 = vunpack.c.l.b16 %v17
  %v42 = vunpack.c.l.b16 %v18
  %v43 = vunpack.c.l.b16 %v19
  %v44 = vunpack.c.l.b16 %v20
  %v45 = vunpack.c.l.b16 %v21
  %v46 = vunpack.c.l.b16 %v22
  %v47 = vunpack.c.l.b16 %v23
  %v48 = vunpack.c.l.b16 %v24
  %v49 = vpack.c.b16 %v41, %v40
  %v50 = vpack.c.b16 %v43, %v42
  %v51 = vpack.c.b16 %v45, %v44
  %v52 = vpack.c.b16 %v47, %v46
  %v53 = vpack.c.b16 %v48, %v48
  %vm58 = vcmask 588800
  %v60 = vsel %vm58, %v15, 0
  %vm62 = vcmask 1043456
  %v64 = vsel %vm62, %v53, 0
  %66 = vmatprep.subr.bf16.mxu0 0
  %67 = vmatpush1.bf16.msra.mxu0 %v49
  %68 = vmatprep.subr.bf16.mxu0 0
  %69 = vmatpush1.bf16.msra.mxu0 %v50
  %70 = vmatprep.subr.bf16.mxu0 0
  %71 = vmatpush1.bf16.msra.mxu0 %v51
  %72 = vmatprep.subr.bf16.mxu0 0
  %73 = vmatpush1.bf16.msra.mxu0 %v52
  %74 = vmatprep.subr.bf16.mxu0 0
  %75 = vmatpush1.bf16.msra.mxu0 %v64
  %76 = vmatprep.subr.bf16.mxu0 0
  %77 = vmatpush1.bf16.msra.mxu0 0
  %78 = vmatprep.subr.bf16.mxu0 0
  %79 = vmatpush1.bf16.msra.mxu0 0
  %80 = vmatprep.subr.bf16.mxu0 0
  %81 = vmatpush1.bf16.msra.mxu0 0
  %82 = vmatprep.subr.bf16.mxu0 0
  %83 = vmatpush1.bf16.msra.mxu0 0
  %84 = vmatprep.subr.bf16.mxu0 0
  %85 = vmatpush1.bf16.msra.mxu0 0
  %86 = vmatprep.subr.bf16.mxu0 0
  %87 = vmatpush1.bf16.msra.mxu0 0
  %88 = vmatprep.subr.bf16.mxu0 0
  %89 = vmatpush1.bf16.msra.mxu0 0
  %90 = vmatprep.subr.bf16.mxu0 0
  %91 = vmatpush1.bf16.msra.mxu0 0
  %92 = vmatprep.subr.bf16.mxu0 0
  %93 = vmatpush1.bf16.msra.mxu0 0
  %94 = vmatprep.subr.bf16.mxu0 0
  %95 = vmatpush1.bf16.msra.mxu0 0
  %96 = vmatprep.subr.bf16.mxu0 0
  %97 = vmatpush1.bf16.msra.mxu0 0
  %98 = vmatprep.mubr.bf16.mxu0 0
  %99 = vmatmul.mubr.bf16.gmra.mrb[0].mxu0 %v60
  %v100 = vpop.f32.mrb[0].mxu0
  %v101 = vadd.f32 %v29, %v100
  %v102 = vpop.f32.mrb[0].mxu0
  %v103 = vpop.f32.mrb[0].mxu0
  %v104 = vpop.f32.mrb[0].mxu0
  %105 = vdwg.mxu0
  %vm106 = vcmp.ge.f32.partialorder %v101, 0.0
  %v107 = vmul.f32 %v101, 0.2
  %v108 = vsel %vm106, %v101, %v107
  %109 = vst [vmem:[%s3] sm:$0xff] %v108
  // Predicated region
  $region14: #{spectral_discriminator_forward.12} parent=0 // pred_check
    _
  $region15: #{spectral_discriminator_forward.12} parent=0 // pred_check_branch
    %111 = sbr.rel (0) target = $region17
  $region16: #{spectral_discriminator_forward.12} parent=0 // pred_region
    _
  $region17: #{spectral_discriminator_forward.12} parent=0 // pred_fallthru
    _
  // Predicated region
  $region18: #{spectral_discriminator_forward.12} parent=0 // pred_check
    _
  $region19: #{spectral_discriminator_forward.12} parent=0 // pred_check_branch
    %113 = sbr.rel (0) target = $region21
  $region20: #{spectral_discriminator_forward.12} parent=0 // pred_region
    _
  $region21: #{spectral_discriminator_forward.12} parent=0 // pred_fallthru
    _

// kernel: spectral_discriminator_forward.13
$region0: #{spectral_discriminator_forward.13}
  #allocation0 [shape = 'u32[]', space=smem, size = 0x4, offset = 0x4, fixed_abs, tag = 'smem constant byte address 0x4 - core index']
  #allocation1 [shape = 'u32[144,128]{1,0:T(1,128)}', space=vmem, size = 0x12000, scoped, tag = 'internal scratch']
  #allocation2 [shape = 'f32[1,1]{1,0:T(1,128)S(1)}', space=vmem, size = 0x200, scoped, tag = 'scoped memory for spectral_discriminator_forward.13']
  %s0 = inlined_call_operand.vmem [shape: bf16[1,72], index: 0, kind: input, shape index: {}]
  %s1 = inlined_call_operand.<no memory space> [shape: f32[1,1], index: 1, kind: input, shape index: {}]
  %s2 = inlined_call_operand.vmem [shape: bf16[72,128], index: 2, kind: input, shape index: {}]
  %s3 = inlined_call_operand.vmem [shape: f32[1,128], index: 3, kind: output, shape index: {}]
  %s4 = sld [smem:[#allocation0]]
  $region22: #{spectral_discriminator_forward.13} parent=0
    _
  %s6 = ssub.s32 1, %s4
  %s7 = scalar_select 0, %s6, %s4
  %v8 = vstv %s1
  %9 = vst [vmem:[#allocation2] sm:$0x1] %v8
  // Predicated region
  $region2: #{spectral_discriminator_forward.13} parent=0 // pred_check
    _
  $region3: #{spectral_discriminator_forward.13} parent=0 // pred_check_branch
    %11 = sbr.rel (0) target = $region5
  $region4: #{spectral_discriminator_forward.13} parent=0 // pred_region
    _
  $region5: #{spectral_discriminator_forward.13} parent=0 // pred_fallthru
    _
  // Predicated region
  $region6: #{spectral_discriminator_forward.13} parent=0 // pred_check
    _
  $region7: #{spectral_discriminator_forward.13} parent=0 // pred_check_branch
    %13 = sbr.rel (0) target = $region9
  $region8: #{spectral_discriminator_forward.13} parent=0 // pred_region
    _
  $region9: #{spectral_discriminator_forward.13} parent=0 // pred_fallthru
    _
  // Predicated region
  $region10: #{spectral_discriminator_forward.13} parent=0 // pred_check
    _
  $region11: #{spectral_discriminator_forward.13} parent=0 // pred_check_branch
    %15 = sbr.rel (0) target = $region13
  $region12: #{spectral_discriminator_forward.13} parent=0 // pred_region
    _
  $region13: #{spectral_discriminator_forward.13} parent=0 // pred_fallthru
    _
  %v17 = vld [vmem:[%s0] sm:$0x1]
  %v18 = vld [vmem:[%s2] sm:$0xf]
  %v19 = vld [vmem:[%s2 + $0x4] sm:$0xf]
  %v20 = vld [vmem:[%s2 + $0x8] sm:$0xf]
  %v21 = vld [vmem:[%s2 + $0xc] sm:$0xf]
  %v22 = vld [vmem:[%s2 + $0x10] sm:$0xf]
  %v23 = vld [vmem:[%s2 + $0x14] sm:$0xf]
  %v24 = vld [vmem:[%s2 + $0x18] sm:$0xf]
  %v25 = vld [vmem:[%s2 + $0x1c] sm:$0xf]
  %v26 = vld [vmem:[%s2 + $0x20] sm:$0xf]
  %v27 = vld [vmem:[#allocation2] sm:$0x1]
  %29 = vset.pattern.permute.xlu0 0
  %30 = vperm.xlu0 %29, %v27
  %v31 = vpop.permute.xlu0 %30
  %v33 = vlaneseq
  %v34 = vshrl.u32 %v33, 7
  %v35 = vsub.s32 0, %v34
  %v36 = vrot.slane %v31, %v35
  %v46 = vunpack.c.l.b16 %v18
  %v47 = vunpack.c.l.b16 %v19
  %v48 = vunpack.c.l.b16 %v20
  %v49 = vunpack.c.l.b16 %v21
  %v50 = vunpack.c.l.b16 %v22
  %v51 = vunpack.c.l.b16 %v23
  %v52 = vunpack.c.l.b16 %v24
  %v53 = vunpack.c.l.b16 %v25
  %v54 = vunpack.c.l.b16 %v26
  %v55 = vpack.c.b16 %v47, %v46
  %v56 = vpack.c.b16 %v49, %v48
  %v57 = vpack.c.b16 %v51, %v50
  %v58 = vpack.c.b16 %v53, %v52
  %v59 = vpack.c.b16 %v54, %v54
  %vm64 = vcmask 588800
  %v66 = vsel %vm64, %v17, 0
  %vm68 = vcmask 1043456
  %v70 = vsel %vm68, %v59, 0
  %72 = vmatprep.subr.bf16.mxu0 0
  %73 = vmatpush1.bf16.msra.mxu0 %v55
  %74 = vmatprep.subr.bf16.mxu0 0
  %75 = vmatpush1.bf16.msra.mxu0 %v56
  %76 = vmatprep.subr.bf16.mxu0 0
  %77 = vmatpush1.bf16.msra.mxu0 %v57
  %78 = vmatprep.subr.bf16.mxu0 0
  %79 = vmatpush1.bf16.msra.mxu0 %v58
  %80 = vmatprep.subr.bf16.mxu0 0
  %81 = vmatpush1.bf16.msra.mxu0 %v70
  %82 = vmatprep.subr.bf16.mxu0 0
  %83 = vmatpush1.bf16.msra.mxu0 0
  %84 = vmatprep.subr.bf16.mxu0 0
  %85 = vmatpush1.bf16.msra.mxu0 0
  %86 = vmatprep.subr.bf16.mxu0 0
  %87 = vmatpush1.bf16.msra.mxu0 0
  %88 = vmatprep.subr.bf16.mxu0 0
  %89 = vmatpush1.bf16.msra.mxu0 0
  %90 = vmatprep.subr.bf16.mxu0 0
  %91 = vmatpush1.bf16.msra.mxu0 0
  %92 = vmatprep.subr.bf16.mxu0 0
  %93 = vmatpush1.bf16.msra.mxu0 0
  %94 = vmatprep.subr.bf16.mxu0 0
  %95 = vmatpush1.bf16.msra.mxu0 0
  %96 = vmatprep.subr.bf16.mxu0 0
  %97 = vmatpush1.bf16.msra.mxu0 0
  %98 = vmatprep.subr.bf16.mxu0 0
  %99 = vmatpush1.bf16.msra.mxu0 0
  %100 = vmatprep.subr.bf16.mxu0 0
  %101 = vmatpush1.bf16.msra.mxu0 0
  %102 = vmatprep.subr.bf16.mxu0 0
  %103 = vmatpush1.bf16.msra.mxu0 0
  %104 = vmatprep.mubr.bf16.mxu0 0
  %105 = vmatmul.mubr.bf16.gmra.mrb[0].mxu0 %v66
  %v106 = vpop.f32.mrb[0].mxu0
  %v107 = vadd.f32 %v36, %v106
  %v108 = vpop.f32.mrb[0].mxu0
  %v109 = vpop.f32.mrb[0].mxu0
  %v110 = vpop.f32.mrb[0].mxu0
  %111 = vdwg.mxu0
  %112 = vst [vmem:[%s3] sm:$0x1] %v107
  // Predicated region
  $region14: #{spectral_discriminator_forward.13} parent=0 // pred_check
    _
  $region15: #{spectral_discriminator_forward.13} parent=0 // pred_check_branch
    %114 = sbr.rel (0) target = $region17
  $region16: #{spectral_discriminator_forward.13} parent=0 // pred_region
    _
  $region17: #{spectral_discriminator_forward.13} parent=0 // pred_fallthru
    _
  // Predicated region
  $region18: #{spectral_discriminator_forward.13} parent=0 // pred_check
    _
  $region19: #{spectral_discriminator_forward.13} parent=0 // pred_check_branch
    %116 = sbr.rel (0) target = $region21
  $region20: #{spectral_discriminator_forward.13} parent=0 // pred_region
    _
  $region21: #{spectral_discriminator_forward.13} parent=0 // pred_fallthru
    _

</llo_original>
